<compile_context>
chip_gen: v7x
topology: tpu7x:2x2x1
jax: 0.10.0
libtpu: 0.0.40
codegen_flags: <defaults>
</compile_context>

<pallas_src>
import math

import jax
import jax.numpy as jnp
from jax import lax
from jax.experimental import pallas as pl
from jax.experimental.pallas import tpu as pltpu

LN_EPS = 1e-5  # torch.nn.LayerNorm default eps


def _round_up(n, m):
    return ((n + m - 1) // m) * m


# ---------------------------------------------------------------------------
# Packed-parameter layout: ONE lane-dense f32 slab (128-multiple columns),
# zero padding baked in so the kernel never lane-slices a weight tile.
# ---------------------------------------------------------------------------
def _param_layout(hidden, mlp_hidden):
    n_in = 5 * hidden
    mid = max(_round_up(mlp_hidden, 128), _round_up(hidden, 128))  # padded width
    r_in = _round_up(n_in, 8)
    off_w1 = 0
    off_w2 = off_w1 + r_in
    off_w3 = off_w2 + mid
    off_w4 = off_w3 + mid
    off_vec = off_w4 + mid
    total_rows = off_vec + 8          # 6 one-row vectors, padded to 8 sublanes
    return dict(n_in=n_in, mid=mid, r_in=r_in, off_w1=off_w1, off_w2=off_w2,
                off_w3=off_w3, off_w4=off_w4, off_vec=off_vec,
                total_rows=total_rows, pack_cols=mid)


def pack_params(params, hidden, mlp_hidden):
    """params = (W1,b1,W2,b2,W3,b3,gamma,beta,W4,b4); W stored as [in, out].

    All padding (columns beyond mlp_hidden / hidden, rows beyond the real
    contraction dims) is zero, which keeps the padded MLP lanes exactly zero
    through ReLU / LayerNorm (gamma/beta pads are zero) / the final Linear."""
    L = _param_layout(hidden, mlp_hidden)
    W1, b1, W2, b2, W3, b3, gamma, beta, W4, b4 = params
    slab = jnp.zeros((L["total_rows"], L["pack_cols"]), jnp.float32)

    def put(s, row, a):
        a = jnp.asarray(a, jnp.float32)
        a = a.reshape(-1, a.shape[-1])
        r, c = a.shape
        return s.at[row:row + r, 0:c].set(a)

    slab = put(slab, L["off_w1"], W1)
    slab = put(slab, L["off_w2"], W2)
    slab = put(slab, L["off_w3"], W3)
    slab = put(slab, L["off_w4"], W4)
    for i, v in enumerate((b1, b2, b3, gamma, beta, b4)):
        slab = put(slab, L["off_vec"] + i, jnp.asarray(v).reshape(1, -1))
    return slab


# ---------------------------------------------------------------------------
# Kernel
# ---------------------------------------------------------------------------
def _make_kernel(n_graphs, hidden, mlp_hidden, tile_n, L):
    b8 = _round_up(n_graphs, 8)
    mid = L["mid"]
    n_in = L["n_in"]
    off_w1, off_w2, off_w3, off_w4, off_vec = (
        L["off_w1"], L["off_w2"], L["off_w3"], L["off_w4"], L["off_vec"])

    def kernel(brow_ref, bcol_ref, x_ref, u_ref, w_ref, o_ref,
               acc_ref, cnt_ref, mi_ref, ma_ref):
        step = pl.program_id(0)

        # ---- init resident accumulators (first node tile only) -------------
        @pl.when(step == 0)
        def _():
            acc_ref[...] = jnp.zeros_like(acc_ref)
            cnt_ref[...] = jnp.zeros_like(cnt_ref)
            mi_ref[...] = jnp.full(mi_ref.shape, jnp.inf, jnp.float32)
            ma_ref[...] = jnp.full(ma_ref.shape, -jnp.inf, jnp.float32)

        x = x_ref[...]                                   # [tile_n, H]  f32
        brow = brow_ref[...]                             # [1, tile_n]  int32
        bcol = bcol_ref[...]                             # [tile_n, 1]  int32

        # ---- fused sum / sum-of-squares pooling: ONE MXU matmul ------------
        # P[b, n] = 1 iff node n belongs to graph b (pad rows >= n_graphs: 0).
        P = (lax.broadcasted_iota(jnp.int32, (b8, tile_n), 0) == brow
             ).astype(jnp.float32)                       # [b8, tile_n]
        xcat = jnp.concatenate([x, x * x], axis=1)       # [tile_n, 2H]
        acc_ref[...] += jnp.dot(P, xcat, preferred_element_type=jnp.float32)
        cnt_ref[...] += jnp.sum(P, axis=1, keepdims=True)    # XLU row-sum

        # ---- segment min / max: masked sublane reductions ------------------
        # Statically unrolled over the (small, static) graph count; each row
        # is stored straight into VMEM scratch so no temporaries outlive an
        # iteration and nothing is concatenated.
        for b in range(n_graphs):
            m = bcol == b                                # [tile_n, 1]
            mi_ref[b:b + 1, :] = jnp.minimum(
                mi_ref[b:b + 1, :],
                jnp.min(jnp.where(m, x, jnp.inf), axis=0, keepdims=True))
            ma_ref[b:b + 1, :] = jnp.maximum(
                ma_ref[b:b + 1, :],
                jnp.max(jnp.where(m, x, -jnp.inf), axis=0, keepdims=True))

        # ---- finalize: global MLP + residual (last node tile only) ---------
        @pl.when(step == pl.num_programs(0) - 1)
        def _():
            u = u_ref[...]                               # [B, H]
            s = acc_ref[0:n_graphs, 0:hidden]            # scatter_sum
            sq = acc_ref[0:n_graphs, hidden:2 * hidden]  # sum of squares
            cnt = jnp.maximum(cnt_ref[0:n_graphs, :], 1.0)
            inv = pl.reciprocal(cnt)                     # EUP slot
            me = s * inv                                 # scatter_mean
            std = sq * inv - me * me                     # spec: E[x^2]-E[x]^2
            mi = mi_ref[0:n_graphs, :]
            ma = ma_ref[0:n_graphs, :]
            h = jnp.concatenate([u, s, mi, ma, std], axis=1)   # [B, 5H]

            vec = w_ref[off_vec:off_vec + 8, :]          # the 6 one-row params
            b1, b2, b3 = vec[0:1, :], vec[1:2, :], vec[2:3, :]
            gamma, beta, b4 = vec[3:4, :], vec[4:5, :], vec[5:6, :]

            w1 = w_ref[off_w1:off_w1 + n_in, :]          # [5H, mid] (cols padded)
            h = jnp.maximum(
                jnp.dot(h, w1, preferred_element_type=jnp.float32) + b1, 0.0)
            w2 = w_ref[off_w2:off_w2 + mid, :]
            h = jnp.maximum(
                jnp.dot(h, w2, preferred_element_type=jnp.float32) + b2, 0.0)
            w3 = w_ref[off_w3:off_w3 + mid, :]
            h = jnp.maximum(
                jnp.dot(h, w3, preferred_element_type=jnp.float32) + b3, 0.0)

            # LayerNorm over the real mlp_hidden lanes (padding lanes of h are
            # exactly 0; gamma/beta pads are 0 so they stay 0 afterwards).
            # Two-pass (mean, then mean((h-mean)^2)) for numerical stability.
            lane = lax.broadcasted_iota(jnp.int32, (1, mid), 1)
            mean = jnp.sum(h, axis=-1, keepdims=True) * (1.0 / mlp_hidden)
            d = h - mean
            var = jnp.sum(jnp.where(lane < mlp_hidden, d * d, 0.0),
                          axis=-1, keepdims=True) * (1.0 / mlp_hidden)
            h = d * lax.rsqrt(var + LN_EPS) * gamma + beta

            w4 = w_ref[off_w4:off_w4 + mid, :]
            y = jnp.dot(h, w4, preferred_element_type=jnp.float32) + b4
            o_ref[...] = u + y[:, 0:hidden]              # residual

    return kernel


# ---------------------------------------------------------------------------
# Wrapper
# ---------------------------------------------------------------------------
def _vmem_limit_bytes(n_graphs, hidden, tile_n, L):
    """Derive the scoped-VMEM limit from actual buffer sizes (v7x-safe)."""
    f32 = 4
    b8 = _round_up(n_graphs, 8)
    tile = (tile_n * hidden + 2 * tile_n) * f32              # x tile + batch ids
    resident = (L["total_rows"] * L["pack_cols"] + 2 * n_graphs * hidden) * f32
    scratch = b8 * (4 * hidden + 1) * f32
    need = 2 * tile + 2 * resident + scratch                 # 2x: double buffers
    return int(min(2 * need + (8 << 20), 60 << 20))          # headroom, < 64 MiB


def make_forward(n_nodes, n_graphs, hidden, mlp_hidden=64, tile_n=128):
    """Returns fwd(batch_row[1,N] i32, batch_col[N,1] i32, x[N,H], u[B,H], w_slab)."""
    if n_nodes % tile_n != 0 or (tile_n != n_nodes and tile_n % 128 != 0):
        raise ValueError("tile_n must divide n_nodes and be a multiple of 128")
    L = _param_layout(hidden, mlp_hidden)
    kernel = _make_kernel(n_graphs, hidden, mlp_hidden, tile_n, L)
    b8 = _round_up(n_graphs, 8)

    call = pl.pallas_call(
        kernel,
        out_shape=jax.ShapeDtypeStruct((n_graphs, hidden), jnp.float32),
        grid=(n_nodes // tile_n,),
        in_specs=[
            pl.BlockSpec((1, tile_n), lambda i: (0, i)),            # batch ids, row layout
            pl.BlockSpec((tile_n, 1), lambda i: (i, 0)),            # batch ids, col layout
            pl.BlockSpec((tile_n, hidden), lambda i: (i, 0)),       # x node tile
            pl.BlockSpec((n_graphs, hidden), lambda i: (0, 0)),     # u (resident)
            pl.BlockSpec((L["total_rows"], L["pack_cols"]),
                         lambda i: (0, 0)),                         # packed weights
        ],
        out_specs=pl.BlockSpec((n_graphs, hidden), lambda i: (0, 0)),
        scratch_shapes=[
            pltpu.VMEM((b8, 2 * hidden), jnp.float32),   # [sum | sum-of-squares]
            pltpu.VMEM((b8, 1), jnp.float32),            # node counts
            pltpu.VMEM((b8, hidden), jnp.float32),       # running min
            pltpu.VMEM((b8, hidden), jnp.float32),       # running max
        ],
        input_output_aliases={3: 0},                     # residual u aliases output
        compiler_params=pltpu.CompilerParams(
            # Single grid axis is the node-tile reduction -> "arbitrary".
            # TODO(synk): v7x megacore split of the node reduction across the
            # 2 TensorCores (parallel half-reductions + small combine) not done.
            dimension_semantics=("arbitrary",),
            vmem_limit_bytes=_vmem_limit_bytes(n_graphs, hidden, tile_n, L),
        ),
    )
    return jax.jit(call)


# ---------------------------------------------------------------------------
# Deterministic parameter init (matches torch Linear / LayerNorm shapes)
# ---------------------------------------------------------------------------
def init_params(key, hidden, mlp_hidden=64):
    n_in = 5 * hidden
    ks = jax.random.split(key, 4)

    def lin(k, fi, fo):
        kw, kb = jax.random.split(k)
        bound = 1.0 / math.sqrt(fi)
        W = jax.random.uniform(kw, (fi, fo), jnp.float32, -bound, bound)
        b = jax.random.uniform(kb, (1, fo), jnp.float32, -bound, bound)
        return W, b

    W1, b1 = lin(ks[0], n_in, mlp_hidden)
    W2, b2 = lin(ks[1], mlp_hidden, mlp_hidden)
    W3, b3 = lin(ks[2], mlp_hidden, mlp_hidden)
    gamma = jnp.ones((1, mlp_hidden), jnp.float32)
    beta = jnp.zeros((1, mlp_hidden), jnp.float32)
    W4, b4 = lin(ks[3], mlp_hidden, hidden)
    return (W1, b1, W2, b2, W3, b3, gamma, beta, W4, b4)


# ---------------------------------------------------------------------------
# Pure-JAX reference (same math) for a sanity check
# ---------------------------------------------------------------------------
def reference(x, u, batch, n_graphs, params):
    W1, b1, W2, b2, W3, b3, gamma, beta, W4, b4 = params
    H = x.shape[1]
    s = jnp.zeros((n_graphs, H), jnp.float32).at[batch].add(x)
    cnt = jnp.maximum(jnp.zeros((n_graphs, 1), jnp.float32).at[batch, 0].add(1.0), 1.0)
    me = s / cnt
    sq = jnp.zeros((n_graphs, H), jnp.float32).at[batch].add(x * x)
    std = sq / cnt - me * me
    mi = jnp.full((n_graphs, H), jnp.inf, jnp.float32).at[batch].min(x)
    ma = jnp.full((n_graphs, H), -jnp.inf, jnp.float32).at[batch].max(x)
    h = jnp.concatenate([u, s, mi, ma, std], axis=1)

    h = jnp.maximum(h @ W1 + b1, 0.0)
    h = jnp.maximum(h @ W2 + b2, 0.0)
    h = jnp.maximum(h @ W3 + b3, 0.0)
    mu = jnp.mean(h, axis=-1, keepdims=True)
    var = jnp.mean(jnp.square(h - mu), axis=-1, keepdims=True)
    h = (h - mu) / jnp.sqrt(var + LN_EPS) * gamma + beta
    return u + (h @ W4 + b4)


if __name__ == "__main__":
    key = jax.random.PRNGKey(0)
    N, B, H = 256, 16, 32        # nodes, graphs, model hidden
    MLP_H = 64                   # MLP internal width (torch default hidden=64)
    TILE_N = 128                 # node tile -> 2 grid steps in this demo

    kx, ku, ke, kp = jax.random.split(key, 4)
    x = jax.random.normal(kx, (N, H), jnp.float32)
    u = jax.random.normal(ku, (B, H), jnp.float32)
    batch = jnp.repeat(jnp.arange(B, dtype=jnp.int32), N // B)    # [N] graph ids
    edge_index = jax.random.randint(ke, (2, 128), 0, N)           # unused by forward
    edge_attr = None                                              # unused by forward

    params = init_params(kp, H, MLP_H)

    # Hoisted / cacheable preprocessing (per static params): one packed slab,
    # plus the two tiny int32 batch-id layouts (8 bytes/node total).
    w_slab = pack_params(params, H, MLP_H)
    batch_row = batch.reshape(1, N)
    batch_col = batch.reshape(N, 1)

    fwd = make_forward(N, B, H, MLP_H, tile_n=TILE_N)
    out = jax.block_until_ready(fwd(batch_row, batch_col, x, u, w_slab))

    ref = reference(x, u, batch, B, params)
    assert out.shape == (B, H)
    assert jnp.allclose(out, ref, rtol=1e-2, atol=1e-2), (out, ref)

    print("KERNEL_OK")
</pallas_src>

<mosaic_0001>
module attributes {stable_mosaic.version = 11 : i64} {
  func.func @kernel(%arg0: i32, %arg1: memref<1x128xi32, #tpu.memory_space<vmem>>, %arg2: memref<128x1xi32, #tpu.memory_space<vmem>>, %arg3: memref<128x32xf32, #tpu.memory_space<vmem>>, %arg4: memref<16x32xf32, #tpu.memory_space<vmem>>, %arg5: memref<552x128xf32, #tpu.memory_space<vmem>>, %arg6: memref<16x32xf32, #tpu.memory_space<vmem>>, %arg7: memref<16x64xf32, #tpu.memory_space<vmem>>, %arg8: memref<16x1xf32, #tpu.memory_space<vmem>>, %arg9: memref<16x32xf32, #tpu.memory_space<vmem>>, %arg10: memref<16x32xf32, #tpu.memory_space<vmem>>) attributes {dimension_semantics = [#tpu.dimension_semantics<arbitrary>], iteration_bounds = array<i64: 2>, scalar_prefetch = 0 : i64, scratch_operands = 4 : i64, tpu.core_type = #tpu.core_type<tc>, window_params = [{transform_indices = @transform_0, window_bounds = array<i64: 1, 128>}, {transform_indices = @transform_1, window_bounds = array<i64: 128, 1>}, {transform_indices = @transform_2, window_bounds = array<i64: 128, 32>}, {pipeline_mode = #tpu.pipeline_mode<synchronous>, transform_indices = @transform_3, window_bounds = array<i64: 16, 32>}, {pipeline_mode = #tpu.pipeline_mode<synchronous>, transform_indices = @transform_4, window_bounds = array<i64: 552, 128>}, {pipeline_mode = #tpu.pipeline_mode<synchronous>, transform_indices = @transform_5, window_bounds = array<i64: 16, 32>}]} {
    %c0_i32 = arith.constant 0 : i32
    %0 = arith.cmpi eq, %arg0, %c0_i32 : i32
    %1 = arith.extui %0 : i1 to i32
    %c0_i32_0 = arith.constant 0 : i32
    %2 = arith.cmpi ne, %1, %c0_i32_0 : i32
    scf.if %2 {
      %cst_195 = arith.constant 0.000000e+00 : f32
      %345 = vector.broadcast %cst_195 : f32 to vector<16x64xf32>
      %c0_196 = arith.constant 0 : index
      %c0_197 = arith.constant 0 : index
      %346 = vector.load %arg7[%c0_196, %c0_197] : memref<16x64xf32, #tpu.memory_space<vmem>>, vector<16x64xf32>
      tpu.vector_store %arg7[%c0_196, %c0_197], %345 {strides = array<i32>} : memref<16x64xf32, #tpu.memory_space<vmem>>, vector<16x64xf32>,
      %cst_198 = arith.constant 0.000000e+00 : f32
      %347 = vector.broadcast %cst_198 : f32 to vector<16x1xf32>
      %c0_199 = arith.constant 0 : index
      %c0_200 = arith.constant 0 : index
      %348 = vector.load %arg8[%c0_199, %c0_200] : memref<16x1xf32, #tpu.memory_space<vmem>>, vector<16x1xf32>
      tpu.vector_store %arg8[%c0_199, %c0_200], %347 {strides = array<i32>} : memref<16x1xf32, #tpu.memory_space<vmem>>, vector<16x1xf32>,
      %cst_201 = arith.constant 0x7F800000 : f32
      %349 = vector.broadcast %cst_201 : f32 to vector<16x32xf32>
      %c0_202 = arith.constant 0 : index
      %c0_203 = arith.constant 0 : index
      %350 = vector.load %arg9[%c0_202, %c0_203] : memref<16x32xf32, #tpu.memory_space<vmem>>, vector<16x32xf32>
      tpu.vector_store %arg9[%c0_202, %c0_203], %349 {strides = array<i32>} : memref<16x32xf32, #tpu.memory_space<vmem>>, vector<16x32xf32>,
      %cst_204 = arith.constant 0xFF800000 : f32
      %351 = vector.broadcast %cst_204 : f32 to vector<16x32xf32>
      %c0_205 = arith.constant 0 : index
      %c0_206 = arith.constant 0 : index
      %352 = vector.load %arg10[%c0_205, %c0_206] : memref<16x32xf32, #tpu.memory_space<vmem>>, vector<16x32xf32>
      tpu.vector_store %arg10[%c0_205, %c0_206], %351 {strides = array<i32>} : memref<16x32xf32, #tpu.memory_space<vmem>>, vector<16x32xf32>,
    } else {
    }
    %c0 = arith.constant 0 : index
    %c0_1 = arith.constant 0 : index
    %3 = vector.load %arg3[%c0, %c0_1] : memref<128x32xf32, #tpu.memory_space<vmem>>, vector<128x32xf32>
    %c0_2 = arith.constant 0 : index
    %c0_3 = arith.constant 0 : index
    %4 = vector.load %arg1[%c0_2, %c0_3] : memref<1x128xi32, #tpu.memory_space<vmem>>, vector<1x128xi32>
    %c0_4 = arith.constant 0 : index
    %c0_5 = arith.constant 0 : index
    %5 = vector.load %arg2[%c0_4, %c0_5] : memref<128x1xi32, #tpu.memory_space<vmem>>, vector<128x1xi32>
    %6 = tpu.iota {dimensions = array<i32: 0>} : vector<16x128xi32>
    %7 = vector.broadcast %4 : vector<1x128xi32> to vector<16x128xi32>
    %8 = arith.cmpi eq, %6, %7 : vector<16x128xi32>
    %9 = arith.extui %8 : vector<16x128xi1> to vector<16x128xi32>
    %10 = arith.sitofp %9 : vector<16x128xi32> to vector<16x128xf32>
    %11 = arith.mulf %3, %3 : vector<128x32xf32>
    %12 = tpu.concatenate %3, %11 in 1 : vector<128x32xf32>, vector<128x32xf32> -> vector<128x64xf32>
    %c0_6 = arith.constant 0 : index
    %c0_7 = arith.constant 0 : index
    %13 = vector.load %arg7[%c0_6, %c0_7] : memref<16x64xf32, #tpu.memory_space<vmem>>, vector<16x64xf32>
    %cst = arith.constant dense<0.000000e+00> : vector<16x64xf32>
    %14 = tpu.matmul %10, %12, %cst {dimension_numbers = #tpu.dot_dimension_numbers<[1], [0], [0], [1], [0, 0, 1, 1], [], []>} : vector<16x128xf32>, vector<128x64xf32>, vector<16x64xf32> -> vector<16x64xf32>
    %15 = arith.addf %13, %14 : vector<16x64xf32>
    %c0_8 = arith.constant 0 : index
    %c0_9 = arith.constant 0 : index
    %16 = vector.load %arg7[%c0_8, %c0_9] : memref<16x64xf32, #tpu.memory_space<vmem>>, vector<16x64xf32>
    tpu.vector_store %arg7[%c0_8, %c0_9], %15 {strides = array<i32>} : memref<16x64xf32, #tpu.memory_space<vmem>>, vector<16x64xf32>,
    %c0_10 = arith.constant 0 : index
    %c0_11 = arith.constant 0 : index
    %17 = vector.load %arg8[%c0_10, %c0_11] : memref<16x1xf32, #tpu.memory_space<vmem>>, vector<16x1xf32>
    %cst_12 = arith.constant dense<0.000000e+00> : vector<16xf32>
    %18 = vector.multi_reduction <add>, %10, %cst_12 [1] : vector<16x128xf32> to vector<16xf32>
    %19 = vector.shape_cast %18 : vector<16xf32> to vector<16x1xf32>
    %20 = arith.addf %17, %19 : vector<16x1xf32>
    %c0_13 = arith.constant 0 : index
    %c0_14 = arith.constant 0 : index
    %21 = vector.load %arg8[%c0_13, %c0_14] : memref<16x1xf32, #tpu.memory_space<vmem>>, vector<16x1xf32>
    tpu.vector_store %arg8[%c0_13, %c0_14], %20 {strides = array<i32>} : memref<16x1xf32, #tpu.memory_space<vmem>>, vector<16x1xf32>,
    %c0_i32_15 = arith.constant 0 : i32
    %22 = vector.broadcast %c0_i32_15 : i32 to vector<128x1xi32>
    %23 = arith.cmpi eq, %5, %22 : vector<128x1xi32>
    %c0_16 = arith.constant 0 : index
    %c0_17 = arith.constant 0 : index
    %24 = vector.load %arg9[%c0_16, %c0_17] : memref<16x32xf32, #tpu.memory_space<vmem>>, vector<1x32xf32>
    %cst_18 = arith.constant 0x7F800000 : f32
    %25 = vector.shape_cast %23 : vector<128x1xi1> to vector<128x1xi1>
    %26 = vector.broadcast %25 : vector<128x1xi1> to vector<128x32xi1>
    %27 = vector.broadcast %cst_18 : f32 to vector<128x32xf32>
    %28 = arith.select %26, %3, %27 : vector<128x32xi1>, vector<128x32xf32>
    %cst_19 = arith.constant dense<0x7F800000> : vector<32xf32>
    %29 = vector.multi_reduction <minimumf>, %28, %cst_19 [0] : vector<128x32xf32> to vector<32xf32>
    %30 = vector.shape_cast %29 : vector<32xf32> to vector<1x32xf32>
    %31 = arith.minimumf %24, %30 : vector<1x32xf32>
    %c0_20 = arith.constant 0 : index
    %c0_21 = arith.constant 0 : index
    %32 = vector.load %arg9[%c0_20, %c0_21] : memref<16x32xf32, #tpu.memory_space<vmem>>, vector<1x32xf32>
    tpu.vector_store %arg9[%c0_20, %c0_21], %31 {strides = array<i32>} : memref<16x32xf32, #tpu.memory_space<vmem>>, vector<1x32xf32>,
    %c0_22 = arith.constant 0 : index
    %c0_23 = arith.constant 0 : index
    %33 = vector.load %arg10[%c0_22, %c0_23] : memref<16x32xf32, #tpu.memory_space<vmem>>, vector<1x32xf32>
    %cst_24 = arith.constant 0xFF800000 : f32
    %34 = vector.shape_cast %23 : vector<128x1xi1> to vector<128x1xi1>
    %35 = vector.broadcast %34 : vector<128x1xi1> to vector<128x32xi1>
    %36 = vector.broadcast %cst_24 : f32 to vector<128x32xf32>
    %37 = arith.select %35, %3, %36 : vector<128x32xi1>, vector<128x32xf32>
    %cst_25 = arith.constant dense<0xFF800000> : vector<32xf32>
    %38 = vector.multi_reduction <maximumf>, %37, %cst_25 [0] : vector<128x32xf32> to vector<32xf32>
    %39 = vector.shape_cast %38 : vector<32xf32> to vector<1x32xf32>
    %40 = arith.maximumf %33, %39 : vector<1x32xf32>
    %c0_26 = arith.constant 0 : index
    %c0_27 = arith.constant 0 : index
    %41 = vector.load %arg10[%c0_26, %c0_27] : memref<16x32xf32, #tpu.memory_space<vmem>>, vector<1x32xf32>
    tpu.vector_store %arg10[%c0_26, %c0_27], %40 {strides = array<i32>} : memref<16x32xf32, #tpu.memory_space<vmem>>, vector<1x32xf32>,
    %c1_i32 = arith.constant 1 : i32
    %42 = vector.broadcast %c1_i32 : i32 to vector<128x1xi32>
    %43 = arith.cmpi eq, %5, %42 : vector<128x1xi32>
    %c1 = arith.constant 1 : index
    %c0_28 = arith.constant 0 : index
    %44 = vector.load %arg9[%c1, %c0_28] : memref<16x32xf32, #tpu.memory_space<vmem>>, vector<1x32xf32>
    %cst_29 = arith.constant 0x7F800000 : f32
    %45 = vector.shape_cast %43 : vector<128x1xi1> to vector<128x1xi1>
    %46 = vector.broadcast %45 : vector<128x1xi1> to vector<128x32xi1>
    %47 = vector.broadcast %cst_29 : f32 to vector<128x32xf32>
    %48 = arith.select %46, %3, %47 : vector<128x32xi1>, vector<128x32xf32>
    %cst_30 = arith.constant dense<0x7F800000> : vector<32xf32>
    %49 = vector.multi_reduction <minimumf>, %48, %cst_30 [0] : vector<128x32xf32> to vector<32xf32>
    %50 = vector.shape_cast %49 : vector<32xf32> to vector<1x32xf32>
    %51 = arith.minimumf %44, %50 : vector<1x32xf32>
    %c1_31 = arith.constant 1 : index
    %c0_32 = arith.constant 0 : index
    %52 = vector.load %arg9[%c1_31, %c0_32] : memref<16x32xf32, #tpu.memory_space<vmem>>, vector<1x32xf32>
    tpu.vector_store %arg9[%c1_31, %c0_32], %51 {strides = array<i32>} : memref<16x32xf32, #tpu.memory_space<vmem>>, vector<1x32xf32>,
    %c1_33 = arith.constant 1 : index
    %c0_34 = arith.constant 0 : index
    %53 = vector.load %arg10[%c1_33, %c0_34] : memref<16x32xf32, #tpu.memory_space<vmem>>, vector<1x32xf32>
    %cst_35 = arith.constant 0xFF800000 : f32
    %54 = vector.shape_cast %43 : vector<128x1xi1> to vector<128x1xi1>
    %55 = vector.broadcast %54 : vector<128x1xi1> to vector<128x32xi1>
    %56 = vector.broadcast %cst_35 : f32 to vector<128x32xf32>
    %57 = arith.select %55, %3, %56 : vector<128x32xi1>, vector<128x32xf32>
    %cst_36 = arith.constant dense<0xFF800000> : vector<32xf32>
    %58 = vector.multi_reduction <maximumf>, %57, %cst_36 [0] : vector<128x32xf32> to vector<32xf32>
    %59 = vector.shape_cast %58 : vector<32xf32> to vector<1x32xf32>
    %60 = arith.maximumf %53, %59 : vector<1x32xf32>
    %c1_37 = arith.constant 1 : index
    %c0_38 = arith.constant 0 : index
    %61 = vector.load %arg10[%c1_37, %c0_38] : memref<16x32xf32, #tpu.memory_space<vmem>>, vector<1x32xf32>
    tpu.vector_store %arg10[%c1_37, %c0_38], %60 {strides = array<i32>} : memref<16x32xf32, #tpu.memory_space<vmem>>, vector<1x32xf32>,
    %c2_i32 = arith.constant 2 : i32
    %62 = vector.broadcast %c2_i32 : i32 to vector<128x1xi32>
    %63 = arith.cmpi eq, %5, %62 : vector<128x1xi32>
    %c2 = arith.constant 2 : index
    %c0_39 = arith.constant 0 : index
    %64 = vector.load %arg9[%c2, %c0_39] : memref<16x32xf32, #tpu.memory_space<vmem>>, vector<1x32xf32>
    %cst_40 = arith.constant 0x7F800000 : f32
    %65 = vector.shape_cast %63 : vector<128x1xi1> to vector<128x1xi1>
    %66 = vector.broadcast %65 : vector<128x1xi1> to vector<128x32xi1>
    %67 = vector.broadcast %cst_40 : f32 to vector<128x32xf32>
    %68 = arith.select %66, %3, %67 : vector<128x32xi1>, vector<128x32xf32>
    %cst_41 = arith.constant dense<0x7F800000> : vector<32xf32>
    %69 = vector.multi_reduction <minimumf>, %68, %cst_41 [0] : vector<128x32xf32> to vector<32xf32>
    %70 = vector.shape_cast %69 : vector<32xf32> to vector<1x32xf32>
    %71 = arith.minimumf %64, %70 : vector<1x32xf32>
    %c2_42 = arith.constant 2 : index
    %c0_43 = arith.constant 0 : index
    %72 = vector.load %arg9[%c2_42, %c0_43] : memref<16x32xf32, #tpu.memory_space<vmem>>, vector<1x32xf32>
    tpu.vector_store %arg9[%c2_42, %c0_43], %71 {strides = array<i32>} : memref<16x32xf32, #tpu.memory_space<vmem>>, vector<1x32xf32>,
    %c2_44 = arith.constant 2 : index
    %c0_45 = arith.constant 0 : index
    %73 = vector.load %arg10[%c2_44, %c0_45] : memref<16x32xf32, #tpu.memory_space<vmem>>, vector<1x32xf32>
    %cst_46 = arith.constant 0xFF800000 : f32
    %74 = vector.shape_cast %63 : vector<128x1xi1> to vector<128x1xi1>
    %75 = vector.broadcast %74 : vector<128x1xi1> to vector<128x32xi1>
    %76 = vector.broadcast %cst_46 : f32 to vector<128x32xf32>
    %77 = arith.select %75, %3, %76 : vector<128x32xi1>, vector<128x32xf32>
    %cst_47 = arith.constant dense<0xFF800000> : vector<32xf32>
    %78 = vector.multi_reduction <maximumf>, %77, %cst_47 [0] : vector<128x32xf32> to vector<32xf32>
    %79 = vector.shape_cast %78 : vector<32xf32> to vector<1x32xf32>
    %80 = arith.maximumf %73, %79 : vector<1x32xf32>
    %c2_48 = arith.constant 2 : index
    %c0_49 = arith.constant 0 : index
    %81 = vector.load %arg10[%c2_48, %c0_49] : memref<16x32xf32, #tpu.memory_space<vmem>>, vector<1x32xf32>
    tpu.vector_store %arg10[%c2_48, %c0_49], %80 {strides = array<i32>} : memref<16x32xf32, #tpu.memory_space<vmem>>, vector<1x32xf32>,
    %c3_i32 = arith.constant 3 : i32
    %82 = vector.broadcast %c3_i32 : i32 to vector<128x1xi32>
    %83 = arith.cmpi eq, %5, %82 : vector<128x1xi32>
    %c3 = arith.constant 3 : index
    %c0_50 = arith.constant 0 : index
    %84 = vector.load %arg9[%c3, %c0_50] : memref<16x32xf32, #tpu.memory_space<vmem>>, vector<1x32xf32>
    %cst_51 = arith.constant 0x7F800000 : f32
    %85 = vector.shape_cast %83 : vector<128x1xi1> to vector<128x1xi1>
    %86 = vector.broadcast %85 : vector<128x1xi1> to vector<128x32xi1>
    %87 = vector.broadcast %cst_51 : f32 to vector<128x32xf32>
    %88 = arith.select %86, %3, %87 : vector<128x32xi1>, vector<128x32xf32>
    %cst_52 = arith.constant dense<0x7F800000> : vector<32xf32>
    %89 = vector.multi_reduction <minimumf>, %88, %cst_52 [0] : vector<128x32xf32> to vector<32xf32>
    %90 = vector.shape_cast %89 : vector<32xf32> to vector<1x32xf32>
    %91 = arith.minimumf %84, %90 : vector<1x32xf32>
    %c3_53 = arith.constant 3 : index
    %c0_54 = arith.constant 0 : index
    %92 = vector.load %arg9[%c3_53, %c0_54] : memref<16x32xf32, #tpu.memory_space<vmem>>, vector<1x32xf32>
    tpu.vector_store %arg9[%c3_53, %c0_54], %91 {strides = array<i32>} : memref<16x32xf32, #tpu.memory_space<vmem>>, vector<1x32xf32>,
    %c3_55 = arith.constant 3 : index
    %c0_56 = arith.constant 0 : index
    %93 = vector.load %arg10[%c3_55, %c0_56] : memref<16x32xf32, #tpu.memory_space<vmem>>, vector<1x32xf32>
    %cst_57 = arith.constant 0xFF800000 : f32
    %94 = vector.shape_cast %83 : vector<128x1xi1> to vector<128x1xi1>
    %95 = vector.broadcast %94 : vector<128x1xi1> to vector<128x32xi1>
    %96 = vector.broadcast %cst_57 : f32 to vector<128x32xf32>
    %97 = arith.select %95, %3, %96 : vector<128x32xi1>, vector<128x32xf32>
    %cst_58 = arith.constant dense<0xFF800000> : vector<32xf32>
    %98 = vector.multi_reduction <maximumf>, %97, %cst_58 [0] : vector<128x32xf32> to vector<32xf32>
    %99 = vector.shape_cast %98 : vector<32xf32> to vector<1x32xf32>
    %100 = arith.maximumf %93, %99 : vector<1x32xf32>
    %c3_59 = arith.constant 3 : index
    %c0_60 = arith.constant 0 : index
    %101 = vector.load %arg10[%c3_59, %c0_60] : memref<16x32xf32, #tpu.memory_space<vmem>>, vector<1x32xf32>
    tpu.vector_store %arg10[%c3_59, %c0_60], %100 {strides = array<i32>} : memref<16x32xf32, #tpu.memory_space<vmem>>, vector<1x32xf32>,
    %c4_i32 = arith.constant 4 : i32
    %102 = vector.broadcast %c4_i32 : i32 to vector<128x1xi32>
    %103 = arith.cmpi eq, %5, %102 : vector<128x1xi32>
    %c4 = arith.constant 4 : index
    %c0_61 = arith.constant 0 : index
    %104 = vector.load %arg9[%c4, %c0_61] : memref<16x32xf32, #tpu.memory_space<vmem>>, vector<1x32xf32>
    %cst_62 = arith.constant 0x7F800000 : f32
    %105 = vector.shape_cast %103 : vector<128x1xi1> to vector<128x1xi1>
    %106 = vector.broadcast %105 : vector<128x1xi1> to vector<128x32xi1>
    %107 = vector.broadcast %cst_62 : f32 to vector<128x32xf32>
    %108 = arith.select %106, %3, %107 : vector<128x32xi1>, vector<128x32xf32>
    %cst_63 = arith.constant dense<0x7F800000> : vector<32xf32>
    %109 = vector.multi_reduction <minimumf>, %108, %cst_63 [0] : vector<128x32xf32> to vector<32xf32>
    %110 = vector.shape_cast %109 : vector<32xf32> to vector<1x32xf32>
    %111 = arith.minimumf %104, %110 : vector<1x32xf32>
    %c4_64 = arith.constant 4 : index
    %c0_65 = arith.constant 0 : index
    %112 = vector.load %arg9[%c4_64, %c0_65] : memref<16x32xf32, #tpu.memory_space<vmem>>, vector<1x32xf32>
    tpu.vector_store %arg9[%c4_64, %c0_65], %111 {strides = array<i32>} : memref<16x32xf32, #tpu.memory_space<vmem>>, vector<1x32xf32>,
    %c4_66 = arith.constant 4 : index
    %c0_67 = arith.constant 0 : index
    %113 = vector.load %arg10[%c4_66, %c0_67] : memref<16x32xf32, #tpu.memory_space<vmem>>, vector<1x32xf32>
    %cst_68 = arith.constant 0xFF800000 : f32
    %114 = vector.shape_cast %103 : vector<128x1xi1> to vector<128x1xi1>
    %115 = vector.broadcast %114 : vector<128x1xi1> to vector<128x32xi1>
    %116 = vector.broadcast %cst_68 : f32 to vector<128x32xf32>
    %117 = arith.select %115, %3, %116 : vector<128x32xi1>, vector<128x32xf32>
    %cst_69 = arith.constant dense<0xFF800000> : vector<32xf32>
    %118 = vector.multi_reduction <maximumf>, %117, %cst_69 [0] : vector<128x32xf32> to vector<32xf32>
    %119 = vector.shape_cast %118 : vector<32xf32> to vector<1x32xf32>
    %120 = arith.maximumf %113, %119 : vector<1x32xf32>
    %c4_70 = arith.constant 4 : index
    %c0_71 = arith.constant 0 : index
    %121 = vector.load %arg10[%c4_70, %c0_71] : memref<16x32xf32, #tpu.memory_space<vmem>>, vector<1x32xf32>
    tpu.vector_store %arg10[%c4_70, %c0_71], %120 {strides = array<i32>} : memref<16x32xf32, #tpu.memory_space<vmem>>, vector<1x32xf32>,
    %c5_i32 = arith.constant 5 : i32
    %122 = vector.broadcast %c5_i32 : i32 to vector<128x1xi32>
    %123 = arith.cmpi eq, %5, %122 : vector<128x1xi32>
    %c5 = arith.constant 5 : index
    %c0_72 = arith.constant 0 : index
    %124 = vector.load %arg9[%c5, %c0_72] : memref<16x32xf32, #tpu.memory_space<vmem>>, vector<1x32xf32>
    %cst_73 = arith.constant 0x7F800000 : f32
    %125 = vector.shape_cast %123 : vector<128x1xi1> to vector<128x1xi1>
    %126 = vector.broadcast %125 : vector<128x1xi1> to vector<128x32xi1>
    %127 = vector.broadcast %cst_73 : f32 to vector<128x32xf32>
    %128 = arith.select %126, %3, %127 : vector<128x32xi1>, vector<128x32xf32>
    %cst_74 = arith.constant dense<0x7F800000> : vector<32xf32>
    %129 = vector.multi_reduction <minimumf>, %128, %cst_74 [0] : vector<128x32xf32> to vector<32xf32>
    %130 = vector.shape_cast %129 : vector<32xf32> to vector<1x32xf32>
    %131 = arith.minimumf %124, %130 : vector<1x32xf32>
    %c5_75 = arith.constant 5 : index
    %c0_76 = arith.constant 0 : index
    %132 = vector.load %arg9[%c5_75, %c0_76] : memref<16x32xf32, #tpu.memory_space<vmem>>, vector<1x32xf32>
    tpu.vector_store %arg9[%c5_75, %c0_76], %131 {strides = array<i32>} : memref<16x32xf32, #tpu.memory_space<vmem>>, vector<1x32xf32>,
    %c5_77 = arith.constant 5 : index
    %c0_78 = arith.constant 0 : index
    %133 = vector.load %arg10[%c5_77, %c0_78] : memref<16x32xf32, #tpu.memory_space<vmem>>, vector<1x32xf32>
    %cst_79 = arith.constant 0xFF800000 : f32
    %134 = vector.shape_cast %123 : vector<128x1xi1> to vector<128x1xi1>
    %135 = vector.broadcast %134 : vector<128x1xi1> to vector<128x32xi1>
    %136 = vector.broadcast %cst_79 : f32 to vector<128x32xf32>
    %137 = arith.select %135, %3, %136 : vector<128x32xi1>, vector<128x32xf32>
    %cst_80 = arith.constant dense<0xFF800000> : vector<32xf32>
    %138 = vector.multi_reduction <maximumf>, %137, %cst_80 [0] : vector<128x32xf32> to vector<32xf32>
    %139 = vector.shape_cast %138 : vector<32xf32> to vector<1x32xf32>
    %140 = arith.maximumf %133, %139 : vector<1x32xf32>
    %c5_81 = arith.constant 5 : index
    %c0_82 = arith.constant 0 : index
    %141 = vector.load %arg10[%c5_81, %c0_82] : memref<16x32xf32, #tpu.memory_space<vmem>>, vector<1x32xf32>
    tpu.vector_store %arg10[%c5_81, %c0_82], %140 {strides = array<i32>} : memref<16x32xf32, #tpu.memory_space<vmem>>, vector<1x32xf32>,
    %c6_i32 = arith.constant 6 : i32
    %142 = vector.broadcast %c6_i32 : i32 to vector<128x1xi32>
    %143 = arith.cmpi eq, %5, %142 : vector<128x1xi32>
    %c6 = arith.constant 6 : index
    %c0_83 = arith.constant 0 : index
    %144 = vector.load %arg9[%c6, %c0_83] : memref<16x32xf32, #tpu.memory_space<vmem>>, vector<1x32xf32>
    %cst_84 = arith.constant 0x7F800000 : f32
    %145 = vector.shape_cast %143 : vector<128x1xi1> to vector<128x1xi1>
    %146 = vector.broadcast %145 : vector<128x1xi1> to vector<128x32xi1>
    %147 = vector.broadcast %cst_84 : f32 to vector<128x32xf32>
    %148 = arith.select %146, %3, %147 : vector<128x32xi1>, vector<128x32xf32>
    %cst_85 = arith.constant dense<0x7F800000> : vector<32xf32>
    %149 = vector.multi_reduction <minimumf>, %148, %cst_85 [0] : vector<128x32xf32> to vector<32xf32>
    %150 = vector.shape_cast %149 : vector<32xf32> to vector<1x32xf32>
    %151 = arith.minimumf %144, %150 : vector<1x32xf32>
    %c6_86 = arith.constant 6 : index
    %c0_87 = arith.constant 0 : index
    %152 = vector.load %arg9[%c6_86, %c0_87] : memref<16x32xf32, #tpu.memory_space<vmem>>, vector<1x32xf32>
    tpu.vector_store %arg9[%c6_86, %c0_87], %151 {strides = array<i32>} : memref<16x32xf32, #tpu.memory_space<vmem>>, vector<1x32xf32>,
    %c6_88 = arith.constant 6 : index
    %c0_89 = arith.constant 0 : index
    %153 = vector.load %arg10[%c6_88, %c0_89] : memref<16x32xf32, #tpu.memory_space<vmem>>, vector<1x32xf32>
    %cst_90 = arith.constant 0xFF800000 : f32
    %154 = vector.shape_cast %143 : vector<128x1xi1> to vector<128x1xi1>
    %155 = vector.broadcast %154 : vector<128x1xi1> to vector<128x32xi1>
    %156 = vector.broadcast %cst_90 : f32 to vector<128x32xf32>
    %157 = arith.select %155, %3, %156 : vector<128x32xi1>, vector<128x32xf32>
    %cst_91 = arith.constant dense<0xFF800000> : vector<32xf32>
    %158 = vector.multi_reduction <maximumf>, %157, %cst_91 [0] : vector<128x32xf32> to vector<32xf32>
    %159 = vector.shape_cast %158 : vector<32xf32> to vector<1x32xf32>
    %160 = arith.maximumf %153, %159 : vector<1x32xf32>
    %c6_92 = arith.constant 6 : index
    %c0_93 = arith.constant 0 : index
    %161 = vector.load %arg10[%c6_92, %c0_93] : memref<16x32xf32, #tpu.memory_space<vmem>>, vector<1x32xf32>
    tpu.vector_store %arg10[%c6_92, %c0_93], %160 {strides = array<i32>} : memref<16x32xf32, #tpu.memory_space<vmem>>, vector<1x32xf32>,
    %c7_i32 = arith.constant 7 : i32
    %162 = vector.broadcast %c7_i32 : i32 to vector<128x1xi32>
    %163 = arith.cmpi eq, %5, %162 : vector<128x1xi32>
    %c7 = arith.constant 7 : index
    %c0_94 = arith.constant 0 : index
    %164 = vector.load %arg9[%c7, %c0_94] : memref<16x32xf32, #tpu.memory_space<vmem>>, vector<1x32xf32>
    %cst_95 = arith.constant 0x7F800000 : f32
    %165 = vector.shape_cast %163 : vector<128x1xi1> to vector<128x1xi1>
    %166 = vector.broadcast %165 : vector<128x1xi1> to vector<128x32xi1>
    %167 = vector.broadcast %cst_95 : f32 to vector<128x32xf32>
    %168 = arith.select %166, %3, %167 : vector<128x32xi1>, vector<128x32xf32>
    %cst_96 = arith.constant dense<0x7F800000> : vector<32xf32>
    %169 = vector.multi_reduction <minimumf>, %168, %cst_96 [0] : vector<128x32xf32> to vector<32xf32>
    %170 = vector.shape_cast %169 : vector<32xf32> to vector<1x32xf32>
    %171 = arith.minimumf %164, %170 : vector<1x32xf32>
    %c7_97 = arith.constant 7 : index
    %c0_98 = arith.constant 0 : index
    %172 = vector.load %arg9[%c7_97, %c0_98] : memref<16x32xf32, #tpu.memory_space<vmem>>, vector<1x32xf32>
    tpu.vector_store %arg9[%c7_97, %c0_98], %171 {strides = array<i32>} : memref<16x32xf32, #tpu.memory_space<vmem>>, vector<1x32xf32>,
    %c7_99 = arith.constant 7 : index
    %c0_100 = arith.constant 0 : index
    %173 = vector.load %arg10[%c7_99, %c0_100] : memref<16x32xf32, #tpu.memory_space<vmem>>, vector<1x32xf32>
    %cst_101 = arith.constant 0xFF800000 : f32
    %174 = vector.shape_cast %163 : vector<128x1xi1> to vector<128x1xi1>
    %175 = vector.broadcast %174 : vector<128x1xi1> to vector<128x32xi1>
    %176 = vector.broadcast %cst_101 : f32 to vector<128x32xf32>
    %177 = arith.select %175, %3, %176 : vector<128x32xi1>, vector<128x32xf32>
    %cst_102 = arith.constant dense<0xFF800000> : vector<32xf32>
    %178 = vector.multi_reduction <maximumf>, %177, %cst_102 [0] : vector<128x32xf32> to vector<32xf32>
    %179 = vector.shape_cast %178 : vector<32xf32> to vector<1x32xf32>
    %180 = arith.maximumf %173, %179 : vector<1x32xf32>
    %c7_103 = arith.constant 7 : index
    %c0_104 = arith.constant 0 : index
    %181 = vector.load %arg10[%c7_103, %c0_104] : memref<16x32xf32, #tpu.memory_space<vmem>>, vector<1x32xf32>
    tpu.vector_store %arg10[%c7_103, %c0_104], %180 {strides = array<i32>} : memref<16x32xf32, #tpu.memory_space<vmem>>, vector<1x32xf32>,
    %c8_i32 = arith.constant 8 : i32
    %182 = vector.broadcast %c8_i32 : i32 to vector<128x1xi32>
    %183 = arith.cmpi eq, %5, %182 : vector<128x1xi32>
    %c8 = arith.constant 8 : index
    %c0_105 = arith.constant 0 : index
    %184 = vector.load %arg9[%c8, %c0_105] : memref<16x32xf32, #tpu.memory_space<vmem>>, vector<1x32xf32>
    %cst_106 = arith.constant 0x7F800000 : f32
    %185 = vector.shape_cast %183 : vector<128x1xi1> to vector<128x1xi1>
    %186 = vector.broadcast %185 : vector<128x1xi1> to vector<128x32xi1>
    %187 = vector.broadcast %cst_106 : f32 to vector<128x32xf32>
    %188 = arith.select %186, %3, %187 : vector<128x32xi1>, vector<128x32xf32>
    %cst_107 = arith.constant dense<0x7F800000> : vector<32xf32>
    %189 = vector.multi_reduction <minimumf>, %188, %cst_107 [0] : vector<128x32xf32> to vector<32xf32>
    %190 = vector.shape_cast %189 : vector<32xf32> to vector<1x32xf32>
    %191 = arith.minimumf %184, %190 : vector<1x32xf32>
    %c8_108 = arith.constant 8 : index
    %c0_109 = arith.constant 0 : index
    %192 = vector.load %arg9[%c8_108, %c0_109] : memref<16x32xf32, #tpu.memory_space<vmem>>, vector<1x32xf32>
    tpu.vector_store %arg9[%c8_108, %c0_109], %191 {strides = array<i32>} : memref<16x32xf32, #tpu.memory_space<vmem>>, vector<1x32xf32>,
    %c8_110 = arith.constant 8 : index
    %c0_111 = arith.constant 0 : index
    %193 = vector.load %arg10[%c8_110, %c0_111] : memref<16x32xf32, #tpu.memory_space<vmem>>, vector<1x32xf32>
    %cst_112 = arith.constant 0xFF800000 : f32
    %194 = vector.shape_cast %183 : vector<128x1xi1> to vector<128x1xi1>
    %195 = vector.broadcast %194 : vector<128x1xi1> to vector<128x32xi1>
    %196 = vector.broadcast %cst_112 : f32 to vector<128x32xf32>
    %197 = arith.select %195, %3, %196 : vector<128x32xi1>, vector<128x32xf32>
    %cst_113 = arith.constant dense<0xFF800000> : vector<32xf32>
    %198 = vector.multi_reduction <maximumf>, %197, %cst_113 [0] : vector<128x32xf32> to vector<32xf32>
    %199 = vector.shape_cast %198 : vector<32xf32> to vector<1x32xf32>
    %200 = arith.maximumf %193, %199 : vector<1x32xf32>
    %c8_114 = arith.constant 8 : index
    %c0_115 = arith.constant 0 : index
    %201 = vector.load %arg10[%c8_114, %c0_115] : memref<16x32xf32, #tpu.memory_space<vmem>>, vector<1x32xf32>
    tpu.vector_store %arg10[%c8_114, %c0_115], %200 {strides = array<i32>} : memref<16x32xf32, #tpu.memory_space<vmem>>, vector<1x32xf32>,
    %c9_i32 = arith.constant 9 : i32
    %202 = vector.broadcast %c9_i32 : i32 to vector<128x1xi32>
    %203 = arith.cmpi eq, %5, %202 : vector<128x1xi32>
    %c9 = arith.constant 9 : index
    %c0_116 = arith.constant 0 : index
    %204 = vector.load %arg9[%c9, %c0_116] : memref<16x32xf32, #tpu.memory_space<vmem>>, vector<1x32xf32>
    %cst_117 = arith.constant 0x7F800000 : f32
    %205 = vector.shape_cast %203 : vector<128x1xi1> to vector<128x1xi1>
    %206 = vector.broadcast %205 : vector<128x1xi1> to vector<128x32xi1>
    %207 = vector.broadcast %cst_117 : f32 to vector<128x32xf32>
    %208 = arith.select %206, %3, %207 : vector<128x32xi1>, vector<128x32xf32>
    %cst_118 = arith.constant dense<0x7F800000> : vector<32xf32>
    %209 = vector.multi_reduction <minimumf>, %208, %cst_118 [0] : vector<128x32xf32> to vector<32xf32>
    %210 = vector.shape_cast %209 : vector<32xf32> to vector<1x32xf32>
    %211 = arith.minimumf %204, %210 : vector<1x32xf32>
    %c9_119 = arith.constant 9 : index
    %c0_120 = arith.constant 0 : index
    %212 = vector.load %arg9[%c9_119, %c0_120] : memref<16x32xf32, #tpu.memory_space<vmem>>, vector<1x32xf32>
    tpu.vector_store %arg9[%c9_119, %c0_120], %211 {strides = array<i32>} : memref<16x32xf32, #tpu.memory_space<vmem>>, vector<1x32xf32>,
    %c9_121 = arith.constant 9 : index
    %c0_122 = arith.constant 0 : index
    %213 = vector.load %arg10[%c9_121, %c0_122] : memref<16x32xf32, #tpu.memory_space<vmem>>, vector<1x32xf32>
    %cst_123 = arith.constant 0xFF800000 : f32
    %214 = vector.shape_cast %203 : vector<128x1xi1> to vector<128x1xi1>
    %215 = vector.broadcast %214 : vector<128x1xi1> to vector<128x32xi1>
    %216 = vector.broadcast %cst_123 : f32 to vector<128x32xf32>
    %217 = arith.select %215, %3, %216 : vector<128x32xi1>, vector<128x32xf32>
    %cst_124 = arith.constant dense<0xFF800000> : vector<32xf32>
    %218 = vector.multi_reduction <maximumf>, %217, %cst_124 [0] : vector<128x32xf32> to vector<32xf32>
    %219 = vector.shape_cast %218 : vector<32xf32> to vector<1x32xf32>
    %220 = arith.maximumf %213, %219 : vector<1x32xf32>
    %c9_125 = arith.constant 9 : index
    %c0_126 = arith.constant 0 : index
    %221 = vector.load %arg10[%c9_125, %c0_126] : memref<16x32xf32, #tpu.memory_space<vmem>>, vector<1x32xf32>
    tpu.vector_store %arg10[%c9_125, %c0_126], %220 {strides = array<i32>} : memref<16x32xf32, #tpu.memory_space<vmem>>, vector<1x32xf32>,
    %c10_i32 = arith.constant 10 : i32
    %222 = vector.broadcast %c10_i32 : i32 to vector<128x1xi32>
    %223 = arith.cmpi eq, %5, %222 : vector<128x1xi32>
    %c10 = arith.constant 10 : index
    %c0_127 = arith.constant 0 : index
    %224 = vector.load %arg9[%c10, %c0_127] : memref<16x32xf32, #tpu.memory_space<vmem>>, vector<1x32xf32>
    %cst_128 = arith.constant 0x7F800000 : f32
    %225 = vector.shape_cast %223 : vector<128x1xi1> to vector<128x1xi1>
    %226 = vector.broadcast %225 : vector<128x1xi1> to vector<128x32xi1>
    %227 = vector.broadcast %cst_128 : f32 to vector<128x32xf32>
    %228 = arith.select %226, %3, %227 : vector<128x32xi1>, vector<128x32xf32>
    %cst_129 = arith.constant dense<0x7F800000> : vector<32xf32>
    %229 = vector.multi_reduction <minimumf>, %228, %cst_129 [0] : vector<128x32xf32> to vector<32xf32>
    %230 = vector.shape_cast %229 : vector<32xf32> to vector<1x32xf32>
    %231 = arith.minimumf %224, %230 : vector<1x32xf32>
    %c10_130 = arith.constant 10 : index
    %c0_131 = arith.constant 0 : index
    %232 = vector.load %arg9[%c10_130, %c0_131] : memref<16x32xf32, #tpu.memory_space<vmem>>, vector<1x32xf32>
    tpu.vector_store %arg9[%c10_130, %c0_131], %231 {strides = array<i32>} : memref<16x32xf32, #tpu.memory_space<vmem>>, vector<1x32xf32>,
    %c10_132 = arith.constant 10 : index
    %c0_133 = arith.constant 0 : index
    %233 = vector.load %arg10[%c10_132, %c0_133] : memref<16x32xf32, #tpu.memory_space<vmem>>, vector<1x32xf32>
    %cst_134 = arith.constant 0xFF800000 : f32
    %234 = vector.shape_cast %223 : vector<128x1xi1> to vector<128x1xi1>
    %235 = vector.broadcast %234 : vector<128x1xi1> to vector<128x32xi1>
    %236 = vector.broadcast %cst_134 : f32 to vector<128x32xf32>
    %237 = arith.select %235, %3, %236 : vector<128x32xi1>, vector<128x32xf32>
    %cst_135 = arith.constant dense<0xFF800000> : vector<32xf32>
    %238 = vector.multi_reduction <maximumf>, %237, %cst_135 [0] : vector<128x32xf32> to vector<32xf32>
    %239 = vector.shape_cast %238 : vector<32xf32> to vector<1x32xf32>
    %240 = arith.maximumf %233, %239 : vector<1x32xf32>
    %c10_136 = arith.constant 10 : index
    %c0_137 = arith.constant 0 : index
    %241 = vector.load %arg10[%c10_136, %c0_137] : memref<16x32xf32, #tpu.memory_space<vmem>>, vector<1x32xf32>
    tpu.vector_store %arg10[%c10_136, %c0_137], %240 {strides = array<i32>} : memref<16x32xf32, #tpu.memory_space<vmem>>, vector<1x32xf32>,
    %c11_i32 = arith.constant 11 : i32
    %242 = vector.broadcast %c11_i32 : i32 to vector<128x1xi32>
    %243 = arith.cmpi eq, %5, %242 : vector<128x1xi32>
    %c11 = arith.constant 11 : index
    %c0_138 = arith.constant 0 : index
    %244 = vector.load %arg9[%c11, %c0_138] : memref<16x32xf32, #tpu.memory_space<vmem>>, vector<1x32xf32>
    %cst_139 = arith.constant 0x7F800000 : f32
    %245 = vector.shape_cast %243 : vector<128x1xi1> to vector<128x1xi1>
    %246 = vector.broadcast %245 : vector<128x1xi1> to vector<128x32xi1>
    %247 = vector.broadcast %cst_139 : f32 to vector<128x32xf32>
    %248 = arith.select %246, %3, %247 : vector<128x32xi1>, vector<128x32xf32>
    %cst_140 = arith.constant dense<0x7F800000> : vector<32xf32>
    %249 = vector.multi_reduction <minimumf>, %248, %cst_140 [0] : vector<128x32xf32> to vector<32xf32>
    %250 = vector.shape_cast %249 : vector<32xf32> to vector<1x32xf32>
    %251 = arith.minimumf %244, %250 : vector<1x32xf32>
    %c11_141 = arith.constant 11 : index
    %c0_142 = arith.constant 0 : index
    %252 = vector.load %arg9[%c11_141, %c0_142] : memref<16x32xf32, #tpu.memory_space<vmem>>, vector<1x32xf32>
    tpu.vector_store %arg9[%c11_141, %c0_142], %251 {strides = array<i32>} : memref<16x32xf32, #tpu.memory_space<vmem>>, vector<1x32xf32>,
    %c11_143 = arith.constant 11 : index
    %c0_144 = arith.constant 0 : index
    %253 = vector.load %arg10[%c11_143, %c0_144] : memref<16x32xf32, #tpu.memory_space<vmem>>, vector<1x32xf32>
    %cst_145 = arith.constant 0xFF800000 : f32
    %254 = vector.shape_cast %243 : vector<128x1xi1> to vector<128x1xi1>
    %255 = vector.broadcast %254 : vector<128x1xi1> to vector<128x32xi1>
    %256 = vector.broadcast %cst_145 : f32 to vector<128x32xf32>
    %257 = arith.select %255, %3, %256 : vector<128x32xi1>, vector<128x32xf32>
    %cst_146 = arith.constant dense<0xFF800000> : vector<32xf32>
    %258 = vector.multi_reduction <maximumf>, %257, %cst_146 [0] : vector<128x32xf32> to vector<32xf32>
    %259 = vector.shape_cast %258 : vector<32xf32> to vector<1x32xf32>
    %260 = arith.maximumf %253, %259 : vector<1x32xf32>
    %c11_147 = arith.constant 11 : index
    %c0_148 = arith.constant 0 : index
    %261 = vector.load %arg10[%c11_147, %c0_148] : memref<16x32xf32, #tpu.memory_space<vmem>>, vector<1x32xf32>
    tpu.vector_store %arg10[%c11_147, %c0_148], %260 {strides = array<i32>} : memref<16x32xf32, #tpu.memory_space<vmem>>, vector<1x32xf32>,
    %c12_i32 = arith.constant 12 : i32
    %262 = vector.broadcast %c12_i32 : i32 to vector<128x1xi32>
    %263 = arith.cmpi eq, %5, %262 : vector<128x1xi32>
    %c12 = arith.constant 12 : index
    %c0_149 = arith.constant 0 : index
    %264 = vector.load %arg9[%c12, %c0_149] : memref<16x32xf32, #tpu.memory_space<vmem>>, vector<1x32xf32>
    %cst_150 = arith.constant 0x7F800000 : f32
    %265 = vector.shape_cast %263 : vector<128x1xi1> to vector<128x1xi1>
    %266 = vector.broadcast %265 : vector<128x1xi1> to vector<128x32xi1>
    %267 = vector.broadcast %cst_150 : f32 to vector<128x32xf32>
    %268 = arith.select %266, %3, %267 : vector<128x32xi1>, vector<128x32xf32>
    %cst_151 = arith.constant dense<0x7F800000> : vector<32xf32>
    %269 = vector.multi_reduction <minimumf>, %268, %cst_151 [0] : vector<128x32xf32> to vector<32xf32>
    %270 = vector.shape_cast %269 : vector<32xf32> to vector<1x32xf32>
    %271 = arith.minimumf %264, %270 : vector<1x32xf32>
    %c12_152 = arith.constant 12 : index
    %c0_153 = arith.constant 0 : index
    %272 = vector.load %arg9[%c12_152, %c0_153] : memref<16x32xf32, #tpu.memory_space<vmem>>, vector<1x32xf32>
    tpu.vector_store %arg9[%c12_152, %c0_153], %271 {strides = array<i32>} : memref<16x32xf32, #tpu.memory_space<vmem>>, vector<1x32xf32>,
    %c12_154 = arith.constant 12 : index
    %c0_155 = arith.constant 0 : index
    %273 = vector.load %arg10[%c12_154, %c0_155] : memref<16x32xf32, #tpu.memory_space<vmem>>, vector<1x32xf32>
    %cst_156 = arith.constant 0xFF800000 : f32
    %274 = vector.shape_cast %263 : vector<128x1xi1> to vector<128x1xi1>
    %275 = vector.broadcast %274 : vector<128x1xi1> to vector<128x32xi1>
    %276 = vector.broadcast %cst_156 : f32 to vector<128x32xf32>
    %277 = arith.select %275, %3, %276 : vector<128x32xi1>, vector<128x32xf32>
    %cst_157 = arith.constant dense<0xFF800000> : vector<32xf32>
    %278 = vector.multi_reduction <maximumf>, %277, %cst_157 [0] : vector<128x32xf32> to vector<32xf32>
    %279 = vector.shape_cast %278 : vector<32xf32> to vector<1x32xf32>
    %280 = arith.maximumf %273, %279 : vector<1x32xf32>
    %c12_158 = arith.constant 12 : index
    %c0_159 = arith.constant 0 : index
    %281 = vector.load %arg10[%c12_158, %c0_159] : memref<16x32xf32, #tpu.memory_space<vmem>>, vector<1x32xf32>
    tpu.vector_store %arg10[%c12_158, %c0_159], %280 {strides = array<i32>} : memref<16x32xf32, #tpu.memory_space<vmem>>, vector<1x32xf32>,
    %c13_i32 = arith.constant 13 : i32
    %282 = vector.broadcast %c13_i32 : i32 to vector<128x1xi32>
    %283 = arith.cmpi eq, %5, %282 : vector<128x1xi32>
    %c13 = arith.constant 13 : index
    %c0_160 = arith.constant 0 : index
    %284 = vector.load %arg9[%c13, %c0_160] : memref<16x32xf32, #tpu.memory_space<vmem>>, vector<1x32xf32>
    %cst_161 = arith.constant 0x7F800000 : f32
    %285 = vector.shape_cast %283 : vector<128x1xi1> to vector<128x1xi1>
    %286 = vector.broadcast %285 : vector<128x1xi1> to vector<128x32xi1>
    %287 = vector.broadcast %cst_161 : f32 to vector<128x32xf32>
    %288 = arith.select %286, %3, %287 : vector<128x32xi1>, vector<128x32xf32>
    %cst_162 = arith.constant dense<0x7F800000> : vector<32xf32>
    %289 = vector.multi_reduction <minimumf>, %288, %cst_162 [0] : vector<128x32xf32> to vector<32xf32>
    %290 = vector.shape_cast %289 : vector<32xf32> to vector<1x32xf32>
    %291 = arith.minimumf %284, %290 : vector<1x32xf32>
    %c13_163 = arith.constant 13 : index
    %c0_164 = arith.constant 0 : index
    %292 = vector.load %arg9[%c13_163, %c0_164] : memref<16x32xf32, #tpu.memory_space<vmem>>, vector<1x32xf32>
    tpu.vector_store %arg9[%c13_163, %c0_164], %291 {strides = array<i32>} : memref<16x32xf32, #tpu.memory_space<vmem>>, vector<1x32xf32>,
    %c13_165 = arith.constant 13 : index
    %c0_166 = arith.constant 0 : index
    %293 = vector.load %arg10[%c13_165, %c0_166] : memref<16x32xf32, #tpu.memory_space<vmem>>, vector<1x32xf32>
    %cst_167 = arith.constant 0xFF800000 : f32
    %294 = vector.shape_cast %283 : vector<128x1xi1> to vector<128x1xi1>
    %295 = vector.broadcast %294 : vector<128x1xi1> to vector<128x32xi1>
    %296 = vector.broadcast %cst_167 : f32 to vector<128x32xf32>
    %297 = arith.select %295, %3, %296 : vector<128x32xi1>, vector<128x32xf32>
    %cst_168 = arith.constant dense<0xFF800000> : vector<32xf32>
    %298 = vector.multi_reduction <maximumf>, %297, %cst_168 [0] : vector<128x32xf32> to vector<32xf32>
    %299 = vector.shape_cast %298 : vector<32xf32> to vector<1x32xf32>
    %300 = arith.maximumf %293, %299 : vector<1x32xf32>
    %c13_169 = arith.constant 13 : index
    %c0_170 = arith.constant 0 : index
    %301 = vector.load %arg10[%c13_169, %c0_170] : memref<16x32xf32, #tpu.memory_space<vmem>>, vector<1x32xf32>
    tpu.vector_store %arg10[%c13_169, %c0_170], %300 {strides = array<i32>} : memref<16x32xf32, #tpu.memory_space<vmem>>, vector<1x32xf32>,
    %c14_i32 = arith.constant 14 : i32
    %302 = vector.broadcast %c14_i32 : i32 to vector<128x1xi32>
    %303 = arith.cmpi eq, %5, %302 : vector<128x1xi32>
    %c14 = arith.constant 14 : index
    %c0_171 = arith.constant 0 : index
    %304 = vector.load %arg9[%c14, %c0_171] : memref<16x32xf32, #tpu.memory_space<vmem>>, vector<1x32xf32>
    %cst_172 = arith.constant 0x7F800000 : f32
    %305 = vector.shape_cast %303 : vector<128x1xi1> to vector<128x1xi1>
    %306 = vector.broadcast %305 : vector<128x1xi1> to vector<128x32xi1>
    %307 = vector.broadcast %cst_172 : f32 to vector<128x32xf32>
    %308 = arith.select %306, %3, %307 : vector<128x32xi1>, vector<128x32xf32>
    %cst_173 = arith.constant dense<0x7F800000> : vector<32xf32>
    %309 = vector.multi_reduction <minimumf>, %308, %cst_173 [0] : vector<128x32xf32> to vector<32xf32>
    %310 = vector.shape_cast %309 : vector<32xf32> to vector<1x32xf32>
    %311 = arith.minimumf %304, %310 : vector<1x32xf32>
    %c14_174 = arith.constant 14 : index
    %c0_175 = arith.constant 0 : index
    %312 = vector.load %arg9[%c14_174, %c0_175] : memref<16x32xf32, #tpu.memory_space<vmem>>, vector<1x32xf32>
    tpu.vector_store %arg9[%c14_174, %c0_175], %311 {strides = array<i32>} : memref<16x32xf32, #tpu.memory_space<vmem>>, vector<1x32xf32>,
    %c14_176 = arith.constant 14 : index
    %c0_177 = arith.constant 0 : index
    %313 = vector.load %arg10[%c14_176, %c0_177] : memref<16x32xf32, #tpu.memory_space<vmem>>, vector<1x32xf32>
    %cst_178 = arith.constant 0xFF800000 : f32
    %314 = vector.shape_cast %303 : vector<128x1xi1> to vector<128x1xi1>
    %315 = vector.broadcast %314 : vector<128x1xi1> to vector<128x32xi1>
    %316 = vector.broadcast %cst_178 : f32 to vector<128x32xf32>
    %317 = arith.select %315, %3, %316 : vector<128x32xi1>, vector<128x32xf32>
    %cst_179 = arith.constant dense<0xFF800000> : vector<32xf32>
    %318 = vector.multi_reduction <maximumf>, %317, %cst_179 [0] : vector<128x32xf32> to vector<32xf32>
    %319 = vector.shape_cast %318 : vector<32xf32> to vector<1x32xf32>
    %320 = arith.maximumf %313, %319 : vector<1x32xf32>
    %c14_180 = arith.constant 14 : index
    %c0_181 = arith.constant 0 : index
    %321 = vector.load %arg10[%c14_180, %c0_181] : memref<16x32xf32, #tpu.memory_space<vmem>>, vector<1x32xf32>
    tpu.vector_store %arg10[%c14_180, %c0_181], %320 {strides = array<i32>} : memref<16x32xf32, #tpu.memory_space<vmem>>, vector<1x32xf32>,
    %c15_i32 = arith.constant 15 : i32
    %322 = vector.broadcast %c15_i32 : i32 to vector<128x1xi32>
    %323 = arith.cmpi eq, %5, %322 : vector<128x1xi32>
    %c15 = arith.constant 15 : index
    %c0_182 = arith.constant 0 : index
    %324 = vector.load %arg9[%c15, %c0_182] : memref<16x32xf32, #tpu.memory_space<vmem>>, vector<1x32xf32>
    %cst_183 = arith.constant 0x7F800000 : f32
    %325 = vector.shape_cast %323 : vector<128x1xi1> to vector<128x1xi1>
    %326 = vector.broadcast %325 : vector<128x1xi1> to vector<128x32xi1>
    %327 = vector.broadcast %cst_183 : f32 to vector<128x32xf32>
    %328 = arith.select %326, %3, %327 : vector<128x32xi1>, vector<128x32xf32>
    %cst_184 = arith.constant dense<0x7F800000> : vector<32xf32>
    %329 = vector.multi_reduction <minimumf>, %328, %cst_184 [0] : vector<128x32xf32> to vector<32xf32>
    %330 = vector.shape_cast %329 : vector<32xf32> to vector<1x32xf32>
    %331 = arith.minimumf %324, %330 : vector<1x32xf32>
    %c15_185 = arith.constant 15 : index
    %c0_186 = arith.constant 0 : index
    %332 = vector.load %arg9[%c15_185, %c0_186] : memref<16x32xf32, #tpu.memory_space<vmem>>, vector<1x32xf32>
    tpu.vector_store %arg9[%c15_185, %c0_186], %331 {strides = array<i32>} : memref<16x32xf32, #tpu.memory_space<vmem>>, vector<1x32xf32>,
    %c15_187 = arith.constant 15 : index
    %c0_188 = arith.constant 0 : index
    %333 = vector.load %arg10[%c15_187, %c0_188] : memref<16x32xf32, #tpu.memory_space<vmem>>, vector<1x32xf32>
    %cst_189 = arith.constant 0xFF800000 : f32
    %334 = vector.shape_cast %323 : vector<128x1xi1> to vector<128x1xi1>
    %335 = vector.broadcast %334 : vector<128x1xi1> to vector<128x32xi1>
    %336 = vector.broadcast %cst_189 : f32 to vector<128x32xf32>
    %337 = arith.select %335, %3, %336 : vector<128x32xi1>, vector<128x32xf32>
    %cst_190 = arith.constant dense<0xFF800000> : vector<32xf32>
    %338 = vector.multi_reduction <maximumf>, %337, %cst_190 [0] : vector<128x32xf32> to vector<32xf32>
    %339 = vector.shape_cast %338 : vector<32xf32> to vector<1x32xf32>
    %340 = arith.maximumf %333, %339 : vector<1x32xf32>
    %c15_191 = arith.constant 15 : index
    %c0_192 = arith.constant 0 : index
    %341 = vector.load %arg10[%c15_191, %c0_192] : memref<16x32xf32, #tpu.memory_space<vmem>>, vector<1x32xf32>
    tpu.vector_store %arg10[%c15_191, %c0_192], %340 {strides = array<i32>} : memref<16x32xf32, #tpu.memory_space<vmem>>, vector<1x32xf32>,
    %c1_i32_193 = arith.constant 1 : i32
    %342 = arith.cmpi eq, %arg0, %c1_i32_193 : i32
    %343 = arith.extui %342 : i1 to i32
    %c0_i32_194 = arith.constant 0 : i32
    %344 = arith.cmpi ne, %343, %c0_i32_194 : i32
    scf.if %344 {
      %c0_195 = arith.constant 0 : index
      %c0_196 = arith.constant 0 : index
      %345 = vector.load %arg4[%c0_195, %c0_196] : memref<16x32xf32, #tpu.memory_space<vmem>>, vector<16x32xf32>
      %c0_197 = arith.constant 0 : index
      %c0_198 = arith.constant 0 : index
      %346 = vector.load %arg7[%c0_197, %c0_198] : memref<16x64xf32, #tpu.memory_space<vmem>>, vector<16x32xf32>
      %c0_199 = arith.constant 0 : index
      %c32 = arith.constant 32 : index
      %347 = vector.load %arg7[%c0_199, %c32] : memref<16x64xf32, #tpu.memory_space<vmem>>, vector<16x32xf32>
      %c0_200 = arith.constant 0 : index
      %c0_201 = arith.constant 0 : index
      %348 = vector.load %arg8[%c0_200, %c0_201] : memref<16x1xf32, #tpu.memory_space<vmem>>, vector<16x1xf32>
      %cst_202 = arith.constant 1.000000e+00 : f32
      %349 = vector.broadcast %cst_202 : f32 to vector<16x1xf32>
      %350 = arith.maximumf %348, %349 : vector<16x1xf32>
      %351 = tpu.reciprocal %350 : vector<16x1xf32> -> vector<16x1xf32>
      %352 = vector.broadcast %351 : vector<16x1xf32> to vector<16x32xf32>
      %353 = arith.mulf %346, %352 : vector<16x32xf32>
      %354 = vector.broadcast %351 : vector<16x1xf32> to vector<16x32xf32>
      %355 = arith.mulf %347, %354 : vector<16x32xf32>
      %356 = arith.mulf %353, %353 : vector<16x32xf32>
      %357 = arith.subf %355, %356 : vector<16x32xf32>
      %c0_203 = arith.constant 0 : index
      %c0_204 = arith.constant 0 : index
      %358 = vector.load %arg9[%c0_203, %c0_204] : memref<16x32xf32, #tpu.memory_space<vmem>>, vector<16x32xf32>
      %c0_205 = arith.constant 0 : index
      %c0_206 = arith.constant 0 : index
      %359 = vector.load %arg10[%c0_205, %c0_206] : memref<16x32xf32, #tpu.memory_space<vmem>>, vector<16x32xf32>
      %360 = tpu.concatenate %345, %346, %358, %359, %357 in 1 : vector<16x32xf32>, vector<16x32xf32>, vector<16x32xf32>, vector<16x32xf32>, vector<16x32xf32> -> vector<16x160xf32>
      %c544 = arith.constant 544 : index
      %c0_207 = arith.constant 0 : index
      %361 = vector.load %arg5[%c544, %c0_207] : memref<552x128xf32, #tpu.memory_space<vmem>>, vector<8x128xf32>
      %362 = vector.extract_strided_slice %361 {offsets = [0, 0], sizes = [1, 128], strides = [1, 1]} : vector<8x128xf32> to vector<1x128xf32>
      %363 = vector.extract_strided_slice %361 {offsets = [1, 0], sizes = [1, 128], strides = [1, 1]} : vector<8x128xf32> to vector<1x128xf32>
      %364 = vector.extract_strided_slice %361 {offsets = [2, 0], sizes = [1, 128], strides = [1, 1]} : vector<8x128xf32> to vector<1x128xf32>
      %365 = vector.extract_strided_slice %361 {offsets = [3, 0], sizes = [1, 128], strides = [1, 1]} : vector<8x128xf32> to vector<1x128xf32>
      %366 = vector.extract_strided_slice %361 {offsets = [4, 0], sizes = [1, 128], strides = [1, 1]} : vector<8x128xf32> to vector<1x128xf32>
      %367 = vector.extract_strided_slice %361 {offsets = [5, 0], sizes = [1, 128], strides = [1, 1]} : vector<8x128xf32> to vector<1x128xf32>
      %c0_208 = arith.constant 0 : index
      %c0_209 = arith.constant 0 : index
      %368 = vector.load %arg5[%c0_208, %c0_209] : memref<552x128xf32, #tpu.memory_space<vmem>>, vector<160x128xf32>
      %cst_210 = arith.constant dense<0.000000e+00> : vector<16x128xf32>
      %369 = tpu.matmul %360, %368, %cst_210 {dimension_numbers = #tpu.dot_dimension_numbers<[1], [0], [0], [1], [0, 0, 1, 1], [], []>} : vector<16x160xf32>, vector<160x128xf32>, vector<16x128xf32> -> vector<16x128xf32>
      %370 = vector.broadcast %362 : vector<1x128xf32> to vector<16x128xf32>
      %371 = arith.addf %369, %370 : vector<16x128xf32>
      %cst_211 = arith.constant 0.000000e+00 : f32
      %372 = vector.broadcast %cst_211 : f32 to vector<16x128xf32>
      %373 = arith.maximumf %371, %372 : vector<16x128xf32>
      %c160 = arith.constant 160 : index
      %c0_212 = arith.constant 0 : index
      %374 = vector.load %arg5[%c160, %c0_212] : memref<552x128xf32, #tpu.memory_space<vmem>>, vector<128x128xf32>
      %cst_213 = arith.constant dense<0.000000e+00> : vector<16x128xf32>
      %375 = tpu.matmul %373, %374, %cst_213 {dimension_numbers = #tpu.dot_dimension_numbers<[1], [0], [0], [1], [0, 0, 1, 1], [], []>} : vector<16x128xf32>, vector<128x128xf32>, vector<16x128xf32> -> vector<16x128xf32>
      %376 = vector.broadcast %363 : vector<1x128xf32> to vector<16x128xf32>
      %377 = arith.addf %375, %376 : vector<16x128xf32>
      %cst_214 = arith.constant 0.000000e+00 : f32
      %378 = vector.broadcast %cst_214 : f32 to vector<16x128xf32>
      %379 = arith.maximumf %377, %378 : vector<16x128xf32>
      %c288 = arith.constant 288 : index
      %c0_215 = arith.constant 0 : index
      %380 = vector.load %arg5[%c288, %c0_215] : memref<552x128xf32, #tpu.memory_space<vmem>>, vector<128x128xf32>
      %cst_216 = arith.constant dense<0.000000e+00> : vector<16x128xf32>
      %381 = tpu.matmul %379, %380, %cst_216 {dimension_numbers = #tpu.dot_dimension_numbers<[1], [0], [0], [1], [0, 0, 1, 1], [], []>} : vector<16x128xf32>, vector<128x128xf32>, vector<16x128xf32> -> vector<16x128xf32>
      %382 = vector.broadcast %364 : vector<1x128xf32> to vector<16x128xf32>
      %383 = arith.addf %381, %382 : vector<16x128xf32>
      %cst_217 = arith.constant 0.000000e+00 : f32
      %384 = vector.broadcast %cst_217 : f32 to vector<16x128xf32>
      %385 = arith.maximumf %383, %384 : vector<16x128xf32>
      %386 = tpu.iota {dimensions = array<i32: 1>} : vector<1x128xi32>
      %cst_218 = arith.constant dense<0.000000e+00> : vector<16xf32>
      %387 = vector.multi_reduction <add>, %385, %cst_218 [1] : vector<16x128xf32> to vector<16xf32>
      %388 = vector.shape_cast %387 : vector<16xf32> to vector<16x1xf32>
      %cst_219 = arith.constant 1.562500e-02 : f32
      %389 = vector.broadcast %cst_219 : f32 to vector<16x1xf32>
      %390 = arith.mulf %388, %389 : vector<16x1xf32>
      %391 = vector.broadcast %390 : vector<16x1xf32> to vector<16x128xf32>
      %392 = arith.subf %385, %391 : vector<16x128xf32>
      %c64_i32 = arith.constant 64 : i32
      %393 = vector.broadcast %c64_i32 : i32 to vector<1x128xi32>
      %394 = arith.cmpi slt, %386, %393 : vector<1x128xi32>
      %395 = arith.mulf %392, %392 : vector<16x128xf32>
      %cst_220 = arith.constant 0.000000e+00 : f32
      %396 = vector.shape_cast %394 : vector<1x128xi1> to vector<1x128xi1>
      %397 = vector.broadcast %396 : vector<1x128xi1> to vector<16x128xi1>
      %398 = vector.broadcast %cst_220 : f32 to vector<16x128xf32>
      %399 = arith.select %397, %395, %398 : vector<16x128xi1>, vector<16x128xf32>
      %cst_221 = arith.constant dense<0.000000e+00> : vector<16xf32>
      %400 = vector.multi_reduction <add>, %399, %cst_221 [1] : vector<16x128xf32> to vector<16xf32>
      %401 = vector.shape_cast %400 : vector<16xf32> to vector<16x1xf32>
      %cst_222 = arith.constant 1.562500e-02 : f32
      %402 = vector.broadcast %cst_222 : f32 to vector<16x1xf32>
      %403 = arith.mulf %401, %402 : vector<16x1xf32>
      %cst_223 = arith.constant 9.99999974E-6 : f32
      %404 = vector.broadcast %cst_223 : f32 to vector<16x1xf32>
      %405 = arith.addf %403, %404 : vector<16x1xf32>
      %406 = math.rsqrt %405 : vector<16x1xf32>
      %407 = vector.broadcast %406 : vector<16x1xf32> to vector<16x128xf32>
      %408 = arith.mulf %392, %407 : vector<16x128xf32>
      %409 = vector.broadcast %365 : vector<1x128xf32> to vector<16x128xf32>
      %410 = arith.mulf %408, %409 : vector<16x128xf32>
      %411 = vector.broadcast %366 : vector<1x128xf32> to vector<16x128xf32>
      %412 = arith.addf %410, %411 : vector<16x128xf32>
      %c416 = arith.constant 416 : index
      %c0_224 = arith.constant 0 : index
      %413 = vector.load %arg5[%c416, %c0_224] : memref<552x128xf32, #tpu.memory_space<vmem>>, vector<128x128xf32>
      %cst_225 = arith.constant dense<0.000000e+00> : vector<16x128xf32>
      %414 = tpu.matmul %412, %413, %cst_225 {dimension_numbers = #tpu.dot_dimension_numbers<[1], [0], [0], [1], [0, 0, 1, 1], [], []>} : vector<16x128xf32>, vector<128x128xf32>, vector<16x128xf32> -> vector<16x128xf32>
      %415 = vector.broadcast %367 : vector<1x128xf32> to vector<16x128xf32>
      %416 = arith.addf %414, %415 : vector<16x128xf32>
      %417 = vector.extract_strided_slice %416 {offsets = [0, 0], sizes = [16, 32], strides = [1, 1]} : vector<16x128xf32> to vector<16x32xf32>
      %418 = arith.addf %345, %417 : vector<16x32xf32>
      %c0_226 = arith.constant 0 : index
      %c0_227 = arith.constant 0 : index
      %419 = vector.load %arg6[%c0_226, %c0_227] : memref<16x32xf32, #tpu.memory_space<vmem>>, vector<16x32xf32>
      tpu.vector_store %arg6[%c0_226, %c0_227], %418 {strides = array<i32>} : memref<16x32xf32, #tpu.memory_space<vmem>>, vector<16x32xf32>,
    } else {
    }
    return
  }
  func.func @transform_0(%arg0: i32) -> (i32, i32) {
    %c0_i32 = arith.constant 0 : i32
    %c0_i32_0 = arith.constant 0 : i32
    return %c0_i32, %arg0 : i32, i32
  }
  func.func @transform_1(%arg0: i32) -> (i32, i32) {
    %c0_i32 = arith.constant 0 : i32
    %c0_i32_0 = arith.constant 0 : i32
    return %arg0, %c0_i32 : i32, i32
  }
  func.func @transform_2(%arg0: i32) -> (i32, i32) {
    %c0_i32 = arith.constant 0 : i32
    %c0_i32_0 = arith.constant 0 : i32
    return %arg0, %c0_i32 : i32, i32
  }
  func.func @transform_3(%arg0: i32) -> (i32, i32) {
    %c0_i32 = arith.constant 0 : i32
    %c0_i32_0 = arith.constant 0 : i32
    %c0_i32_1 = arith.constant 0 : i32
    return %c0_i32, %c0_i32_0 : i32, i32
  }
  func.func @transform_4(%arg0: i32) -> (i32, i32) {
    %c0_i32 = arith.constant 0 : i32
    %c0_i32_0 = arith.constant 0 : i32
    %c0_i32_1 = arith.constant 0 : i32
    return %c0_i32, %c0_i32_0 : i32, i32
  }
  func.func @transform_5(%arg0: i32) -> (i32, i32) {
    %c0_i32 = arith.constant 0 : i32
    %c0_i32_0 = arith.constant 0 : i32
    %c0_i32_1 = arith.constant 0 : i32
    return %c0_i32, %c0_i32_0 : i32, i32
  }
}

</mosaic_0001>

<llo_original>
// kernel: tpu_custom_call.1
$region0: #{tpu_custom_call.1}
  #allocation0 [shape = 'u32[]', space=smem, size = 0x4, offset = 0x4, fixed_abs, tag = 'smem constant byte address 0x4 - core index']
  #allocation1 [shape = 'u32[144,128]{1,0:T(1,128)}', space=vmem, size = 0x12000, scoped, tag = 'internal scratch']
  #allocation2 [shape = 'f32[16,64]{1,0:T(8,128)}', space=vmem, size = 0x2000, scoped, tag = 'scratch operand']
  #allocation3 [shape = 'f32[16,1]{1,0:T(8,128)}', space=vmem, size = 0x2000, scoped, tag = 'scratch operand']
  #allocation4 [shape = 'f32[16,32]{1,0:T(8,128)}', space=vmem, size = 0x2000, scoped, tag = 'scratch operand']
  #allocation5 [shape = 'f32[16,32]{1,0:T(8,128)}', space=vmem, size = 0x2000, scoped, tag = 'scratch operand']
  %s0 = inlined_call_operand.vmem [shape: s32[1,256], index: 0, kind: input, shape index: {}]
  %s1 = inlined_call_operand.vmem [shape: s32[256,1], index: 1, kind: input, shape index: {}]
  %s2 = inlined_call_operand.vmem [shape: f32[256,32], index: 2, kind: input, shape index: {}]
  %s3 = inlined_call_operand.hbm [shape: f32[16,32], index: 3, kind: input, shape index: {}, may-alias: {3,5}]
  %s4 = inlined_call_operand.vmem [shape: f32[552,128], index: 4, kind: input, shape index: {}]
  %s5 = inlined_call_operand.hbm [shape: f32[16,32], index: 5, kind: output, shape index: {}, may-alias: {3,5}]
  %s6 = sld [smem:[#allocation0]]
  $region65: #{tpu_custom_call.1} parent=0
    _
  %s8 = ssub.s32 1, %s6
  %s9 = scalar_select 0, %s8, %s6
  $region1: #{tpu_custom_call.1} parent=0
    #allocation6 [shape = 'u8[8192]{0}', space=vmem, size = 0x2000, scoped, tag = 'input window, operand 3, single buffered']
    #allocation7 [shape = 's32[2]{0}', space=sflag, size = 0x8, scoped, tag = 'scoped memory for tpu_custom_call.1']
    #allocation8 [shape = 's32[2]{0}', space=sflag, size = 0x8, scoped, tag = 'scoped memory for tpu_custom_call.1']
    #allocation9 [shape = 'u8[8192]{0}', space=vmem, size = 0x2000, scoped, tag = 'output window, operand 0, single buffered']
    %10 = vsyncpa [#allocation7], 0
    %11 = vsyncpa [#allocation8], 0
    loop: start=0, step=1, limit=4
    $region2: #{tpu_custom_call.1} parent=1 // loop_pre_header
      _
    $region3: #{tpu_custom_call.1} parent=1 // loop_header
      %s13 = sphi 0, %s17
      %p14 = scmp.ge.s32.totalorder %s13, 4
      %s23 = sphi 0, %s25
      %s26 = sphi 0, %s23
      %s27 = sphi 0, %s26
      %s43 = sphi 0, %s27
      %s49 = sphi 0, %s51
      %s52 = sphi 0, %s49
      %s53 = sphi 0, %s52
      %s69 = sphi 0, %s53
      %s75 = sphi 0, %s77
      %s78 = sphi 0, %s75
      %s79 = sphi 0, %s78
      %s95 = sphi 0, %s79
      %s99 = sphi 0, %s99
      %s101 = sphi 0, %s99
      %s102 = sphi 0, %s101
      %s116 = sphi 0, %s102
      %s120 = sphi 0, %s120
      %s122 = sphi 0, %s120
      %s123 = sphi 0, %s122
      %s137 = sphi 0, %s123
      %s141 = sphi 0, %s141
      %s143 = sphi 0, %s141
      %s144 = sphi 0, %s143
      %s158 = sphi 0, %s144
    $region4: #{tpu_custom_call.1} parent=1 // loop_header_branch
      %16 = sbr.rel (%p14) target = $region8
    $region5: #{tpu_custom_call.1} parent=1 // loop_body
      %s18 = ssub.s32 %s13, 1
      %s19 = ssub.s32 %s13, 2
      %s20 = sadd.s32 %s13, 1
      %s21 = ssub.s32 %s13, %s20
      %p22 = scmp.eq.s32.totalorder %s21, 0
      %s24 = sadd.s32 %s23, 1
      %s25 = scalar_select %p22, %s23, %s24
      %p28 = pneg %p22
      %p29 = scmp.eq.s32.totalorder %s13, 1
      %p30 = por %p28, %p29
      %p31 = scmp.ne.s32.totalorder %s23, %s26
      %p32 = scmp.eq.s32.totalorder %s13, 0
      %p33 = por %p31, %p32
      %p34 = scmp.ne.s32.totalorder %s23, %s26
      %p35 = scmp.eq.s32.totalorder %s18, 1
      %p36 = por %p34, %p35
      %p37 = scmp.ne.s32.totalorder %s26, %s27
      %p38 = scmp.eq.s32.totalorder %s18, 0
      %p39 = por %p37, %p38
      %p40 = scmp.ne.s32.totalorder %s26, %s27
      %p41 = scmp.eq.s32.totalorder %s19, 1
      %p42 = por %p40, %p41
      %p44 = scmp.ne.s32.totalorder %s27, %s43
      %p45 = scmp.eq.s32.totalorder %s19, 0
      %p46 = por %p44, %p45
      %s47 = ssub.s32 %s13, %s20
      %p48 = scmp.eq.s32.totalorder %s47, 0
      %s50 = sadd.s32 %s49, 1
      %s51 = scalar_select %p48, %s49, %s50
      %p54 = pneg %p48
      %p55 = scmp.eq.s32.totalorder %s13, 1
      %p56 = por %p54, %p55
      %p57 = scmp.ne.s32.totalorder %s49, %s52
      %p58 = scmp.eq.s32.totalorder %s13, 0
      %p59 = por %p57, %p58
      %p60 = scmp.ne.s32.totalorder %s49, %s52
      %p61 = scmp.eq.s32.totalorder %s18, 1
      %p62 = por %p60, %p61
      %p63 = scmp.ne.s32.totalorder %s52, %s53
      %p64 = scmp.eq.s32.totalorder %s18, 0
      %p65 = por %p63, %p64
      %p66 = scmp.ne.s32.totalorder %s52, %s53
      %p67 = scmp.eq.s32.totalorder %s19, 1
      %p68 = por %p66, %p67
      %p70 = scmp.ne.s32.totalorder %s53, %s69
      %p71 = scmp.eq.s32.totalorder %s19, 0
      %p72 = por %p70, %p71
      %s73 = ssub.s32 %s13, %s20
      %p74 = scmp.eq.s32.totalorder %s73, 0
      %s76 = sadd.s32 %s75, 1
      %s77 = scalar_select %p74, %s75, %s76
      %p80 = pneg %p74
      %p81 = scmp.eq.s32.totalorder %s13, 1
      %p82 = por %p80, %p81
      %p83 = scmp.ne.s32.totalorder %s75, %s78
      %p84 = scmp.eq.s32.totalorder %s13, 0
      %p85 = por %p83, %p84
      %p86 = scmp.ne.s32.totalorder %s75, %s78
      %p87 = scmp.eq.s32.totalorder %s18, 1
      %p88 = por %p86, %p87
      %p89 = scmp.ne.s32.totalorder %s78, %s79
      %p90 = scmp.eq.s32.totalorder %s18, 0
      %p91 = por %p89, %p90
      %p92 = scmp.ne.s32.totalorder %s78, %s79
      %p93 = scmp.eq.s32.totalorder %s19, 1
      %p94 = por %p92, %p93
      %p96 = scmp.ne.s32.totalorder %s79, %s95
      %p97 = scmp.eq.s32.totalorder %s19, 0
      %p98 = por %p96, %p97
      %s100 = sadd.s32 %s99, 1
      %p103 = scmp.eq.s32.totalorder %s13, 1
      %p104 = scmp.ne.s32.totalorder %s99, %s101
      %p105 = scmp.eq.s32.totalorder %s13, 0
      %p106 = por %p104, %p105
      %p107 = scmp.ne.s32.totalorder %s99, %s101
      %p108 = scmp.eq.s32.totalorder %s18, 1
      %p109 = por %p107, %p108
      %p110 = scmp.ne.s32.totalorder %s101, %s102
      %p111 = scmp.eq.s32.totalorder %s18, 0
      %p112 = por %p110, %p111
      %p113 = scmp.ne.s32.totalorder %s101, %s102
      %p114 = scmp.eq.s32.totalorder %s19, 1
      %p115 = por %p113, %p114
      %p117 = scmp.ne.s32.totalorder %s102, %s116
      %p118 = scmp.eq.s32.totalorder %s19, 0
      %p119 = por %p117, %p118
      %s121 = sadd.s32 %s120, 1
      %p124 = scmp.eq.s32.totalorder %s13, 1
      %p125 = scmp.ne.s32.totalorder %s120, %s122
      %p126 = scmp.eq.s32.totalorder %s13, 0
      %p127 = por %p125, %p126
      %p128 = scmp.ne.s32.totalorder %s120, %s122
      %p129 = scmp.eq.s32.totalorder %s18, 1
      %p130 = por %p128, %p129
      %p131 = scmp.ne.s32.totalorder %s122, %s123
      %p132 = scmp.eq.s32.totalorder %s18, 0
      %p133 = por %p131, %p132
      %p134 = scmp.ne.s32.totalorder %s122, %s123
      %p135 = scmp.eq.s32.totalorder %s19, 1
      %p136 = por %p134, %p135
      %p138 = scmp.ne.s32.totalorder %s123, %s137
      %p139 = scmp.eq.s32.totalorder %s19, 0
      %p140 = por %p138, %p139
      %s142 = sadd.s32 %s141, 1
      %p145 = scmp.eq.s32.totalorder %s13, 1
      %p146 = scmp.ne.s32.totalorder %s141, %s143
      %p147 = scmp.eq.s32.totalorder %s13, 0
      %p148 = por %p146, %p147
      %p149 = scmp.ne.s32.totalorder %s141, %s143
      %p150 = scmp.eq.s32.totalorder %s18, 1
      %p151 = por %p149, %p150
      %p152 = scmp.ne.s32.totalorder %s143, %s144
      %p153 = scmp.eq.s32.totalorder %s18, 0
      %p154 = por %p152, %p153
      %p155 = scmp.ne.s32.totalorder %s143, %s144
      %p156 = scmp.eq.s32.totalorder %s19, 1
      %p157 = por %p155, %p156
      %p159 = scmp.ne.s32.totalorder %s144, %s158
      %p160 = scmp.eq.s32.totalorder %s19, 0
      %p161 = por %p159, %p160
      %p162 = scmp.le.s32.totalorder 1, %s13
      %p163 = scmp.lt.s32.totalorder %s13, 3
      %p164 = pnand %p162, %p163
      %p165 = pneg %p164
      // Predicated region
      $region9: #{tpu_custom_call.1} parent=5 // pred_check
        _
      $region10: #{tpu_custom_call.1} parent=5 // pred_check_branch
        %167 = sbr.rel (%p164) target = $region12
      $region11: #{tpu_custom_call.1} parent=5 // pred_region
        %s168 = ssub.s32 %s13, 1
        // Predicated region
        $region13: #{tpu_custom_call.1} parent=11 // pred_check
          %p169 = pneg %p112
        $region14: #{tpu_custom_call.1} parent=11 // pred_check_branch
          %171 = sbr.rel (%p169) target = $region16
        $region15: #{tpu_custom_call.1} parent=11 // pred_region
          %s173 = ssub.s32 256, 256
          %174 = vsyncadd [#allocation7], %s173
          %s175 = sshll.u32 [#allocation6], 4
          %s176 = int_to_ptr.vmem [resolvable:$true] %s175
          %181 = dma.hbm_to_vmem [thread:$0]  %s3, 256, %s176, [#allocation7], 128, 128, 8
        $region16: #{tpu_custom_call.1} parent=11 // pred_fallthru
          _
        // Predicated region
        $region17: #{tpu_custom_call.1} parent=11 // pred_check
          %p182 = pneg %p133
        $region18: #{tpu_custom_call.1} parent=11 // pred_check_branch
          %184 = sbr.rel (%p182) target = $region20
        $region19: #{tpu_custom_call.1} parent=11 // pred_region
          _
        $region20: #{tpu_custom_call.1} parent=11 // pred_fallthru
          _
      $region12: #{tpu_custom_call.1} parent=5 // pred_fallthru
        _
      %p185 = scmp.lt.s32.totalorder %s13, 2
      // Predicated region
      $region21: #{tpu_custom_call.1} parent=5 // pred_check
        %p186 = pneg %p185
      $region22: #{tpu_custom_call.1} parent=5 // pred_check_branch
        %188 = sbr.rel (%p186) target = $region24
      $region23: #{tpu_custom_call.1} parent=5 // pred_region
        // Predicated region
        $region25: #{tpu_custom_call.1} parent=23 // pred_check
          %p189 = pneg %p33
        $region26: #{tpu_custom_call.1} parent=23 // pred_check_branch
          %191 = sbr.rel (%p189) target = $region28
        $region27: #{tpu_custom_call.1} parent=23 // pred_region
          %p192 = scmp.lt.s32.totalorder %s13, 1
          %s193 = scalar_select %p192, %s13, 1
          %s194 = scalar_lea.vmem %s0, %s193
        $region28: #{tpu_custom_call.1} parent=23 // pred_fallthru
          _
        // Predicated region
        $region29: #{tpu_custom_call.1} parent=23 // pred_check
          %p195 = pneg %p59
        $region30: #{tpu_custom_call.1} parent=23 // pred_check_branch
          %197 = sbr.rel (%p195) target = $region32
        $region31: #{tpu_custom_call.1} parent=23 // pred_region
          %s198 = smul.u32 16, %s13
          %p199 = scmp.lt.s32.totalorder %s198, 31
          %s200 = scalar_select %p199, %s198, 31
          %s201 = smul.addr %s200, 8
          %s202 = scalar_lea.vmem %s1, %s201
          %s203 = smul.u32 16, %s13
        $region32: #{tpu_custom_call.1} parent=23 // pred_fallthru
          _
        // Predicated region
        $region33: #{tpu_custom_call.1} parent=23 // pred_check
          %p204 = pneg %p85
        $region34: #{tpu_custom_call.1} parent=23 // pred_check_branch
          %206 = sbr.rel (%p204) target = $region36
        $region35: #{tpu_custom_call.1} parent=23 // pred_region
          %s207 = smul.u32 16, %s13
          %p208 = scmp.lt.s32.totalorder %s207, 31
          %s209 = scalar_select %p208, %s207, 31
          %s210 = smul.addr %s209, 8
          %s211 = scalar_lea.vmem %s2, %s210
          %s212 = smul.u32 16, %s13
        $region36: #{tpu_custom_call.1} parent=23 // pred_fallthru
          _
      $region24: #{tpu_custom_call.1} parent=5 // pred_fallthru
        _
      %p213 = scmp.le.s32.totalorder 1, %s13
      %p214 = scmp.lt.s32.totalorder %s13, 3
      %p215 = pnand %p213, %p214
      %p216 = pneg %p215
      // Predicated region
      $region37: #{tpu_custom_call.1} parent=5 // pred_check
        _
      $region38: #{tpu_custom_call.1} parent=5 // pred_check_branch
        %218 = sbr.rel (%p215) target = $region40
      $region39: #{tpu_custom_call.1} parent=5 // pred_region
        %s219 = ssub.s32 %s13, 1
        // Predicated region
        $region41: #{tpu_custom_call.1} parent=39 // pred_check
          %p220 = pneg %p112
        $region42: #{tpu_custom_call.1} parent=39 // pred_check_branch
          %222 = sbr.rel (%p220) target = $region44
        $region43: #{tpu_custom_call.1} parent=39 // pred_region
          %223 = dma.done [#allocation7], 256
        $region44: #{tpu_custom_call.1} parent=39 // pred_fallthru
          _
        %p224 = scmp.lt.s32.totalorder %s18, 1
        %s225 = scalar_select %p224, %s18, 1
        %s226 = scalar_lea.vmem %s0, %s225
        %p227 = pneg %p39
        %p228 = pneg %p36
        %s229 = smul.u32 16, %s18
        %p230 = scmp.lt.s32.totalorder %s229, 31
        %s231 = scalar_select %p230, %s229, 31
        %s232 = smul.addr %s231, 8
        %s233 = scalar_lea.vmem %s1, %s232
        %p234 = pneg %p65
        %p235 = pneg %p62
        %s236 = smul.u32 16, %s18
        %p237 = scmp.lt.s32.totalorder %s236, 31
        %s238 = scalar_select %p237, %s236, 31
        %s239 = smul.addr %s238, 8
        %s240 = scalar_lea.vmem %s2, %s239
        %p241 = pneg %p91
        %p242 = pneg %p88
        %p243 = pneg %p112
        %p244 = pneg %p109
        %p245 = pneg %p133
        %p246 = pneg %p130
        %p247 = pneg %p154
        %p248 = pneg %p151
        %p249 = scmp.lt.s32.totalorder %s18, 1
        %s250 = scalar_select %p249, %s18, 1
        %s251 = scalar_lea.vmem %s0, %s250
        %s252 = smul.u32 16, %s18
        %p253 = scmp.lt.s32.totalorder %s252, 31
        %s254 = scalar_select %p253, %s252, 31
        %s255 = smul.addr %s254, 8
        %s256 = scalar_lea.vmem %s1, %s255
        %s257 = smul.u32 16, %s18
        %s258 = smul.u32 16, %s18
        %p259 = scmp.lt.s32.totalorder %s258, 31
        %s260 = scalar_select %p259, %s258, 31
        %s261 = smul.addr %s260, 8
        %s262 = scalar_lea.vmem %s2, %s261
        %s263 = smul.u32 16, %s18
        %p264 = scmp.eq.s32.totalorder %s18, 0
        // Predicated region
        $region45: #{tpu_custom_call.1} parent=39 // pred_check
          %p265 = pneg %p264
        $region46: #{tpu_custom_call.1} parent=39 // pred_check_branch
          %267 = sbr.rel (%p265) target = $region48
        $region47: #{tpu_custom_call.1} parent=39 // pred_region
          %vm268 = vcmask 523264
          %269 = vst.msk [vmem:[#allocation2] sm:$0xff] %vm268, 0.0
          %270 = vst.msk [vmem:[#allocation2 + $0x8] sm:$0xff] %vm268, 0.0
          %vm271 = vcmask 7168
          %272 = vst.msk [vmem:[#allocation3] sm:$0xff] %vm271, 0.0
          %273 = vst.msk [vmem:[#allocation3 + $0x8] sm:$0xff] %vm271, 0.0
          %vm274 = vcmask 261120
          %275 = vst.msk [vmem:[#allocation4] sm:$0xff] %vm274, inf
          %276 = vst.msk [vmem:[#allocation4 + $0x8] sm:$0xff] %vm274, inf
          %277 = vst.msk [vmem:[#allocation5] sm:$0xff] %vm274, -inf
          %278 = vst.msk [vmem:[#allocation5 + $0x8] sm:$0xff] %vm274, -inf
        $region48: #{tpu_custom_call.1} parent=39 // pred_fallthru
          _
        %v279 = vld [vmem:[%s262] sm:$0xff]
        %v280 = vld [vmem:[%s262 + $0x8] sm:$0xff]
        %v281 = vld [vmem:[%s262 + $0x10] sm:$0xff]
        %v282 = vld [vmem:[%s262 + $0x18] sm:$0xff]
        %v283 = vld [vmem:[%s262 + $0x20] sm:$0xff]
        %v284 = vld [vmem:[%s262 + $0x28] sm:$0xff]
        %v285 = vld [vmem:[%s262 + $0x30] sm:$0xff]
        %v286 = vld [vmem:[%s262 + $0x38] sm:$0xff]
        %v287 = vld [vmem:[%s262 + $0x40] sm:$0xff]
        %v288 = vld [vmem:[%s262 + $0x48] sm:$0xff]
        %v289 = vld [vmem:[%s262 + $0x50] sm:$0xff]
        %v290 = vld [vmem:[%s262 + $0x58] sm:$0xff]
        %v291 = vld [vmem:[%s262 + $0x60] sm:$0xff]
        %v292 = vld [vmem:[%s262 + $0x68] sm:$0xff]
        %v293 = vld [vmem:[%s262 + $0x70] sm:$0xff]
        %v294 = vld [vmem:[%s262 + $0x78] sm:$0xff]
        %v295 = vld [vmem:[%s251] sm:$0x1]
        %v296 = vld [vmem:[%s256] sm:$0xff]
        %v297 = vld [vmem:[%s256 + $0x8] sm:$0xff]
        %v298 = vld [vmem:[%s256 + $0x10] sm:$0xff]
        %v299 = vld [vmem:[%s256 + $0x18] sm:$0xff]
        %v300 = vld [vmem:[%s256 + $0x20] sm:$0xff]
        %v301 = vld [vmem:[%s256 + $0x28] sm:$0xff]
        %v302 = vld [vmem:[%s256 + $0x30] sm:$0xff]
        %v303 = vld [vmem:[%s256 + $0x38] sm:$0xff]
        %v304 = vld [vmem:[%s256 + $0x40] sm:$0xff]
        %v305 = vld [vmem:[%s256 + $0x48] sm:$0xff]
        %v306 = vld [vmem:[%s256 + $0x50] sm:$0xff]
        %v307 = vld [vmem:[%s256 + $0x58] sm:$0xff]
        %v308 = vld [vmem:[%s256 + $0x60] sm:$0xff]
        %v309 = vld [vmem:[%s256 + $0x68] sm:$0xff]
        %v310 = vld [vmem:[%s256 + $0x70] sm:$0xff]
        %v311 = vld [vmem:[%s256 + $0x78] sm:$0xff]
        %v312 = vlaneseq
        %v313 = vshrl.u32 %v312, 7
        %v314 = vadd.s32 %v313, 8
        %v315 = vlaneseq
        %v316 = vshrl.u32 %v315, 7
        %v317 = vsub.s32 0, %v316
        %v318 = vrot.slane %v295, %v317
        %vm319 = vcmp.eq.s32.totalorder %v313, %v318
        %vm320 = vcmp.eq.s32.totalorder %v314, %v318
        %v321 = vsel %vm319, 1, 0
        %v322 = vsel %vm320, 1, 0
        %v323 = vcvt.s32.f32 %v321
        %v324 = vcvt.s32.f32 %v322
        %v325 = vmul.f32 %v279, %v279
        %v326 = vmul.f32 %v280, %v280
        %v327 = vmul.f32 %v281, %v281
        %v328 = vmul.f32 %v282, %v282
        %v329 = vmul.f32 %v283, %v283
        %v330 = vmul.f32 %v284, %v284
        %v331 = vmul.f32 %v285, %v285
        %v332 = vmul.f32 %v286, %v286
        %v333 = vmul.f32 %v287, %v287
        %v334 = vmul.f32 %v288, %v288
        %v335 = vmul.f32 %v289, %v289
        %v336 = vmul.f32 %v290, %v290
        %v337 = vmul.f32 %v291, %v291
        %v338 = vmul.f32 %v292, %v292
        %v339 = vmul.f32 %v293, %v293
        %v340 = vmul.f32 %v294, %v294
        %357 = vrot.lane.b32.xlu0 %v325, 32
        %v358 = vpop.permute.xlu0 %357
        %359 = vrot.lane.b32.xlu0 %v326, 32
        %v360 = vpop.permute.xlu0 %359
        %361 = vrot.lane.b32.xlu0 %v327, 32
        %v362 = vpop.permute.xlu0 %361
        %363 = vrot.lane.b32.xlu0 %v328, 32
        %v364 = vpop.permute.xlu0 %363
        %365 = vrot.lane.b32.xlu0 %v329, 32
        %v366 = vpop.permute.xlu0 %365
        %367 = vrot.lane.b32.xlu0 %v330, 32
        %v368 = vpop.permute.xlu0 %367
        %369 = vrot.lane.b32.xlu0 %v331, 32
        %v370 = vpop.permute.xlu0 %369
        %371 = vrot.lane.b32.xlu0 %v332, 32
        %v372 = vpop.permute.xlu0 %371
        %373 = vrot.lane.b32.xlu0 %v333, 32
        %v374 = vpop.permute.xlu0 %373
        %375 = vrot.lane.b32.xlu0 %v334, 32
        %v376 = vpop.permute.xlu0 %375
        %377 = vrot.lane.b32.xlu0 %v335, 32
        %v378 = vpop.permute.xlu0 %377
        %379 = vrot.lane.b32.xlu0 %v336, 32
        %v380 = vpop.permute.xlu0 %379
        %381 = vrot.lane.b32.xlu0 %v337, 32
        %v382 = vpop.permute.xlu0 %381
        %383 = vrot.lane.b32.xlu0 %v338, 32
        %v384 = vpop.permute.xlu0 %383
        %385 = vrot.lane.b32.xlu0 %v339, 32
        %v386 = vpop.permute.xlu0 %385
        %387 = vrot.lane.b32.xlu0 %v340, 32
        %v388 = vpop.permute.xlu0 %387
        %vm405 = vcmask 261120
        %v406 = vsel %vm405, %v279, %v358
        %v407 = vsel %vm405, %v280, %v360
        %v408 = vsel %vm405, %v281, %v362
        %v409 = vsel %vm405, %v282, %v364
        %v410 = vsel %vm405, %v283, %v366
        %v411 = vsel %vm405, %v284, %v368
        %v412 = vsel %vm405, %v285, %v370
        %v413 = vsel %vm405, %v286, %v372
        %v414 = vsel %vm405, %v287, %v374
        %v415 = vsel %vm405, %v288, %v376
        %v416 = vsel %vm405, %v289, %v378
        %v417 = vsel %vm405, %v290, %v380
        %v418 = vsel %vm405, %v291, %v382
        %v419 = vsel %vm405, %v292, %v384
        %v420 = vsel %vm405, %v293, %v386
        %v421 = vsel %vm405, %v294, %v388
        %v422 = vld [vmem:[#allocation2] sm:$0xff]
        %v423 = vld [vmem:[#allocation2 + $0x8] sm:$0xff]
        %424 = vmatprep.subr.mxu0 0.0
        %425 = vmatpush1.msra.mxu0 %v406
        %426 = vmatprep.subr.mxu0 0.0
        %427 = vmatpush1.msra.mxu0 %v407
        %428 = vmatprep.subr.mxu0 0.0
        %429 = vmatpush1.msra.mxu0 %v408
        %430 = vmatprep.subr.mxu0 0.0
        %431 = vmatpush1.msra.mxu0 %v409
        %432 = vmatprep.subr.mxu0 0.0
        %433 = vmatpush1.msra.mxu0 %v410
        %434 = vmatprep.subr.mxu0 0.0
        %435 = vmatpush1.msra.mxu0 %v411
        %436 = vmatprep.subr.mxu0 0.0
        %437 = vmatpush1.msra.mxu0 %v412
        %438 = vmatprep.subr.mxu0 0.0
        %439 = vmatpush1.msra.mxu0 %v413
        %440 = vmatprep.subr.mxu0 0.0
        %441 = vmatpush1.msra.mxu0 %v414
        %442 = vmatprep.subr.mxu0 0.0
        %443 = vmatpush1.msra.mxu0 %v415
        %444 = vmatprep.subr.mxu0 0.0
        %445 = vmatpush1.msra.mxu0 %v416
        %446 = vmatprep.subr.mxu0 0.0
        %447 = vmatpush1.msra.mxu0 %v417
        %448 = vmatprep.subr.mxu0 0.0
        %449 = vmatpush1.msra.mxu0 %v418
        %450 = vmatprep.subr.mxu0 0.0
        %451 = vmatpush1.msra.mxu0 %v419
        %452 = vmatprep.subr.mxu0 0.0
        %453 = vmatpush1.msra.mxu0 %v420
        %454 = vmatprep.subr.mxu0 0.0
        %455 = vmatpush1.msra.mxu0 %v421
        %456 = vmatprep.subr.mxu0 0.0
        %457 = vmatpush1.msra.mxu0 0.0
        %458 = vmatprep.subr.mxu0 0.0
        %459 = vmatpush1.msra.mxu0 0.0
        %460 = vmatprep.subr.mxu0 0.0
        %461 = vmatpush1.msra.mxu0 0.0
        %462 = vmatprep.subr.mxu0 0.0
        %463 = vmatpush1.msra.mxu0 0.0
        %464 = vmatprep.subr.mxu0 0.0
        %465 = vmatpush1.msra.mxu0 0.0
        %466 = vmatprep.subr.mxu0 0.0
        %467 = vmatpush1.msra.mxu0 0.0
        %468 = vmatprep.subr.mxu0 0.0
        %469 = vmatpush1.msra.mxu0 0.0
        %470 = vmatprep.subr.mxu0 0.0
        %471 = vmatpush1.msra.mxu0 0.0
        %472 = vmatprep.subr.mxu0 0.0
        %473 = vmatpush1.msra.mxu0 0.0
        %474 = vmatprep.subr.mxu0 0.0
        %475 = vmatpush1.msra.mxu0 0.0
        %476 = vmatprep.subr.mxu0 0.0
        %477 = vmatpush1.msra.mxu0 0.0
        %478 = vmatprep.subr.mxu0 0.0
        %479 = vmatpush1.msra.mxu0 0.0
        %480 = vmatprep.subr.mxu0 0.0
        %481 = vmatpush1.msra.mxu0 0.0
        %482 = vmatprep.subr.mxu0 0.0
        %483 = vmatpush1.msra.mxu0 0.0
        %484 = vmatprep.subr.mxu0 0.0
        %485 = vmatpush1.msra.mxu0 0.0
        %486 = vmatprep.subr.mxu0 0.0
        %487 = vmatpush1.msra.mxu0 0.0
        %488 = vmatprep.mubr.f32.mxu0 0.0
        %489 = vmatmul.mubr.f32.gmra.mrb[0].mxu0 %v323
        %v490 = vpop.f32.mrb[0].mxu0
        %v491 = vadd.f32 0.0, %v490
        %v492 = vpop.f32.mrb[0].mxu0
        %493 = vmatprep.mubr.f32.mxu0 0.0
        %494 = vmatmul.mubr.f32.gmra.mrb[0].mxu0 %v324
        %v495 = vpop.f32.mrb[0].mxu0
        %v496 = vadd.f32 0.0, %v495
        %v497 = vpop.f32.mrb[0].mxu0
        %498 = vdwg.mxu0
        %v499 = vadd.f32 %v422, %v491
        %v500 = vadd.f32 %v423, %v496
        %vm501 = vcmask 523264
        %502 = vst.msk [vmem:[#allocation2] sm:$0xff] %vm501, %v499
        %503 = vst.msk [vmem:[#allocation2 + $0x8] sm:$0xff] %vm501, %v500
        %v504 = vld [vmem:[#allocation3] sm:$0xff]
        %v505 = vld [vmem:[#allocation3 + $0x8] sm:$0xff]
        %506 = vadd.xlane.f32.xlu0 %v323
        %v507 = vpop.xlane.xlu0 %506
        %508 = vadd.xlane.f32.xlu0 %v324
        %v509 = vpop.xlane.xlu0 %508
        %v510 = vadd.f32 %v504, %v507
        %v511 = vadd.f32 %v505, %v509
        %vm512 = vcmask 7168
        %513 = vst.msk [vmem:[#allocation3] sm:$0xff] %vm512, %v510
        %514 = vst.msk [vmem:[#allocation3 + $0x8] sm:$0xff] %vm512, %v511
        %vm515 = vcmp.eq.s32.totalorder %v296, 0
        %vm516 = vcmp.eq.s32.totalorder %v297, 0
        %vm517 = vcmp.eq.s32.totalorder %v298, 0
        %vm518 = vcmp.eq.s32.totalorder %v299, 0
        %vm519 = vcmp.eq.s32.totalorder %v300, 0
        %vm520 = vcmp.eq.s32.totalorder %v301, 0
        %vm521 = vcmp.eq.s32.totalorder %v302, 0
        %vm522 = vcmp.eq.s32.totalorder %v303, 0
        %vm523 = vcmp.eq.s32.totalorder %v304, 0
        %vm524 = vcmp.eq.s32.totalorder %v305, 0
        %vm525 = vcmp.eq.s32.totalorder %v306, 0
        %vm526 = vcmp.eq.s32.totalorder %v307, 0
        %vm527 = vcmp.eq.s32.totalorder %v308, 0
        %vm528 = vcmp.eq.s32.totalorder %v309, 0
        %vm529 = vcmp.eq.s32.totalorder %v310, 0
        %vm530 = vcmp.eq.s32.totalorder %v311, 0
        %v531 = vld [vmem:[#allocation4] sm:$0x1]
        %v532 = vsel %vm515, 1, 0
        %v533 = vsel %vm516, 1, 0
        %v534 = vsel %vm517, 1, 0
        %v535 = vsel %vm518, 1, 0
        %v536 = vsel %vm519, 1, 0
        %v537 = vsel %vm520, 1, 0
        %v538 = vsel %vm521, 1, 0
        %v539 = vsel %vm522, 1, 0
        %v540 = vsel %vm523, 1, 0
        %v541 = vsel %vm524, 1, 0
        %v542 = vsel %vm525, 1, 0
        %v543 = vsel %vm526, 1, 0
        %v544 = vsel %vm527, 1, 0
        %v545 = vsel %vm528, 1, 0
        %v546 = vsel %vm529, 1, 0
        %v547 = vsel %vm530, 1, 0
        %548 = vset.pattern.permute.xlu0 0
        %549 = vperm.xlu0 %548, %v532
        %v550 = vpop.permute.xlu0 %549
        %551 = vset.pattern.permute.xlu0 0
        %552 = vperm.xlu0 %551, %v533
        %v553 = vpop.permute.xlu0 %552
        %554 = vset.pattern.permute.xlu0 0
        %555 = vperm.xlu0 %554, %v534
        %v556 = vpop.permute.xlu0 %555
        %557 = vset.pattern.permute.xlu0 0
        %558 = vperm.xlu0 %557, %v535
        %v559 = vpop.permute.xlu0 %558
        %560 = vset.pattern.permute.xlu0 0
        %561 = vperm.xlu0 %560, %v536
        %v562 = vpop.permute.xlu0 %561
        %563 = vset.pattern.permute.xlu0 0
        %564 = vperm.xlu0 %563, %v537
        %v565 = vpop.permute.xlu0 %564
        %566 = vset.pattern.permute.xlu0 0
        %567 = vperm.xlu0 %566, %v538
        %v568 = vpop.permute.xlu0 %567
        %569 = vset.pattern.permute.xlu0 0
        %570 = vperm.xlu0 %569, %v539
        %v571 = vpop.permute.xlu0 %570
        %572 = vset.pattern.permute.xlu0 0
        %573 = vperm.xlu0 %572, %v540
        %v574 = vpop.permute.xlu0 %573
        %575 = vset.pattern.permute.xlu0 0
        %576 = vperm.xlu0 %575, %v541
        %v577 = vpop.permute.xlu0 %576
        %578 = vset.pattern.permute.xlu0 0
        %579 = vperm.xlu0 %578, %v542
        %v580 = vpop.permute.xlu0 %579
        %581 = vset.pattern.permute.xlu0 0
        %582 = vperm.xlu0 %581, %v543
        %v583 = vpop.permute.xlu0 %582
        %584 = vset.pattern.permute.xlu0 0
        %585 = vperm.xlu0 %584, %v544
        %v586 = vpop.permute.xlu0 %585
        %587 = vset.pattern.permute.xlu0 0
        %588 = vperm.xlu0 %587, %v545
        %v589 = vpop.permute.xlu0 %588
        %590 = vset.pattern.permute.xlu0 0
        %591 = vperm.xlu0 %590, %v546
        %v592 = vpop.permute.xlu0 %591
        %593 = vset.pattern.permute.xlu0 0
        %594 = vperm.xlu0 %593, %v547
        %v595 = vpop.permute.xlu0 %594
        %vm596 = vcmp.eq.s32.totalorder %v550, 1
        %vm597 = vcmp.eq.s32.totalorder %v553, 1
        %vm598 = vcmp.eq.s32.totalorder %v556, 1
        %vm599 = vcmp.eq.s32.totalorder %v559, 1
        %vm600 = vcmp.eq.s32.totalorder %v562, 1
        %vm601 = vcmp.eq.s32.totalorder %v565, 1
        %vm602 = vcmp.eq.s32.totalorder %v568, 1
        %vm603 = vcmp.eq.s32.totalorder %v571, 1
        %vm604 = vcmp.eq.s32.totalorder %v574, 1
        %vm605 = vcmp.eq.s32.totalorder %v577, 1
        %vm606 = vcmp.eq.s32.totalorder %v580, 1
        %vm607 = vcmp.eq.s32.totalorder %v583, 1
        %vm608 = vcmp.eq.s32.totalorder %v586, 1
        %vm609 = vcmp.eq.s32.totalorder %v589, 1
        %vm610 = vcmp.eq.s32.totalorder %v592, 1
        %vm611 = vcmp.eq.s32.totalorder %v595, 1
        %v612 = vsel %vm596, %v279, inf
        %v613 = vsel %vm597, %v280, inf
        %v614 = vsel %vm598, %v281, inf
        %v615 = vsel %vm599, %v282, inf
        %v616 = vsel %vm600, %v283, inf
        %v617 = vsel %vm601, %v284, inf
        %v618 = vsel %vm602, %v285, inf
        %v619 = vsel %vm603, %v286, inf
        %v620 = vsel %vm604, %v287, inf
        %v621 = vsel %vm605, %v288, inf
        %v622 = vsel %vm606, %v289, inf
        %v623 = vsel %vm607, %v290, inf
        %v624 = vsel %vm608, %v291, inf
        %v625 = vsel %vm609, %v292, inf
        %v626 = vsel %vm610, %v293, inf
        %v627 = vsel %vm611, %v294, inf
        %v628 = vsel %vm405, %v612, inf
        %v629 = vsel %vm405, %v613, inf
        %v630 = vsel %vm405, %v614, inf
        %v631 = vsel %vm405, %v615, inf
        %v632 = vsel %vm405, %v616, inf
        %v633 = vmin.f32 %v628, %v632
        %v634 = vsel %vm405, %v617, inf
        %v635 = vmin.f32 %v629, %v634
        %v636 = vsel %vm405, %v618, inf
        %v637 = vmin.f32 %v630, %v636
        %v638 = vsel %vm405, %v619, inf
        %v639 = vmin.f32 %v631, %v638
        %v640 = vsel %vm405, %v620, inf
        %v641 = vmin.f32 %v633, %v640
        %v642 = vsel %vm405, %v621, inf
        %v643 = vmin.f32 %v635, %v642
        %v644 = vsel %vm405, %v622, inf
        %v645 = vmin.f32 %v637, %v644
        %v646 = vsel %vm405, %v623, inf
        %v647 = vmin.f32 %v639, %v646
        %v648 = vsel %vm405, %v624, inf
        %v649 = vmin.f32 %v641, %v648
        %v650 = vsel %vm405, %v625, inf
        %v651 = vmin.f32 %v643, %v650
        %v652 = vsel %vm405, %v626, inf
        %v653 = vmin.f32 %v645, %v652
        %v654 = vsel %vm405, %v627, inf
        %v655 = vmin.f32 %v647, %v654
        %v656 = vmin.f32 %v649, %v651
        %v657 = vmin.f32 %v653, %v655
        %v658 = vmin.f32 %v656, %v657
        %v659 = vrot.slane %v658, 4
        %v660 = vmin.f32 %v658, %v659
        %v661 = vrot.slane %v660, 2
        %v662 = vmin.f32 %v660, %v661
        %v663 = vrot.slane %v662, 1
        %v664 = vmin.f32 %v662, %v663
        %v665 = vmin.f32 %v531, %v664
        %vm666 = vcmask 253952
        %667 = vst.msk [vmem:[#allocation4] sm:$0x1] %vm666, %v665
        %v668 = vld [vmem:[#allocation5] sm:$0x1]
        %v669 = vsel %vm596, %v279, -inf
        %v670 = vsel %vm597, %v280, -inf
        %v671 = vsel %vm598, %v281, -inf
        %v672 = vsel %vm599, %v282, -inf
        %v673 = vsel %vm600, %v283, -inf
        %v674 = vsel %vm601, %v284, -inf
        %v675 = vsel %vm602, %v285, -inf
        %v676 = vsel %vm603, %v286, -inf
        %v677 = vsel %vm604, %v287, -inf
        %v678 = vsel %vm605, %v288, -inf
        %v679 = vsel %vm606, %v289, -inf
        %v680 = vsel %vm607, %v290, -inf
        %v681 = vsel %vm608, %v291, -inf
        %v682 = vsel %vm609, %v292, -inf
        %v683 = vsel %vm610, %v293, -inf
        %v684 = vsel %vm611, %v294, -inf
        %v685 = vsel %vm405, %v669, -inf
        %v686 = vsel %vm405, %v670, -inf
        %v687 = vsel %vm405, %v671, -inf
        %v688 = vsel %vm405, %v672, -inf
        %v689 = vsel %vm405, %v673, -inf
        %v690 = vmax.f32 %v685, %v689
        %v691 = vsel %vm405, %v674, -inf
        %v692 = vmax.f32 %v686, %v691
        %v693 = vsel %vm405, %v675, -inf
        %v694 = vmax.f32 %v687, %v693
        %v695 = vsel %vm405, %v676, -inf
        %v696 = vmax.f32 %v688, %v695
        %v697 = vsel %vm405, %v677, -inf
        %v698 = vmax.f32 %v690, %v697
        %v699 = vsel %vm405, %v678, -inf
        %v700 = vmax.f32 %v692, %v699
        %v701 = vsel %vm405, %v679, -inf
        %v702 = vmax.f32 %v694, %v701
        %v703 = vsel %vm405, %v680, -inf
        %v704 = vmax.f32 %v696, %v703
        %v705 = vsel %vm405, %v681, -inf
        %v706 = vmax.f32 %v698, %v705
        %v707 = vsel %vm405, %v682, -inf
        %v708 = vmax.f32 %v700, %v707
        %v709 = vsel %vm405, %v683, -inf
        %v710 = vmax.f32 %v702, %v709
        %v711 = vsel %vm405, %v684, -inf
        %v712 = vmax.f32 %v704, %v711
        %v713 = vmax.f32 %v706, %v708
        %v714 = vmax.f32 %v710, %v712
        %v715 = vmax.f32 %v713, %v714
        %v716 = vrot.slane %v715, 4
        %v717 = vmax.f32 %v715, %v716
        %v718 = vrot.slane %v717, 2
        %v719 = vmax.f32 %v717, %v718
        %v720 = vrot.slane %v719, 1
        %v721 = vmax.f32 %v719, %v720
        %v722 = vmax.f32 %v668, %v721
        %723 = vst.msk [vmem:[#allocation5] sm:$0x1] %vm666, %v722
        %vm724 = vcmp.eq.s32.totalorder %v296, 1
        %vm725 = vcmp.eq.s32.totalorder %v297, 1
        %vm726 = vcmp.eq.s32.totalorder %v298, 1
        %vm727 = vcmp.eq.s32.totalorder %v299, 1
        %vm728 = vcmp.eq.s32.totalorder %v300, 1
        %vm729 = vcmp.eq.s32.totalorder %v301, 1
        %vm730 = vcmp.eq.s32.totalorder %v302, 1
        %vm731 = vcmp.eq.s32.totalorder %v303, 1
        %vm732 = vcmp.eq.s32.totalorder %v304, 1
        %vm733 = vcmp.eq.s32.totalorder %v305, 1
        %vm734 = vcmp.eq.s32.totalorder %v306, 1
        %vm735 = vcmp.eq.s32.totalorder %v307, 1
        %vm736 = vcmp.eq.s32.totalorder %v308, 1
        %vm737 = vcmp.eq.s32.totalorder %v309, 1
        %vm738 = vcmp.eq.s32.totalorder %v310, 1
        %vm739 = vcmp.eq.s32.totalorder %v311, 1
        %v740 = vld [vmem:[#allocation4 + $0x1] sm:$0x1]
        %v741 = vsel %vm724, 1, 0
        %v742 = vsel %vm725, 1, 0
        %v743 = vsel %vm726, 1, 0
        %v744 = vsel %vm727, 1, 0
        %v745 = vsel %vm728, 1, 0
        %v746 = vsel %vm729, 1, 0
        %v747 = vsel %vm730, 1, 0
        %v748 = vsel %vm731, 1, 0
        %v749 = vsel %vm732, 1, 0
        %v750 = vsel %vm733, 1, 0
        %v751 = vsel %vm734, 1, 0
        %v752 = vsel %vm735, 1, 0
        %v753 = vsel %vm736, 1, 0
        %v754 = vsel %vm737, 1, 0
        %v755 = vsel %vm738, 1, 0
        %v756 = vsel %vm739, 1, 0
        %757 = vset.pattern.permute.xlu0 0
        %758 = vperm.xlu0 %757, %v741
        %v759 = vpop.permute.xlu0 %758
        %760 = vset.pattern.permute.xlu0 0
        %761 = vperm.xlu0 %760, %v742
        %v762 = vpop.permute.xlu0 %761
        %763 = vset.pattern.permute.xlu0 0
        %764 = vperm.xlu0 %763, %v743
        %v765 = vpop.permute.xlu0 %764
        %766 = vset.pattern.permute.xlu0 0
        %767 = vperm.xlu0 %766, %v744
        %v768 = vpop.permute.xlu0 %767
        %769 = vset.pattern.permute.xlu0 0
        %770 = vperm.xlu0 %769, %v745
        %v771 = vpop.permute.xlu0 %770
        %772 = vset.pattern.permute.xlu0 0
        %773 = vperm.xlu0 %772, %v746
        %v774 = vpop.permute.xlu0 %773
        %775 = vset.pattern.permute.xlu0 0
        %776 = vperm.xlu0 %775, %v747
        %v777 = vpop.permute.xlu0 %776
        %778 = vset.pattern.permute.xlu0 0
        %779 = vperm.xlu0 %778, %v748
        %v780 = vpop.permute.xlu0 %779
        %781 = vset.pattern.permute.xlu0 0
        %782 = vperm.xlu0 %781, %v749
        %v783 = vpop.permute.xlu0 %782
        %784 = vset.pattern.permute.xlu0 0
        %785 = vperm.xlu0 %784, %v750
        %v786 = vpop.permute.xlu0 %785
        %787 = vset.pattern.permute.xlu0 0
        %788 = vperm.xlu0 %787, %v751
        %v789 = vpop.permute.xlu0 %788
        %790 = vset.pattern.permute.xlu0 0
        %791 = vperm.xlu0 %790, %v752
        %v792 = vpop.permute.xlu0 %791
        %793 = vset.pattern.permute.xlu0 0
        %794 = vperm.xlu0 %793, %v753
        %v795 = vpop.permute.xlu0 %794
        %796 = vset.pattern.permute.xlu0 0
        %797 = vperm.xlu0 %796, %v754
        %v798 = vpop.permute.xlu0 %797
        %799 = vset.pattern.permute.xlu0 0
        %800 = vperm.xlu0 %799, %v755
        %v801 = vpop.permute.xlu0 %800
        %802 = vset.pattern.permute.xlu0 0
        %803 = vperm.xlu0 %802, %v756
        %v804 = vpop.permute.xlu0 %803
        %vm805 = vcmp.eq.s32.totalorder %v759, 1
        %vm806 = vcmp.eq.s32.totalorder %v762, 1
        %vm807 = vcmp.eq.s32.totalorder %v765, 1
        %vm808 = vcmp.eq.s32.totalorder %v768, 1
        %vm809 = vcmp.eq.s32.totalorder %v771, 1
        %vm810 = vcmp.eq.s32.totalorder %v774, 1
        %vm811 = vcmp.eq.s32.totalorder %v777, 1
        %vm812 = vcmp.eq.s32.totalorder %v780, 1
        %vm813 = vcmp.eq.s32.totalorder %v783, 1
        %vm814 = vcmp.eq.s32.totalorder %v786, 1
        %vm815 = vcmp.eq.s32.totalorder %v789, 1
        %vm816 = vcmp.eq.s32.totalorder %v792, 1
        %vm817 = vcmp.eq.s32.totalorder %v795, 1
        %vm818 = vcmp.eq.s32.totalorder %v798, 1
        %vm819 = vcmp.eq.s32.totalorder %v801, 1
        %vm820 = vcmp.eq.s32.totalorder %v804, 1
        %v821 = vsel %vm805, %v279, inf
        %v822 = vsel %vm806, %v280, inf
        %v823 = vsel %vm807, %v281, inf
        %v824 = vsel %vm808, %v282, inf
        %v825 = vsel %vm809, %v283, inf
        %v826 = vsel %vm810, %v284, inf
        %v827 = vsel %vm811, %v285, inf
        %v828 = vsel %vm812, %v286, inf
        %v829 = vsel %vm813, %v287, inf
        %v830 = vsel %vm814, %v288, inf
        %v831 = vsel %vm815, %v289, inf
        %v832 = vsel %vm816, %v290, inf
        %v833 = vsel %vm817, %v291, inf
        %v834 = vsel %vm818, %v292, inf
        %v835 = vsel %vm819, %v293, inf
        %v836 = vsel %vm820, %v294, inf
        %v837 = vsel %vm405, %v821, inf
        %v838 = vsel %vm405, %v822, inf
        %v839 = vsel %vm405, %v823, inf
        %v840 = vsel %vm405, %v824, inf
        %v841 = vsel %vm405, %v825, inf
        %v842 = vmin.f32 %v837, %v841
        %v843 = vsel %vm405, %v826, inf
        %v844 = vmin.f32 %v838, %v843
        %v845 = vsel %vm405, %v827, inf
        %v846 = vmin.f32 %v839, %v845
        %v847 = vsel %vm405, %v828, inf
        %v848 = vmin.f32 %v840, %v847
        %v849 = vsel %vm405, %v829, inf
        %v850 = vmin.f32 %v842, %v849
        %v851 = vsel %vm405, %v830, inf
        %v852 = vmin.f32 %v844, %v851
        %v853 = vsel %vm405, %v831, inf
        %v854 = vmin.f32 %v846, %v853
        %v855 = vsel %vm405, %v832, inf
        %v856 = vmin.f32 %v848, %v855
        %v857 = vsel %vm405, %v833, inf
        %v858 = vmin.f32 %v850, %v857
        %v859 = vsel %vm405, %v834, inf
        %v860 = vmin.f32 %v852, %v859
        %v861 = vsel %vm405, %v835, inf
        %v862 = vmin.f32 %v854, %v861
        %v863 = vsel %vm405, %v836, inf
        %v864 = vmin.f32 %v856, %v863
        %v865 = vmin.f32 %v858, %v860
        %v866 = vmin.f32 %v862, %v864
        %v867 = vmin.f32 %v865, %v866
        %v868 = vrot.slane %v867, 4
        %v869 = vmin.f32 %v867, %v868
        %v870 = vrot.slane %v869, 2
        %v871 = vmin.f32 %v869, %v870
        %v872 = vrot.slane %v871, 1
        %v873 = vmin.f32 %v871, %v872
        %v874 = vmin.f32 %v740, %v873
        %875 = vst.msk [vmem:[#allocation4 + $0x1] sm:$0x1] %vm666, %v874
        %v876 = vld [vmem:[#allocation5 + $0x1] sm:$0x1]
        %v877 = vsel %vm805, %v279, -inf
        %v878 = vsel %vm806, %v280, -inf
        %v879 = vsel %vm807, %v281, -inf
        %v880 = vsel %vm808, %v282, -inf
        %v881 = vsel %vm809, %v283, -inf
        %v882 = vsel %vm810, %v284, -inf
        %v883 = vsel %vm811, %v285, -inf
        %v884 = vsel %vm812, %v286, -inf
        %v885 = vsel %vm813, %v287, -inf
        %v886 = vsel %vm814, %v288, -inf
        %v887 = vsel %vm815, %v289, -inf
        %v888 = vsel %vm816, %v290, -inf
        %v889 = vsel %vm817, %v291, -inf
        %v890 = vsel %vm818, %v292, -inf
        %v891 = vsel %vm819, %v293, -inf
        %v892 = vsel %vm820, %v294, -inf
        %v893 = vsel %vm405, %v877, -inf
        %v894 = vsel %vm405, %v878, -inf
        %v895 = vsel %vm405, %v879, -inf
        %v896 = vsel %vm405, %v880, -inf
        %v897 = vsel %vm405, %v881, -inf
        %v898 = vmax.f32 %v893, %v897
        %v899 = vsel %vm405, %v882, -inf
        %v900 = vmax.f32 %v894, %v899
        %v901 = vsel %vm405, %v883, -inf
        %v902 = vmax.f32 %v895, %v901
        %v903 = vsel %vm405, %v884, -inf
        %v904 = vmax.f32 %v896, %v903
        %v905 = vsel %vm405, %v885, -inf
        %v906 = vmax.f32 %v898, %v905
        %v907 = vsel %vm405, %v886, -inf
        %v908 = vmax.f32 %v900, %v907
        %v909 = vsel %vm405, %v887, -inf
        %v910 = vmax.f32 %v902, %v909
        %v911 = vsel %vm405, %v888, -inf
        %v912 = vmax.f32 %v904, %v911
        %v913 = vsel %vm405, %v889, -inf
        %v914 = vmax.f32 %v906, %v913
        %v915 = vsel %vm405, %v890, -inf
        %v916 = vmax.f32 %v908, %v915
        %v917 = vsel %vm405, %v891, -inf
        %v918 = vmax.f32 %v910, %v917
        %v919 = vsel %vm405, %v892, -inf
        %v920 = vmax.f32 %v912, %v919
        %v921 = vmax.f32 %v914, %v916
        %v922 = vmax.f32 %v918, %v920
        %v923 = vmax.f32 %v921, %v922
        %v924 = vrot.slane %v923, 4
        %v925 = vmax.f32 %v923, %v924
        %v926 = vrot.slane %v925, 2
        %v927 = vmax.f32 %v925, %v926
        %v928 = vrot.slane %v927, 1
        %v929 = vmax.f32 %v927, %v928
        %v930 = vmax.f32 %v876, %v929
        %931 = vst.msk [vmem:[#allocation5 + $0x1] sm:$0x1] %vm666, %v930
        %vm932 = vcmp.eq.s32.totalorder %v296, 2
        %vm933 = vcmp.eq.s32.totalorder %v297, 2
        %vm934 = vcmp.eq.s32.totalorder %v298, 2
        %vm935 = vcmp.eq.s32.totalorder %v299, 2
        %vm936 = vcmp.eq.s32.totalorder %v300, 2
        %vm937 = vcmp.eq.s32.totalorder %v301, 2
        %vm938 = vcmp.eq.s32.totalorder %v302, 2
        %vm939 = vcmp.eq.s32.totalorder %v303, 2
        %vm940 = vcmp.eq.s32.totalorder %v304, 2
        %vm941 = vcmp.eq.s32.totalorder %v305, 2
        %vm942 = vcmp.eq.s32.totalorder %v306, 2
        %vm943 = vcmp.eq.s32.totalorder %v307, 2
        %vm944 = vcmp.eq.s32.totalorder %v308, 2
        %vm945 = vcmp.eq.s32.totalorder %v309, 2
        %vm946 = vcmp.eq.s32.totalorder %v310, 2
        %vm947 = vcmp.eq.s32.totalorder %v311, 2
        %v948 = vld [vmem:[#allocation4 + $0x2] sm:$0x1]
        %v949 = vsel %vm932, 1, 0
        %v950 = vsel %vm933, 1, 0
        %v951 = vsel %vm934, 1, 0
        %v952 = vsel %vm935, 1, 0
        %v953 = vsel %vm936, 1, 0
        %v954 = vsel %vm937, 1, 0
        %v955 = vsel %vm938, 1, 0
        %v956 = vsel %vm939, 1, 0
        %v957 = vsel %vm940, 1, 0
        %v958 = vsel %vm941, 1, 0
        %v959 = vsel %vm942, 1, 0
        %v960 = vsel %vm943, 1, 0
        %v961 = vsel %vm944, 1, 0
        %v962 = vsel %vm945, 1, 0
        %v963 = vsel %vm946, 1, 0
        %v964 = vsel %vm947, 1, 0
        %965 = vset.pattern.permute.xlu0 0
        %966 = vperm.xlu0 %965, %v949
        %v967 = vpop.permute.xlu0 %966
        %968 = vset.pattern.permute.xlu0 0
        %969 = vperm.xlu0 %968, %v950
        %v970 = vpop.permute.xlu0 %969
        %971 = vset.pattern.permute.xlu0 0
        %972 = vperm.xlu0 %971, %v951
        %v973 = vpop.permute.xlu0 %972
        %974 = vset.pattern.permute.xlu0 0
        %975 = vperm.xlu0 %974, %v952
        %v976 = vpop.permute.xlu0 %975
        %977 = vset.pattern.permute.xlu0 0
        %978 = vperm.xlu0 %977, %v953
        %v979 = vpop.permute.xlu0 %978
        %980 = vset.pattern.permute.xlu0 0
        %981 = vperm.xlu0 %980, %v954
        %v982 = vpop.permute.xlu0 %981
        %983 = vset.pattern.permute.xlu0 0
        %984 = vperm.xlu0 %983, %v955
        %v985 = vpop.permute.xlu0 %984
        %986 = vset.pattern.permute.xlu0 0
        %987 = vperm.xlu0 %986, %v956
        %v988 = vpop.permute.xlu0 %987
        %989 = vset.pattern.permute.xlu0 0
        %990 = vperm.xlu0 %989, %v957
        %v991 = vpop.permute.xlu0 %990
        %992 = vset.pattern.permute.xlu0 0
        %993 = vperm.xlu0 %992, %v958
        %v994 = vpop.permute.xlu0 %993
        %995 = vset.pattern.permute.xlu0 0
        %996 = vperm.xlu0 %995, %v959
        %v997 = vpop.permute.xlu0 %996
        %998 = vset.pattern.permute.xlu0 0
        %999 = vperm.xlu0 %998, %v960
        %v1000 = vpop.permute.xlu0 %999
        %1001 = vset.pattern.permute.xlu0 0
        %1002 = vperm.xlu0 %1001, %v961
        %v1003 = vpop.permute.xlu0 %1002
        %1004 = vset.pattern.permute.xlu0 0
        %1005 = vperm.xlu0 %1004, %v962
        %v1006 = vpop.permute.xlu0 %1005
        %1007 = vset.pattern.permute.xlu0 0
        %1008 = vperm.xlu0 %1007, %v963
        %v1009 = vpop.permute.xlu0 %1008
        %1010 = vset.pattern.permute.xlu0 0
        %1011 = vperm.xlu0 %1010, %v964
        %v1012 = vpop.permute.xlu0 %1011
        %vm1013 = vcmp.eq.s32.totalorder %v967, 1
        %vm1014 = vcmp.eq.s32.totalorder %v970, 1
        %vm1015 = vcmp.eq.s32.totalorder %v973, 1
        %vm1016 = vcmp.eq.s32.totalorder %v976, 1
        %vm1017 = vcmp.eq.s32.totalorder %v979, 1
        %vm1018 = vcmp.eq.s32.totalorder %v982, 1
        %vm1019 = vcmp.eq.s32.totalorder %v985, 1
        %vm1020 = vcmp.eq.s32.totalorder %v988, 1
        %vm1021 = vcmp.eq.s32.totalorder %v991, 1
        %vm1022 = vcmp.eq.s32.totalorder %v994, 1
        %vm1023 = vcmp.eq.s32.totalorder %v997, 1
        %vm1024 = vcmp.eq.s32.totalorder %v1000, 1
        %vm1025 = vcmp.eq.s32.totalorder %v1003, 1
        %vm1026 = vcmp.eq.s32.totalorder %v1006, 1
        %vm1027 = vcmp.eq.s32.totalorder %v1009, 1
        %vm1028 = vcmp.eq.s32.totalorder %v1012, 1
        %v1029 = vsel %vm1013, %v279, inf
        %v1030 = vsel %vm1014, %v280, inf
        %v1031 = vsel %vm1015, %v281, inf
        %v1032 = vsel %vm1016, %v282, inf
        %v1033 = vsel %vm1017, %v283, inf
        %v1034 = vsel %vm1018, %v284, inf
        %v1035 = vsel %vm1019, %v285, inf
        %v1036 = vsel %vm1020, %v286, inf
        %v1037 = vsel %vm1021, %v287, inf
        %v1038 = vsel %vm1022, %v288, inf
        %v1039 = vsel %vm1023, %v289, inf
        %v1040 = vsel %vm1024, %v290, inf
        %v1041 = vsel %vm1025, %v291, inf
        %v1042 = vsel %vm1026, %v292, inf
        %v1043 = vsel %vm1027, %v293, inf
        %v1044 = vsel %vm1028, %v294, inf
        %v1045 = vsel %vm405, %v1029, inf
        %v1046 = vsel %vm405, %v1030, inf
        %v1047 = vsel %vm405, %v1031, inf
        %v1048 = vsel %vm405, %v1032, inf
        %v1049 = vsel %vm405, %v1033, inf
        %v1050 = vmin.f32 %v1045, %v1049
        %v1051 = vsel %vm405, %v1034, inf
        %v1052 = vmin.f32 %v1046, %v1051
        %v1053 = vsel %vm405, %v1035, inf
        %v1054 = vmin.f32 %v1047, %v1053
        %v1055 = vsel %vm405, %v1036, inf
        %v1056 = vmin.f32 %v1048, %v1055
        %v1057 = vsel %vm405, %v1037, inf
        %v1058 = vmin.f32 %v1050, %v1057
        %v1059 = vsel %vm405, %v1038, inf
        %v1060 = vmin.f32 %v1052, %v1059
        %v1061 = vsel %vm405, %v1039, inf
        %v1062 = vmin.f32 %v1054, %v1061
        %v1063 = vsel %vm405, %v1040, inf
        %v1064 = vmin.f32 %v1056, %v1063
        %v1065 = vsel %vm405, %v1041, inf
        %v1066 = vmin.f32 %v1058, %v1065
        %v1067 = vsel %vm405, %v1042, inf
        %v1068 = vmin.f32 %v1060, %v1067
        %v1069 = vsel %vm405, %v1043, inf
        %v1070 = vmin.f32 %v1062, %v1069
        %v1071 = vsel %vm405, %v1044, inf
        %v1072 = vmin.f32 %v1064, %v1071
        %v1073 = vmin.f32 %v1066, %v1068
        %v1074 = vmin.f32 %v1070, %v1072
        %v1075 = vmin.f32 %v1073, %v1074
        %v1076 = vrot.slane %v1075, 4
        %v1077 = vmin.f32 %v1075, %v1076
        %v1078 = vrot.slane %v1077, 2
        %v1079 = vmin.f32 %v1077, %v1078
        %v1080 = vrot.slane %v1079, 1
        %v1081 = vmin.f32 %v1079, %v1080
        %v1082 = vmin.f32 %v948, %v1081
        %1083 = vst.msk [vmem:[#allocation4 + $0x2] sm:$0x1] %vm666, %v1082
        %v1084 = vld [vmem:[#allocation5 + $0x2] sm:$0x1]
        %v1085 = vsel %vm1013, %v279, -inf
        %v1086 = vsel %vm1014, %v280, -inf
        %v1087 = vsel %vm1015, %v281, -inf
        %v1088 = vsel %vm1016, %v282, -inf
        %v1089 = vsel %vm1017, %v283, -inf
        %v1090 = vsel %vm1018, %v284, -inf
        %v1091 = vsel %vm1019, %v285, -inf
        %v1092 = vsel %vm1020, %v286, -inf
        %v1093 = vsel %vm1021, %v287, -inf
        %v1094 = vsel %vm1022, %v288, -inf
        %v1095 = vsel %vm1023, %v289, -inf
        %v1096 = vsel %vm1024, %v290, -inf
        %v1097 = vsel %vm1025, %v291, -inf
        %v1098 = vsel %vm1026, %v292, -inf
        %v1099 = vsel %vm1027, %v293, -inf
        %v1100 = vsel %vm1028, %v294, -inf
        %v1101 = vsel %vm405, %v1085, -inf
        %v1102 = vsel %vm405, %v1086, -inf
        %v1103 = vsel %vm405, %v1087, -inf
        %v1104 = vsel %vm405, %v1088, -inf
        %v1105 = vsel %vm405, %v1089, -inf
        %v1106 = vmax.f32 %v1101, %v1105
        %v1107 = vsel %vm405, %v1090, -inf
        %v1108 = vmax.f32 %v1102, %v1107
        %v1109 = vsel %vm405, %v1091, -inf
        %v1110 = vmax.f32 %v1103, %v1109
        %v1111 = vsel %vm405, %v1092, -inf
        %v1112 = vmax.f32 %v1104, %v1111
        %v1113 = vsel %vm405, %v1093, -inf
        %v1114 = vmax.f32 %v1106, %v1113
        %v1115 = vsel %vm405, %v1094, -inf
        %v1116 = vmax.f32 %v1108, %v1115
        %v1117 = vsel %vm405, %v1095, -inf
        %v1118 = vmax.f32 %v1110, %v1117
        %v1119 = vsel %vm405, %v1096, -inf
        %v1120 = vmax.f32 %v1112, %v1119
        %v1121 = vsel %vm405, %v1097, -inf
        %v1122 = vmax.f32 %v1114, %v1121
        %v1123 = vsel %vm405, %v1098, -inf
        %v1124 = vmax.f32 %v1116, %v1123
        %v1125 = vsel %vm405, %v1099, -inf
        %v1126 = vmax.f32 %v1118, %v1125
        %v1127 = vsel %vm405, %v1100, -inf
        %v1128 = vmax.f32 %v1120, %v1127
        %v1129 = vmax.f32 %v1122, %v1124
        %v1130 = vmax.f32 %v1126, %v1128
        %v1131 = vmax.f32 %v1129, %v1130
        %v1132 = vrot.slane %v1131, 4
        %v1133 = vmax.f32 %v1131, %v1132
        %v1134 = vrot.slane %v1133, 2
        %v1135 = vmax.f32 %v1133, %v1134
        %v1136 = vrot.slane %v1135, 1
        %v1137 = vmax.f32 %v1135, %v1136
        %v1138 = vmax.f32 %v1084, %v1137
        %1139 = vst.msk [vmem:[#allocation5 + $0x2] sm:$0x1] %vm666, %v1138
        %vm1140 = vcmp.eq.s32.totalorder %v296, 3
        %vm1141 = vcmp.eq.s32.totalorder %v297, 3
        %vm1142 = vcmp.eq.s32.totalorder %v298, 3
        %vm1143 = vcmp.eq.s32.totalorder %v299, 3
        %vm1144 = vcmp.eq.s32.totalorder %v300, 3
        %vm1145 = vcmp.eq.s32.totalorder %v301, 3
        %vm1146 = vcmp.eq.s32.totalorder %v302, 3
        %vm1147 = vcmp.eq.s32.totalorder %v303, 3
        %vm1148 = vcmp.eq.s32.totalorder %v304, 3
        %vm1149 = vcmp.eq.s32.totalorder %v305, 3
        %vm1150 = vcmp.eq.s32.totalorder %v306, 3
        %vm1151 = vcmp.eq.s32.totalorder %v307, 3
        %vm1152 = vcmp.eq.s32.totalorder %v308, 3
        %vm1153 = vcmp.eq.s32.totalorder %v309, 3
        %vm1154 = vcmp.eq.s32.totalorder %v310, 3
        %vm1155 = vcmp.eq.s32.totalorder %v311, 3
        %v1156 = vld [vmem:[#allocation4 + $0x3] sm:$0x1]
        %v1157 = vsel %vm1140, 1, 0
        %v1158 = vsel %vm1141, 1, 0
        %v1159 = vsel %vm1142, 1, 0
        %v1160 = vsel %vm1143, 1, 0
        %v1161 = vsel %vm1144, 1, 0
        %v1162 = vsel %vm1145, 1, 0
        %v1163 = vsel %vm1146, 1, 0
        %v1164 = vsel %vm1147, 1, 0
        %v1165 = vsel %vm1148, 1, 0
        %v1166 = vsel %vm1149, 1, 0
        %v1167 = vsel %vm1150, 1, 0
        %v1168 = vsel %vm1151, 1, 0
        %v1169 = vsel %vm1152, 1, 0
        %v1170 = vsel %vm1153, 1, 0
        %v1171 = vsel %vm1154, 1, 0
        %v1172 = vsel %vm1155, 1, 0
        %1173 = vset.pattern.permute.xlu0 0
        %1174 = vperm.xlu0 %1173, %v1157
        %v1175 = vpop.permute.xlu0 %1174
        %1176 = vset.pattern.permute.xlu0 0
        %1177 = vperm.xlu0 %1176, %v1158
        %v1178 = vpop.permute.xlu0 %1177
        %1179 = vset.pattern.permute.xlu0 0
        %1180 = vperm.xlu0 %1179, %v1159
        %v1181 = vpop.permute.xlu0 %1180
        %1182 = vset.pattern.permute.xlu0 0
        %1183 = vperm.xlu0 %1182, %v1160
        %v1184 = vpop.permute.xlu0 %1183
        %1185 = vset.pattern.permute.xlu0 0
        %1186 = vperm.xlu0 %1185, %v1161
        %v1187 = vpop.permute.xlu0 %1186
        %1188 = vset.pattern.permute.xlu0 0
        %1189 = vperm.xlu0 %1188, %v1162
        %v1190 = vpop.permute.xlu0 %1189
        %1191 = vset.pattern.permute.xlu0 0
        %1192 = vperm.xlu0 %1191, %v1163
        %v1193 = vpop.permute.xlu0 %1192
        %1194 = vset.pattern.permute.xlu0 0
        %1195 = vperm.xlu0 %1194, %v1164
        %v1196 = vpop.permute.xlu0 %1195
        %1197 = vset.pattern.permute.xlu0 0
        %1198 = vperm.xlu0 %1197, %v1165
        %v1199 = vpop.permute.xlu0 %1198
        %1200 = vset.pattern.permute.xlu0 0
        %1201 = vperm.xlu0 %1200, %v1166
        %v1202 = vpop.permute.xlu0 %1201
        %1203 = vset.pattern.permute.xlu0 0
        %1204 = vperm.xlu0 %1203, %v1167
        %v1205 = vpop.permute.xlu0 %1204
        %1206 = vset.pattern.permute.xlu0 0
        %1207 = vperm.xlu0 %1206, %v1168
        %v1208 = vpop.permute.xlu0 %1207
        %1209 = vset.pattern.permute.xlu0 0
        %1210 = vperm.xlu0 %1209, %v1169
        %v1211 = vpop.permute.xlu0 %1210
        %1212 = vset.pattern.permute.xlu0 0
        %1213 = vperm.xlu0 %1212, %v1170
        %v1214 = vpop.permute.xlu0 %1213
        %1215 = vset.pattern.permute.xlu0 0
        %1216 = vperm.xlu0 %1215, %v1171
        %v1217 = vpop.permute.xlu0 %1216
        %1218 = vset.pattern.permute.xlu0 0
        %1219 = vperm.xlu0 %1218, %v1172
        %v1220 = vpop.permute.xlu0 %1219
        %vm1221 = vcmp.eq.s32.totalorder %v1175, 1
        %vm1222 = vcmp.eq.s32.totalorder %v1178, 1
        %vm1223 = vcmp.eq.s32.totalorder %v1181, 1
        %vm1224 = vcmp.eq.s32.totalorder %v1184, 1
        %vm1225 = vcmp.eq.s32.totalorder %v1187, 1
        %vm1226 = vcmp.eq.s32.totalorder %v1190, 1
        %vm1227 = vcmp.eq.s32.totalorder %v1193, 1
        %vm1228 = vcmp.eq.s32.totalorder %v1196, 1
        %vm1229 = vcmp.eq.s32.totalorder %v1199, 1
        %vm1230 = vcmp.eq.s32.totalorder %v1202, 1
        %vm1231 = vcmp.eq.s32.totalorder %v1205, 1
        %vm1232 = vcmp.eq.s32.totalorder %v1208, 1
        %vm1233 = vcmp.eq.s32.totalorder %v1211, 1
        %vm1234 = vcmp.eq.s32.totalorder %v1214, 1
        %vm1235 = vcmp.eq.s32.totalorder %v1217, 1
        %vm1236 = vcmp.eq.s32.totalorder %v1220, 1
        %v1237 = vsel %vm1221, %v279, inf
        %v1238 = vsel %vm1222, %v280, inf
        %v1239 = vsel %vm1223, %v281, inf
        %v1240 = vsel %vm1224, %v282, inf
        %v1241 = vsel %vm1225, %v283, inf
        %v1242 = vsel %vm1226, %v284, inf
        %v1243 = vsel %vm1227, %v285, inf
        %v1244 = vsel %vm1228, %v286, inf
        %v1245 = vsel %vm1229, %v287, inf
        %v1246 = vsel %vm1230, %v288, inf
        %v1247 = vsel %vm1231, %v289, inf
        %v1248 = vsel %vm1232, %v290, inf
        %v1249 = vsel %vm1233, %v291, inf
        %v1250 = vsel %vm1234, %v292, inf
        %v1251 = vsel %vm1235, %v293, inf
        %v1252 = vsel %vm1236, %v294, inf
        %v1253 = vsel %vm405, %v1237, inf
        %v1254 = vsel %vm405, %v1238, inf
        %v1255 = vsel %vm405, %v1239, inf
        %v1256 = vsel %vm405, %v1240, inf
        %v1257 = vsel %vm405, %v1241, inf
        %v1258 = vmin.f32 %v1253, %v1257
        %v1259 = vsel %vm405, %v1242, inf
        %v1260 = vmin.f32 %v1254, %v1259
        %v1261 = vsel %vm405, %v1243, inf
        %v1262 = vmin.f32 %v1255, %v1261
        %v1263 = vsel %vm405, %v1244, inf
        %v1264 = vmin.f32 %v1256, %v1263
        %v1265 = vsel %vm405, %v1245, inf
        %v1266 = vmin.f32 %v1258, %v1265
        %v1267 = vsel %vm405, %v1246, inf
        %v1268 = vmin.f32 %v1260, %v1267
        %v1269 = vsel %vm405, %v1247, inf
        %v1270 = vmin.f32 %v1262, %v1269
        %v1271 = vsel %vm405, %v1248, inf
        %v1272 = vmin.f32 %v1264, %v1271
        %v1273 = vsel %vm405, %v1249, inf
        %v1274 = vmin.f32 %v1266, %v1273
        %v1275 = vsel %vm405, %v1250, inf
        %v1276 = vmin.f32 %v1268, %v1275
        %v1277 = vsel %vm405, %v1251, inf
        %v1278 = vmin.f32 %v1270, %v1277
        %v1279 = vsel %vm405, %v1252, inf
        %v1280 = vmin.f32 %v1272, %v1279
        %v1281 = vmin.f32 %v1274, %v1276
        %v1282 = vmin.f32 %v1278, %v1280
        %v1283 = vmin.f32 %v1281, %v1282
        %v1284 = vrot.slane %v1283, 4
        %v1285 = vmin.f32 %v1283, %v1284
        %v1286 = vrot.slane %v1285, 2
        %v1287 = vmin.f32 %v1285, %v1286
        %v1288 = vrot.slane %v1287, 1
        %v1289 = vmin.f32 %v1287, %v1288
        %v1290 = vmin.f32 %v1156, %v1289
        %1291 = vst.msk [vmem:[#allocation4 + $0x3] sm:$0x1] %vm666, %v1290
        %v1292 = vld [vmem:[#allocation5 + $0x3] sm:$0x1]
        %v1293 = vsel %vm1221, %v279, -inf
        %v1294 = vsel %vm1222, %v280, -inf
        %v1295 = vsel %vm1223, %v281, -inf
        %v1296 = vsel %vm1224, %v282, -inf
        %v1297 = vsel %vm1225, %v283, -inf
        %v1298 = vsel %vm1226, %v284, -inf
        %v1299 = vsel %vm1227, %v285, -inf
        %v1300 = vsel %vm1228, %v286, -inf
        %v1301 = vsel %vm1229, %v287, -inf
        %v1302 = vsel %vm1230, %v288, -inf
        %v1303 = vsel %vm1231, %v289, -inf
        %v1304 = vsel %vm1232, %v290, -inf
        %v1305 = vsel %vm1233, %v291, -inf
        %v1306 = vsel %vm1234, %v292, -inf
        %v1307 = vsel %vm1235, %v293, -inf
        %v1308 = vsel %vm1236, %v294, -inf
        %v1309 = vsel %vm405, %v1293, -inf
        %v1310 = vsel %vm405, %v1294, -inf
        %v1311 = vsel %vm405, %v1295, -inf
        %v1312 = vsel %vm405, %v1296, -inf
        %v1313 = vsel %vm405, %v1297, -inf
        %v1314 = vmax.f32 %v1309, %v1313
        %v1315 = vsel %vm405, %v1298, -inf
        %v1316 = vmax.f32 %v1310, %v1315
        %v1317 = vsel %vm405, %v1299, -inf
        %v1318 = vmax.f32 %v1311, %v1317
        %v1319 = vsel %vm405, %v1300, -inf
        %v1320 = vmax.f32 %v1312, %v1319
        %v1321 = vsel %vm405, %v1301, -inf
        %v1322 = vmax.f32 %v1314, %v1321
        %v1323 = vsel %vm405, %v1302, -inf
        %v1324 = vmax.f32 %v1316, %v1323
        %v1325 = vsel %vm405, %v1303, -inf
        %v1326 = vmax.f32 %v1318, %v1325
        %v1327 = vsel %vm405, %v1304, -inf
        %v1328 = vmax.f32 %v1320, %v1327
        %v1329 = vsel %vm405, %v1305, -inf
        %v1330 = vmax.f32 %v1322, %v1329
        %v1331 = vsel %vm405, %v1306, -inf
        %v1332 = vmax.f32 %v1324, %v1331
        %v1333 = vsel %vm405, %v1307, -inf
        %v1334 = vmax.f32 %v1326, %v1333
        %v1335 = vsel %vm405, %v1308, -inf
        %v1336 = vmax.f32 %v1328, %v1335
        %v1337 = vmax.f32 %v1330, %v1332
        %v1338 = vmax.f32 %v1334, %v1336
        %v1339 = vmax.f32 %v1337, %v1338
        %v1340 = vrot.slane %v1339, 4
        %v1341 = vmax.f32 %v1339, %v1340
        %v1342 = vrot.slane %v1341, 2
        %v1343 = vmax.f32 %v1341, %v1342
        %v1344 = vrot.slane %v1343, 1
        %v1345 = vmax.f32 %v1343, %v1344
        %v1346 = vmax.f32 %v1292, %v1345
        %1347 = vst.msk [vmem:[#allocation5 + $0x3] sm:$0x1] %vm666, %v1346
        %vm1348 = vcmp.eq.s32.totalorder %v296, 4
        %vm1349 = vcmp.eq.s32.totalorder %v297, 4
        %vm1350 = vcmp.eq.s32.totalorder %v298, 4
        %vm1351 = vcmp.eq.s32.totalorder %v299, 4
        %vm1352 = vcmp.eq.s32.totalorder %v300, 4
        %vm1353 = vcmp.eq.s32.totalorder %v301, 4
        %vm1354 = vcmp.eq.s32.totalorder %v302, 4
        %vm1355 = vcmp.eq.s32.totalorder %v303, 4
        %vm1356 = vcmp.eq.s32.totalorder %v304, 4
        %vm1357 = vcmp.eq.s32.totalorder %v305, 4
        %vm1358 = vcmp.eq.s32.totalorder %v306, 4
        %vm1359 = vcmp.eq.s32.totalorder %v307, 4
        %vm1360 = vcmp.eq.s32.totalorder %v308, 4
        %vm1361 = vcmp.eq.s32.totalorder %v309, 4
        %vm1362 = vcmp.eq.s32.totalorder %v310, 4
        %vm1363 = vcmp.eq.s32.totalorder %v311, 4
        %v1364 = vld [vmem:[#allocation4 + $0x4] sm:$0x1]
        %v1365 = vsel %vm1348, 1, 0
        %v1366 = vsel %vm1349, 1, 0
        %v1367 = vsel %vm1350, 1, 0
        %v1368 = vsel %vm1351, 1, 0
        %v1369 = vsel %vm1352, 1, 0
        %v1370 = vsel %vm1353, 1, 0
        %v1371 = vsel %vm1354, 1, 0
        %v1372 = vsel %vm1355, 1, 0
        %v1373 = vsel %vm1356, 1, 0
        %v1374 = vsel %vm1357, 1, 0
        %v1375 = vsel %vm1358, 1, 0
        %v1376 = vsel %vm1359, 1, 0
        %v1377 = vsel %vm1360, 1, 0
        %v1378 = vsel %vm1361, 1, 0
        %v1379 = vsel %vm1362, 1, 0
        %v1380 = vsel %vm1363, 1, 0
        %1381 = vset.pattern.permute.xlu0 0
        %1382 = vperm.xlu0 %1381, %v1365
        %v1383 = vpop.permute.xlu0 %1382
        %1384 = vset.pattern.permute.xlu0 0
        %1385 = vperm.xlu0 %1384, %v1366
        %v1386 = vpop.permute.xlu0 %1385
        %1387 = vset.pattern.permute.xlu0 0
        %1388 = vperm.xlu0 %1387, %v1367
        %v1389 = vpop.permute.xlu0 %1388
        %1390 = vset.pattern.permute.xlu0 0
        %1391 = vperm.xlu0 %1390, %v1368
        %v1392 = vpop.permute.xlu0 %1391
        %1393 = vset.pattern.permute.xlu0 0
        %1394 = vperm.xlu0 %1393, %v1369
        %v1395 = vpop.permute.xlu0 %1394
        %1396 = vset.pattern.permute.xlu0 0
        %1397 = vperm.xlu0 %1396, %v1370
        %v1398 = vpop.permute.xlu0 %1397
        %1399 = vset.pattern.permute.xlu0 0
        %1400 = vperm.xlu0 %1399, %v1371
        %v1401 = vpop.permute.xlu0 %1400
        %1402 = vset.pattern.permute.xlu0 0
        %1403 = vperm.xlu0 %1402, %v1372
        %v1404 = vpop.permute.xlu0 %1403
        %1405 = vset.pattern.permute.xlu0 0
        %1406 = vperm.xlu0 %1405, %v1373
        %v1407 = vpop.permute.xlu0 %1406
        %1408 = vset.pattern.permute.xlu0 0
        %1409 = vperm.xlu0 %1408, %v1374
        %v1410 = vpop.permute.xlu0 %1409
        %1411 = vset.pattern.permute.xlu0 0
        %1412 = vperm.xlu0 %1411, %v1375
        %v1413 = vpop.permute.xlu0 %1412
        %1414 = vset.pattern.permute.xlu0 0
        %1415 = vperm.xlu0 %1414, %v1376
        %v1416 = vpop.permute.xlu0 %1415
        %1417 = vset.pattern.permute.xlu0 0
        %1418 = vperm.xlu0 %1417, %v1377
        %v1419 = vpop.permute.xlu0 %1418
        %1420 = vset.pattern.permute.xlu0 0
        %1421 = vperm.xlu0 %1420, %v1378
        %v1422 = vpop.permute.xlu0 %1421
        %1423 = vset.pattern.permute.xlu0 0
        %1424 = vperm.xlu0 %1423, %v1379
        %v1425 = vpop.permute.xlu0 %1424
        %1426 = vset.pattern.permute.xlu0 0
        %1427 = vperm.xlu0 %1426, %v1380
        %v1428 = vpop.permute.xlu0 %1427
        %vm1429 = vcmp.eq.s32.totalorder %v1383, 1
        %vm1430 = vcmp.eq.s32.totalorder %v1386, 1
        %vm1431 = vcmp.eq.s32.totalorder %v1389, 1
        %vm1432 = vcmp.eq.s32.totalorder %v1392, 1
        %vm1433 = vcmp.eq.s32.totalorder %v1395, 1
        %vm1434 = vcmp.eq.s32.totalorder %v1398, 1
        %vm1435 = vcmp.eq.s32.totalorder %v1401, 1
        %vm1436 = vcmp.eq.s32.totalorder %v1404, 1
        %vm1437 = vcmp.eq.s32.totalorder %v1407, 1
        %vm1438 = vcmp.eq.s32.totalorder %v1410, 1
        %vm1439 = vcmp.eq.s32.totalorder %v1413, 1
        %vm1440 = vcmp.eq.s32.totalorder %v1416, 1
        %vm1441 = vcmp.eq.s32.totalorder %v1419, 1
        %vm1442 = vcmp.eq.s32.totalorder %v1422, 1
        %vm1443 = vcmp.eq.s32.totalorder %v1425, 1
        %vm1444 = vcmp.eq.s32.totalorder %v1428, 1
        %v1445 = vsel %vm1429, %v279, inf
        %v1446 = vsel %vm1430, %v280, inf
        %v1447 = vsel %vm1431, %v281, inf
        %v1448 = vsel %vm1432, %v282, inf
        %v1449 = vsel %vm1433, %v283, inf
        %v1450 = vsel %vm1434, %v284, inf
        %v1451 = vsel %vm1435, %v285, inf
        %v1452 = vsel %vm1436, %v286, inf
        %v1453 = vsel %vm1437, %v287, inf
        %v1454 = vsel %vm1438, %v288, inf
        %v1455 = vsel %vm1439, %v289, inf
        %v1456 = vsel %vm1440, %v290, inf
        %v1457 = vsel %vm1441, %v291, inf
        %v1458 = vsel %vm1442, %v292, inf
        %v1459 = vsel %vm1443, %v293, inf
        %v1460 = vsel %vm1444, %v294, inf
        %v1461 = vsel %vm405, %v1445, inf
        %v1462 = vsel %vm405, %v1446, inf
        %v1463 = vsel %vm405, %v1447, inf
        %v1464 = vsel %vm405, %v1448, inf
        %v1465 = vsel %vm405, %v1449, inf
        %v1466 = vmin.f32 %v1461, %v1465
        %v1467 = vsel %vm405, %v1450, inf
        %v1468 = vmin.f32 %v1462, %v1467
        %v1469 = vsel %vm405, %v1451, inf
        %v1470 = vmin.f32 %v1463, %v1469
        %v1471 = vsel %vm405, %v1452, inf
        %v1472 = vmin.f32 %v1464, %v1471
        %v1473 = vsel %vm405, %v1453, inf
        %v1474 = vmin.f32 %v1466, %v1473
        %v1475 = vsel %vm405, %v1454, inf
        %v1476 = vmin.f32 %v1468, %v1475
        %v1477 = vsel %vm405, %v1455, inf
        %v1478 = vmin.f32 %v1470, %v1477
        %v1479 = vsel %vm405, %v1456, inf
        %v1480 = vmin.f32 %v1472, %v1479
        %v1481 = vsel %vm405, %v1457, inf
        %v1482 = vmin.f32 %v1474, %v1481
        %v1483 = vsel %vm405, %v1458, inf
        %v1484 = vmin.f32 %v1476, %v1483
        %v1485 = vsel %vm405, %v1459, inf
        %v1486 = vmin.f32 %v1478, %v1485
        %v1487 = vsel %vm405, %v1460, inf
        %v1488 = vmin.f32 %v1480, %v1487
        %v1489 = vmin.f32 %v1482, %v1484
        %v1490 = vmin.f32 %v1486, %v1488
        %v1491 = vmin.f32 %v1489, %v1490
        %v1492 = vrot.slane %v1491, 4
        %v1493 = vmin.f32 %v1491, %v1492
        %v1494 = vrot.slane %v1493, 2
        %v1495 = vmin.f32 %v1493, %v1494
        %v1496 = vrot.slane %v1495, 1
        %v1497 = vmin.f32 %v1495, %v1496
        %v1498 = vmin.f32 %v1364, %v1497
        %1499 = vst.msk [vmem:[#allocation4 + $0x4] sm:$0x1] %vm666, %v1498
        %v1500 = vld [vmem:[#allocation5 + $0x4] sm:$0x1]
        %v1501 = vsel %vm1429, %v279, -inf
        %v1502 = vsel %vm1430, %v280, -inf
        %v1503 = vsel %vm1431, %v281, -inf
        %v1504 = vsel %vm1432, %v282, -inf
        %v1505 = vsel %vm1433, %v283, -inf
        %v1506 = vsel %vm1434, %v284, -inf
        %v1507 = vsel %vm1435, %v285, -inf
        %v1508 = vsel %vm1436, %v286, -inf
        %v1509 = vsel %vm1437, %v287, -inf
        %v1510 = vsel %vm1438, %v288, -inf
        %v1511 = vsel %vm1439, %v289, -inf
        %v1512 = vsel %vm1440, %v290, -inf
        %v1513 = vsel %vm1441, %v291, -inf
        %v1514 = vsel %vm1442, %v292, -inf
        %v1515 = vsel %vm1443, %v293, -inf
        %v1516 = vsel %vm1444, %v294, -inf
        %v1517 = vsel %vm405, %v1501, -inf
        %v1518 = vsel %vm405, %v1502, -inf
        %v1519 = vsel %vm405, %v1503, -inf
        %v1520 = vsel %vm405, %v1504, -inf
        %v1521 = vsel %vm405, %v1505, -inf
        %v1522 = vmax.f32 %v1517, %v1521
        %v1523 = vsel %vm405, %v1506, -inf
        %v1524 = vmax.f32 %v1518, %v1523
        %v1525 = vsel %vm405, %v1507, -inf
        %v1526 = vmax.f32 %v1519, %v1525
        %v1527 = vsel %vm405, %v1508, -inf
        %v1528 = vmax.f32 %v1520, %v1527
        %v1529 = vsel %vm405, %v1509, -inf
        %v1530 = vmax.f32 %v1522, %v1529
        %v1531 = vsel %vm405, %v1510, -inf
        %v1532 = vmax.f32 %v1524, %v1531
        %v1533 = vsel %vm405, %v1511, -inf
        %v1534 = vmax.f32 %v1526, %v1533
        %v1535 = vsel %vm405, %v1512, -inf
        %v1536 = vmax.f32 %v1528, %v1535
        %v1537 = vsel %vm405, %v1513, -inf
        %v1538 = vmax.f32 %v1530, %v1537
        %v1539 = vsel %vm405, %v1514, -inf
        %v1540 = vmax.f32 %v1532, %v1539
        %v1541 = vsel %vm405, %v1515, -inf
        %v1542 = vmax.f32 %v1534, %v1541
        %v1543 = vsel %vm405, %v1516, -inf
        %v1544 = vmax.f32 %v1536, %v1543
        %v1545 = vmax.f32 %v1538, %v1540
        %v1546 = vmax.f32 %v1542, %v1544
        %v1547 = vmax.f32 %v1545, %v1546
        %v1548 = vrot.slane %v1547, 4
        %v1549 = vmax.f32 %v1547, %v1548
        %v1550 = vrot.slane %v1549, 2
        %v1551 = vmax.f32 %v1549, %v1550
        %v1552 = vrot.slane %v1551, 1
        %v1553 = vmax.f32 %v1551, %v1552
        %v1554 = vmax.f32 %v1500, %v1553
        %1555 = vst.msk [vmem:[#allocation5 + $0x4] sm:$0x1] %vm666, %v1554
        %vm1556 = vcmp.eq.s32.totalorder %v296, 5
        %vm1557 = vcmp.eq.s32.totalorder %v297, 5
        %vm1558 = vcmp.eq.s32.totalorder %v298, 5
        %vm1559 = vcmp.eq.s32.totalorder %v299, 5
        %vm1560 = vcmp.eq.s32.totalorder %v300, 5
        %vm1561 = vcmp.eq.s32.totalorder %v301, 5
        %vm1562 = vcmp.eq.s32.totalorder %v302, 5
        %vm1563 = vcmp.eq.s32.totalorder %v303, 5
        %vm1564 = vcmp.eq.s32.totalorder %v304, 5
        %vm1565 = vcmp.eq.s32.totalorder %v305, 5
        %vm1566 = vcmp.eq.s32.totalorder %v306, 5
        %vm1567 = vcmp.eq.s32.totalorder %v307, 5
        %vm1568 = vcmp.eq.s32.totalorder %v308, 5
        %vm1569 = vcmp.eq.s32.totalorder %v309, 5
        %vm1570 = vcmp.eq.s32.totalorder %v310, 5
        %vm1571 = vcmp.eq.s32.totalorder %v311, 5
        %v1572 = vld [vmem:[#allocation4 + $0x5] sm:$0x1]
        %v1573 = vsel %vm1556, 1, 0
        %v1574 = vsel %vm1557, 1, 0
        %v1575 = vsel %vm1558, 1, 0
        %v1576 = vsel %vm1559, 1, 0
        %v1577 = vsel %vm1560, 1, 0
        %v1578 = vsel %vm1561, 1, 0
        %v1579 = vsel %vm1562, 1, 0
        %v1580 = vsel %vm1563, 1, 0
        %v1581 = vsel %vm1564, 1, 0
        %v1582 = vsel %vm1565, 1, 0
        %v1583 = vsel %vm1566, 1, 0
        %v1584 = vsel %vm1567, 1, 0
        %v1585 = vsel %vm1568, 1, 0
        %v1586 = vsel %vm1569, 1, 0
        %v1587 = vsel %vm1570, 1, 0
        %v1588 = vsel %vm1571, 1, 0
        %1589 = vset.pattern.permute.xlu0 0
        %1590 = vperm.xlu0 %1589, %v1573
        %v1591 = vpop.permute.xlu0 %1590
        %1592 = vset.pattern.permute.xlu0 0
        %1593 = vperm.xlu0 %1592, %v1574
        %v1594 = vpop.permute.xlu0 %1593
        %1595 = vset.pattern.permute.xlu0 0
        %1596 = vperm.xlu0 %1595, %v1575
        %v1597 = vpop.permute.xlu0 %1596
        %1598 = vset.pattern.permute.xlu0 0
        %1599 = vperm.xlu0 %1598, %v1576
        %v1600 = vpop.permute.xlu0 %1599
        %1601 = vset.pattern.permute.xlu0 0
        %1602 = vperm.xlu0 %1601, %v1577
        %v1603 = vpop.permute.xlu0 %1602
        %1604 = vset.pattern.permute.xlu0 0
        %1605 = vperm.xlu0 %1604, %v1578
        %v1606 = vpop.permute.xlu0 %1605
        %1607 = vset.pattern.permute.xlu0 0
        %1608 = vperm.xlu0 %1607, %v1579
        %v1609 = vpop.permute.xlu0 %1608
        %1610 = vset.pattern.permute.xlu0 0
        %1611 = vperm.xlu0 %1610, %v1580
        %v1612 = vpop.permute.xlu0 %1611
        %1613 = vset.pattern.permute.xlu0 0
        %1614 = vperm.xlu0 %1613, %v1581
        %v1615 = vpop.permute.xlu0 %1614
        %1616 = vset.pattern.permute.xlu0 0
        %1617 = vperm.xlu0 %1616, %v1582
        %v1618 = vpop.permute.xlu0 %1617
        %1619 = vset.pattern.permute.xlu0 0
        %1620 = vperm.xlu0 %1619, %v1583
        %v1621 = vpop.permute.xlu0 %1620
        %1622 = vset.pattern.permute.xlu0 0
        %1623 = vperm.xlu0 %1622, %v1584
        %v1624 = vpop.permute.xlu0 %1623
        %1625 = vset.pattern.permute.xlu0 0
        %1626 = vperm.xlu0 %1625, %v1585
        %v1627 = vpop.permute.xlu0 %1626
        %1628 = vset.pattern.permute.xlu0 0
        %1629 = vperm.xlu0 %1628, %v1586
        %v1630 = vpop.permute.xlu0 %1629
        %1631 = vset.pattern.permute.xlu0 0
        %1632 = vperm.xlu0 %1631, %v1587
        %v1633 = vpop.permute.xlu0 %1632
        %1634 = vset.pattern.permute.xlu0 0
        %1635 = vperm.xlu0 %1634, %v1588
        %v1636 = vpop.permute.xlu0 %1635
        %vm1637 = vcmp.eq.s32.totalorder %v1591, 1
        %vm1638 = vcmp.eq.s32.totalorder %v1594, 1
        %vm1639 = vcmp.eq.s32.totalorder %v1597, 1
        %vm1640 = vcmp.eq.s32.totalorder %v1600, 1
        %vm1641 = vcmp.eq.s32.totalorder %v1603, 1
        %vm1642 = vcmp.eq.s32.totalorder %v1606, 1
        %vm1643 = vcmp.eq.s32.totalorder %v1609, 1
        %vm1644 = vcmp.eq.s32.totalorder %v1612, 1
        %vm1645 = vcmp.eq.s32.totalorder %v1615, 1
        %vm1646 = vcmp.eq.s32.totalorder %v1618, 1
        %vm1647 = vcmp.eq.s32.totalorder %v1621, 1
        %vm1648 = vcmp.eq.s32.totalorder %v1624, 1
        %vm1649 = vcmp.eq.s32.totalorder %v1627, 1
        %vm1650 = vcmp.eq.s32.totalorder %v1630, 1
        %vm1651 = vcmp.eq.s32.totalorder %v1633, 1
        %vm1652 = vcmp.eq.s32.totalorder %v1636, 1
        %v1653 = vsel %vm1637, %v279, inf
        %v1654 = vsel %vm1638, %v280, inf
        %v1655 = vsel %vm1639, %v281, inf
        %v1656 = vsel %vm1640, %v282, inf
        %v1657 = vsel %vm1641, %v283, inf
        %v1658 = vsel %vm1642, %v284, inf
        %v1659 = vsel %vm1643, %v285, inf
        %v1660 = vsel %vm1644, %v286, inf
        %v1661 = vsel %vm1645, %v287, inf
        %v1662 = vsel %vm1646, %v288, inf
        %v1663 = vsel %vm1647, %v289, inf
        %v1664 = vsel %vm1648, %v290, inf
        %v1665 = vsel %vm1649, %v291, inf
        %v1666 = vsel %vm1650, %v292, inf
        %v1667 = vsel %vm1651, %v293, inf
        %v1668 = vsel %vm1652, %v294, inf
        %v1669 = vsel %vm405, %v1653, inf
        %v1670 = vsel %vm405, %v1654, inf
        %v1671 = vsel %vm405, %v1655, inf
        %v1672 = vsel %vm405, %v1656, inf
        %v1673 = vsel %vm405, %v1657, inf
        %v1674 = vmin.f32 %v1669, %v1673
        %v1675 = vsel %vm405, %v1658, inf
        %v1676 = vmin.f32 %v1670, %v1675
        %v1677 = vsel %vm405, %v1659, inf
        %v1678 = vmin.f32 %v1671, %v1677
        %v1679 = vsel %vm405, %v1660, inf
        %v1680 = vmin.f32 %v1672, %v1679
        %v1681 = vsel %vm405, %v1661, inf
        %v1682 = vmin.f32 %v1674, %v1681
        %v1683 = vsel %vm405, %v1662, inf
        %v1684 = vmin.f32 %v1676, %v1683
        %v1685 = vsel %vm405, %v1663, inf
        %v1686 = vmin.f32 %v1678, %v1685
        %v1687 = vsel %vm405, %v1664, inf
        %v1688 = vmin.f32 %v1680, %v1687
        %v1689 = vsel %vm405, %v1665, inf
        %v1690 = vmin.f32 %v1682, %v1689
        %v1691 = vsel %vm405, %v1666, inf
        %v1692 = vmin.f32 %v1684, %v1691
        %v1693 = vsel %vm405, %v1667, inf
        %v1694 = vmin.f32 %v1686, %v1693
        %v1695 = vsel %vm405, %v1668, inf
        %v1696 = vmin.f32 %v1688, %v1695
        %v1697 = vmin.f32 %v1690, %v1692
        %v1698 = vmin.f32 %v1694, %v1696
        %v1699 = vmin.f32 %v1697, %v1698
        %v1700 = vrot.slane %v1699, 4
        %v1701 = vmin.f32 %v1699, %v1700
        %v1702 = vrot.slane %v1701, 2
        %v1703 = vmin.f32 %v1701, %v1702
        %v1704 = vrot.slane %v1703, 1
        %v1705 = vmin.f32 %v1703, %v1704
        %v1706 = vmin.f32 %v1572, %v1705
        %1707 = vst.msk [vmem:[#allocation4 + $0x5] sm:$0x1] %vm666, %v1706
        %v1708 = vld [vmem:[#allocation5 + $0x5] sm:$0x1]
        %v1709 = vsel %vm1637, %v279, -inf
        %v1710 = vsel %vm1638, %v280, -inf
        %v1711 = vsel %vm1639, %v281, -inf
        %v1712 = vsel %vm1640, %v282, -inf
        %v1713 = vsel %vm1641, %v283, -inf
        %v1714 = vsel %vm1642, %v284, -inf
        %v1715 = vsel %vm1643, %v285, -inf
        %v1716 = vsel %vm1644, %v286, -inf
        %v1717 = vsel %vm1645, %v287, -inf
        %v1718 = vsel %vm1646, %v288, -inf
        %v1719 = vsel %vm1647, %v289, -inf
        %v1720 = vsel %vm1648, %v290, -inf
        %v1721 = vsel %vm1649, %v291, -inf
        %v1722 = vsel %vm1650, %v292, -inf
        %v1723 = vsel %vm1651, %v293, -inf
        %v1724 = vsel %vm1652, %v294, -inf
        %v1725 = vsel %vm405, %v1709, -inf
        %v1726 = vsel %vm405, %v1710, -inf
        %v1727 = vsel %vm405, %v1711, -inf
        %v1728 = vsel %vm405, %v1712, -inf
        %v1729 = vsel %vm405, %v1713, -inf
        %v1730 = vmax.f32 %v1725, %v1729
        %v1731 = vsel %vm405, %v1714, -inf
        %v1732 = vmax.f32 %v1726, %v1731
        %v1733 = vsel %vm405, %v1715, -inf
        %v1734 = vmax.f32 %v1727, %v1733
        %v1735 = vsel %vm405, %v1716, -inf
        %v1736 = vmax.f32 %v1728, %v1735
        %v1737 = vsel %vm405, %v1717, -inf
        %v1738 = vmax.f32 %v1730, %v1737
        %v1739 = vsel %vm405, %v1718, -inf
        %v1740 = vmax.f32 %v1732, %v1739
        %v1741 = vsel %vm405, %v1719, -inf
        %v1742 = vmax.f32 %v1734, %v1741
        %v1743 = vsel %vm405, %v1720, -inf
        %v1744 = vmax.f32 %v1736, %v1743
        %v1745 = vsel %vm405, %v1721, -inf
        %v1746 = vmax.f32 %v1738, %v1745
        %v1747 = vsel %vm405, %v1722, -inf
        %v1748 = vmax.f32 %v1740, %v1747
        %v1749 = vsel %vm405, %v1723, -inf
        %v1750 = vmax.f32 %v1742, %v1749
        %v1751 = vsel %vm405, %v1724, -inf
        %v1752 = vmax.f32 %v1744, %v1751
        %v1753 = vmax.f32 %v1746, %v1748
        %v1754 = vmax.f32 %v1750, %v1752
        %v1755 = vmax.f32 %v1753, %v1754
        %v1756 = vrot.slane %v1755, 4
        %v1757 = vmax.f32 %v1755, %v1756
        %v1758 = vrot.slane %v1757, 2
        %v1759 = vmax.f32 %v1757, %v1758
        %v1760 = vrot.slane %v1759, 1
        %v1761 = vmax.f32 %v1759, %v1760
        %v1762 = vmax.f32 %v1708, %v1761
        %1763 = vst.msk [vmem:[#allocation5 + $0x5] sm:$0x1] %vm666, %v1762
        %vm1764 = vcmp.eq.s32.totalorder %v296, 6
        %vm1765 = vcmp.eq.s32.totalorder %v297, 6
        %vm1766 = vcmp.eq.s32.totalorder %v298, 6
        %vm1767 = vcmp.eq.s32.totalorder %v299, 6
        %vm1768 = vcmp.eq.s32.totalorder %v300, 6
        %vm1769 = vcmp.eq.s32.totalorder %v301, 6
        %vm1770 = vcmp.eq.s32.totalorder %v302, 6
        %vm1771 = vcmp.eq.s32.totalorder %v303, 6
        %vm1772 = vcmp.eq.s32.totalorder %v304, 6
        %vm1773 = vcmp.eq.s32.totalorder %v305, 6
        %vm1774 = vcmp.eq.s32.totalorder %v306, 6
        %vm1775 = vcmp.eq.s32.totalorder %v307, 6
        %vm1776 = vcmp.eq.s32.totalorder %v308, 6
        %vm1777 = vcmp.eq.s32.totalorder %v309, 6
        %vm1778 = vcmp.eq.s32.totalorder %v310, 6
        %vm1779 = vcmp.eq.s32.totalorder %v311, 6
        %v1780 = vld [vmem:[#allocation4 + $0x6] sm:$0x1]
        %v1781 = vsel %vm1764, 1, 0
        %v1782 = vsel %vm1765, 1, 0
        %v1783 = vsel %vm1766, 1, 0
        %v1784 = vsel %vm1767, 1, 0
        %v1785 = vsel %vm1768, 1, 0
        %v1786 = vsel %vm1769, 1, 0
        %v1787 = vsel %vm1770, 1, 0
        %v1788 = vsel %vm1771, 1, 0
        %v1789 = vsel %vm1772, 1, 0
        %v1790 = vsel %vm1773, 1, 0
        %v1791 = vsel %vm1774, 1, 0
        %v1792 = vsel %vm1775, 1, 0
        %v1793 = vsel %vm1776, 1, 0
        %v1794 = vsel %vm1777, 1, 0
        %v1795 = vsel %vm1778, 1, 0
        %v1796 = vsel %vm1779, 1, 0
        %1797 = vset.pattern.permute.xlu0 0
        %1798 = vperm.xlu0 %1797, %v1781
        %v1799 = vpop.permute.xlu0 %1798
        %1800 = vset.pattern.permute.xlu0 0
        %1801 = vperm.xlu0 %1800, %v1782
        %v1802 = vpop.permute.xlu0 %1801
        %1803 = vset.pattern.permute.xlu0 0
        %1804 = vperm.xlu0 %1803, %v1783
        %v1805 = vpop.permute.xlu0 %1804
        %1806 = vset.pattern.permute.xlu0 0
        %1807 = vperm.xlu0 %1806, %v1784
        %v1808 = vpop.permute.xlu0 %1807
        %1809 = vset.pattern.permute.xlu0 0
        %1810 = vperm.xlu0 %1809, %v1785
        %v1811 = vpop.permute.xlu0 %1810
        %1812 = vset.pattern.permute.xlu0 0
        %1813 = vperm.xlu0 %1812, %v1786
        %v1814 = vpop.permute.xlu0 %1813
        %1815 = vset.pattern.permute.xlu0 0
        %1816 = vperm.xlu0 %1815, %v1787
        %v1817 = vpop.permute.xlu0 %1816
        %1818 = vset.pattern.permute.xlu0 0
        %1819 = vperm.xlu0 %1818, %v1788
        %v1820 = vpop.permute.xlu0 %1819
        %1821 = vset.pattern.permute.xlu0 0
        %1822 = vperm.xlu0 %1821, %v1789
        %v1823 = vpop.permute.xlu0 %1822
        %1824 = vset.pattern.permute.xlu0 0
        %1825 = vperm.xlu0 %1824, %v1790
        %v1826 = vpop.permute.xlu0 %1825
        %1827 = vset.pattern.permute.xlu0 0
        %1828 = vperm.xlu0 %1827, %v1791
        %v1829 = vpop.permute.xlu0 %1828
        %1830 = vset.pattern.permute.xlu0 0
        %1831 = vperm.xlu0 %1830, %v1792
        %v1832 = vpop.permute.xlu0 %1831
        %1833 = vset.pattern.permute.xlu0 0
        %1834 = vperm.xlu0 %1833, %v1793
        %v1835 = vpop.permute.xlu0 %1834
        %1836 = vset.pattern.permute.xlu0 0
        %1837 = vperm.xlu0 %1836, %v1794
        %v1838 = vpop.permute.xlu0 %1837
        %1839 = vset.pattern.permute.xlu0 0
        %1840 = vperm.xlu0 %1839, %v1795
        %v1841 = vpop.permute.xlu0 %1840
        %1842 = vset.pattern.permute.xlu0 0
        %1843 = vperm.xlu0 %1842, %v1796
        %v1844 = vpop.permute.xlu0 %1843
        %vm1845 = vcmp.eq.s32.totalorder %v1799, 1
        %vm1846 = vcmp.eq.s32.totalorder %v1802, 1
        %vm1847 = vcmp.eq.s32.totalorder %v1805, 1
        %vm1848 = vcmp.eq.s32.totalorder %v1808, 1
        %vm1849 = vcmp.eq.s32.totalorder %v1811, 1
        %vm1850 = vcmp.eq.s32.totalorder %v1814, 1
        %vm1851 = vcmp.eq.s32.totalorder %v1817, 1
        %vm1852 = vcmp.eq.s32.totalorder %v1820, 1
        %vm1853 = vcmp.eq.s32.totalorder %v1823, 1
        %vm1854 = vcmp.eq.s32.totalorder %v1826, 1
        %vm1855 = vcmp.eq.s32.totalorder %v1829, 1
        %vm1856 = vcmp.eq.s32.totalorder %v1832, 1
        %vm1857 = vcmp.eq.s32.totalorder %v1835, 1
        %vm1858 = vcmp.eq.s32.totalorder %v1838, 1
        %vm1859 = vcmp.eq.s32.totalorder %v1841, 1
        %vm1860 = vcmp.eq.s32.totalorder %v1844, 1
        %v1861 = vsel %vm1845, %v279, inf
        %v1862 = vsel %vm1846, %v280, inf
        %v1863 = vsel %vm1847, %v281, inf
        %v1864 = vsel %vm1848, %v282, inf
        %v1865 = vsel %vm1849, %v283, inf
        %v1866 = vsel %vm1850, %v284, inf
        %v1867 = vsel %vm1851, %v285, inf
        %v1868 = vsel %vm1852, %v286, inf
        %v1869 = vsel %vm1853, %v287, inf
        %v1870 = vsel %vm1854, %v288, inf
        %v1871 = vsel %vm1855, %v289, inf
        %v1872 = vsel %vm1856, %v290, inf
        %v1873 = vsel %vm1857, %v291, inf
        %v1874 = vsel %vm1858, %v292, inf
        %v1875 = vsel %vm1859, %v293, inf
        %v1876 = vsel %vm1860, %v294, inf
        %v1877 = vsel %vm405, %v1861, inf
        %v1878 = vsel %vm405, %v1862, inf
        %v1879 = vsel %vm405, %v1863, inf
        %v1880 = vsel %vm405, %v1864, inf
        %v1881 = vsel %vm405, %v1865, inf
        %v1882 = vmin.f32 %v1877, %v1881
        %v1883 = vsel %vm405, %v1866, inf
        %v1884 = vmin.f32 %v1878, %v1883
        %v1885 = vsel %vm405, %v1867, inf
        %v1886 = vmin.f32 %v1879, %v1885
        %v1887 = vsel %vm405, %v1868, inf
        %v1888 = vmin.f32 %v1880, %v1887
        %v1889 = vsel %vm405, %v1869, inf
        %v1890 = vmin.f32 %v1882, %v1889
        %v1891 = vsel %vm405, %v1870, inf
        %v1892 = vmin.f32 %v1884, %v1891
        %v1893 = vsel %vm405, %v1871, inf
        %v1894 = vmin.f32 %v1886, %v1893
        %v1895 = vsel %vm405, %v1872, inf
        %v1896 = vmin.f32 %v1888, %v1895
        %v1897 = vsel %vm405, %v1873, inf
        %v1898 = vmin.f32 %v1890, %v1897
        %v1899 = vsel %vm405, %v1874, inf
        %v1900 = vmin.f32 %v1892, %v1899
        %v1901 = vsel %vm405, %v1875, inf
        %v1902 = vmin.f32 %v1894, %v1901
        %v1903 = vsel %vm405, %v1876, inf
        %v1904 = vmin.f32 %v1896, %v1903
        %v1905 = vmin.f32 %v1898, %v1900
        %v1906 = vmin.f32 %v1902, %v1904
        %v1907 = vmin.f32 %v1905, %v1906
        %v1908 = vrot.slane %v1907, 4
        %v1909 = vmin.f32 %v1907, %v1908
        %v1910 = vrot.slane %v1909, 2
        %v1911 = vmin.f32 %v1909, %v1910
        %v1912 = vrot.slane %v1911, 1
        %v1913 = vmin.f32 %v1911, %v1912
        %v1914 = vmin.f32 %v1780, %v1913
        %1915 = vst.msk [vmem:[#allocation4 + $0x6] sm:$0x1] %vm666, %v1914
        %v1916 = vld [vmem:[#allocation5 + $0x6] sm:$0x1]
        %v1917 = vsel %vm1845, %v279, -inf
        %v1918 = vsel %vm1846, %v280, -inf
        %v1919 = vsel %vm1847, %v281, -inf
        %v1920 = vsel %vm1848, %v282, -inf
        %v1921 = vsel %vm1849, %v283, -inf
        %v1922 = vsel %vm1850, %v284, -inf
        %v1923 = vsel %vm1851, %v285, -inf
        %v1924 = vsel %vm1852, %v286, -inf
        %v1925 = vsel %vm1853, %v287, -inf
        %v1926 = vsel %vm1854, %v288, -inf
        %v1927 = vsel %vm1855, %v289, -inf
        %v1928 = vsel %vm1856, %v290, -inf
        %v1929 = vsel %vm1857, %v291, -inf
        %v1930 = vsel %vm1858, %v292, -inf
        %v1931 = vsel %vm1859, %v293, -inf
        %v1932 = vsel %vm1860, %v294, -inf
        %v1933 = vsel %vm405, %v1917, -inf
        %v1934 = vsel %vm405, %v1918, -inf
        %v1935 = vsel %vm405, %v1919, -inf
        %v1936 = vsel %vm405, %v1920, -inf
        %v1937 = vsel %vm405, %v1921, -inf
        %v1938 = vmax.f32 %v1933, %v1937
        %v1939 = vsel %vm405, %v1922, -inf
        %v1940 = vmax.f32 %v1934, %v1939
        %v1941 = vsel %vm405, %v1923, -inf
        %v1942 = vmax.f32 %v1935, %v1941
        %v1943 = vsel %vm405, %v1924, -inf
        %v1944 = vmax.f32 %v1936, %v1943
        %v1945 = vsel %vm405, %v1925, -inf
        %v1946 = vmax.f32 %v1938, %v1945
        %v1947 = vsel %vm405, %v1926, -inf
        %v1948 = vmax.f32 %v1940, %v1947
        %v1949 = vsel %vm405, %v1927, -inf
        %v1950 = vmax.f32 %v1942, %v1949
        %v1951 = vsel %vm405, %v1928, -inf
        %v1952 = vmax.f32 %v1944, %v1951
        %v1953 = vsel %vm405, %v1929, -inf
        %v1954 = vmax.f32 %v1946, %v1953
        %v1955 = vsel %vm405, %v1930, -inf
        %v1956 = vmax.f32 %v1948, %v1955
        %v1957 = vsel %vm405, %v1931, -inf
        %v1958 = vmax.f32 %v1950, %v1957
        %v1959 = vsel %vm405, %v1932, -inf
        %v1960 = vmax.f32 %v1952, %v1959
        %v1961 = vmax.f32 %v1954, %v1956
        %v1962 = vmax.f32 %v1958, %v1960
        %v1963 = vmax.f32 %v1961, %v1962
        %v1964 = vrot.slane %v1963, 4
        %v1965 = vmax.f32 %v1963, %v1964
        %v1966 = vrot.slane %v1965, 2
        %v1967 = vmax.f32 %v1965, %v1966
        %v1968 = vrot.slane %v1967, 1
        %v1969 = vmax.f32 %v1967, %v1968
        %v1970 = vmax.f32 %v1916, %v1969
        %1971 = vst.msk [vmem:[#allocation5 + $0x6] sm:$0x1] %vm666, %v1970
        %vm1972 = vcmp.eq.s32.totalorder %v296, 7
        %vm1973 = vcmp.eq.s32.totalorder %v297, 7
        %vm1974 = vcmp.eq.s32.totalorder %v298, 7
        %vm1975 = vcmp.eq.s32.totalorder %v299, 7
        %vm1976 = vcmp.eq.s32.totalorder %v300, 7
        %vm1977 = vcmp.eq.s32.totalorder %v301, 7
        %vm1978 = vcmp.eq.s32.totalorder %v302, 7
        %vm1979 = vcmp.eq.s32.totalorder %v303, 7
        %vm1980 = vcmp.eq.s32.totalorder %v304, 7
        %vm1981 = vcmp.eq.s32.totalorder %v305, 7
        %vm1982 = vcmp.eq.s32.totalorder %v306, 7
        %vm1983 = vcmp.eq.s32.totalorder %v307, 7
        %vm1984 = vcmp.eq.s32.totalorder %v308, 7
        %vm1985 = vcmp.eq.s32.totalorder %v309, 7
        %vm1986 = vcmp.eq.s32.totalorder %v310, 7
        %vm1987 = vcmp.eq.s32.totalorder %v311, 7
        %v1988 = vld [vmem:[#allocation4 + $0x7] sm:$0x1]
        %v1989 = vsel %vm1972, 1, 0
        %v1990 = vsel %vm1973, 1, 0
        %v1991 = vsel %vm1974, 1, 0
        %v1992 = vsel %vm1975, 1, 0
        %v1993 = vsel %vm1976, 1, 0
        %v1994 = vsel %vm1977, 1, 0
        %v1995 = vsel %vm1978, 1, 0
        %v1996 = vsel %vm1979, 1, 0
        %v1997 = vsel %vm1980, 1, 0
        %v1998 = vsel %vm1981, 1, 0
        %v1999 = vsel %vm1982, 1, 0
        %v2000 = vsel %vm1983, 1, 0
        %v2001 = vsel %vm1984, 1, 0
        %v2002 = vsel %vm1985, 1, 0
        %v2003 = vsel %vm1986, 1, 0
        %v2004 = vsel %vm1987, 1, 0
        %2005 = vset.pattern.permute.xlu0 0
        %2006 = vperm.xlu0 %2005, %v1989
        %v2007 = vpop.permute.xlu0 %2006
        %2008 = vset.pattern.permute.xlu0 0
        %2009 = vperm.xlu0 %2008, %v1990
        %v2010 = vpop.permute.xlu0 %2009
        %2011 = vset.pattern.permute.xlu0 0
        %2012 = vperm.xlu0 %2011, %v1991
        %v2013 = vpop.permute.xlu0 %2012
        %2014 = vset.pattern.permute.xlu0 0
        %2015 = vperm.xlu0 %2014, %v1992
        %v2016 = vpop.permute.xlu0 %2015
        %2017 = vset.pattern.permute.xlu0 0
        %2018 = vperm.xlu0 %2017, %v1993
        %v2019 = vpop.permute.xlu0 %2018
        %2020 = vset.pattern.permute.xlu0 0
        %2021 = vperm.xlu0 %2020, %v1994
        %v2022 = vpop.permute.xlu0 %2021
        %2023 = vset.pattern.permute.xlu0 0
        %2024 = vperm.xlu0 %2023, %v1995
        %v2025 = vpop.permute.xlu0 %2024
        %2026 = vset.pattern.permute.xlu0 0
        %2027 = vperm.xlu0 %2026, %v1996
        %v2028 = vpop.permute.xlu0 %2027
        %2029 = vset.pattern.permute.xlu0 0
        %2030 = vperm.xlu0 %2029, %v1997
        %v2031 = vpop.permute.xlu0 %2030
        %2032 = vset.pattern.permute.xlu0 0
        %2033 = vperm.xlu0 %2032, %v1998
        %v2034 = vpop.permute.xlu0 %2033
        %2035 = vset.pattern.permute.xlu0 0
        %2036 = vperm.xlu0 %2035, %v1999
        %v2037 = vpop.permute.xlu0 %2036
        %2038 = vset.pattern.permute.xlu0 0
        %2039 = vperm.xlu0 %2038, %v2000
        %v2040 = vpop.permute.xlu0 %2039
        %2041 = vset.pattern.permute.xlu0 0
        %2042 = vperm.xlu0 %2041, %v2001
        %v2043 = vpop.permute.xlu0 %2042
        %2044 = vset.pattern.permute.xlu0 0
        %2045 = vperm.xlu0 %2044, %v2002
        %v2046 = vpop.permute.xlu0 %2045
        %2047 = vset.pattern.permute.xlu0 0
        %2048 = vperm.xlu0 %2047, %v2003
        %v2049 = vpop.permute.xlu0 %2048
        %2050 = vset.pattern.permute.xlu0 0
        %2051 = vperm.xlu0 %2050, %v2004
        %v2052 = vpop.permute.xlu0 %2051
        %vm2053 = vcmp.eq.s32.totalorder %v2007, 1
        %vm2054 = vcmp.eq.s32.totalorder %v2010, 1
        %vm2055 = vcmp.eq.s32.totalorder %v2013, 1
        %vm2056 = vcmp.eq.s32.totalorder %v2016, 1
        %vm2057 = vcmp.eq.s32.totalorder %v2019, 1
        %vm2058 = vcmp.eq.s32.totalorder %v2022, 1
        %vm2059 = vcmp.eq.s32.totalorder %v2025, 1
        %vm2060 = vcmp.eq.s32.totalorder %v2028, 1
        %vm2061 = vcmp.eq.s32.totalorder %v2031, 1
        %vm2062 = vcmp.eq.s32.totalorder %v2034, 1
        %vm2063 = vcmp.eq.s32.totalorder %v2037, 1
        %vm2064 = vcmp.eq.s32.totalorder %v2040, 1
        %vm2065 = vcmp.eq.s32.totalorder %v2043, 1
        %vm2066 = vcmp.eq.s32.totalorder %v2046, 1
        %vm2067 = vcmp.eq.s32.totalorder %v2049, 1
        %vm2068 = vcmp.eq.s32.totalorder %v2052, 1
        %v2069 = vsel %vm2053, %v279, inf
        %v2070 = vsel %vm2054, %v280, inf
        %v2071 = vsel %vm2055, %v281, inf
        %v2072 = vsel %vm2056, %v282, inf
        %v2073 = vsel %vm2057, %v283, inf
        %v2074 = vsel %vm2058, %v284, inf
        %v2075 = vsel %vm2059, %v285, inf
        %v2076 = vsel %vm2060, %v286, inf
        %v2077 = vsel %vm2061, %v287, inf
        %v2078 = vsel %vm2062, %v288, inf
        %v2079 = vsel %vm2063, %v289, inf
        %v2080 = vsel %vm2064, %v290, inf
        %v2081 = vsel %vm2065, %v291, inf
        %v2082 = vsel %vm2066, %v292, inf
        %v2083 = vsel %vm2067, %v293, inf
        %v2084 = vsel %vm2068, %v294, inf
        %v2085 = vsel %vm405, %v2069, inf
        %v2086 = vsel %vm405, %v2070, inf
        %v2087 = vsel %vm405, %v2071, inf
        %v2088 = vsel %vm405, %v2072, inf
        %v2089 = vsel %vm405, %v2073, inf
        %v2090 = vmin.f32 %v2085, %v2089
        %v2091 = vsel %vm405, %v2074, inf
        %v2092 = vmin.f32 %v2086, %v2091
        %v2093 = vsel %vm405, %v2075, inf
        %v2094 = vmin.f32 %v2087, %v2093
        %v2095 = vsel %vm405, %v2076, inf
        %v2096 = vmin.f32 %v2088, %v2095
        %v2097 = vsel %vm405, %v2077, inf
        %v2098 = vmin.f32 %v2090, %v2097
        %v2099 = vsel %vm405, %v2078, inf
        %v2100 = vmin.f32 %v2092, %v2099
        %v2101 = vsel %vm405, %v2079, inf
        %v2102 = vmin.f32 %v2094, %v2101
        %v2103 = vsel %vm405, %v2080, inf
        %v2104 = vmin.f32 %v2096, %v2103
        %v2105 = vsel %vm405, %v2081, inf
        %v2106 = vmin.f32 %v2098, %v2105
        %v2107 = vsel %vm405, %v2082, inf
        %v2108 = vmin.f32 %v2100, %v2107
        %v2109 = vsel %vm405, %v2083, inf
        %v2110 = vmin.f32 %v2102, %v2109
        %v2111 = vsel %vm405, %v2084, inf
        %v2112 = vmin.f32 %v2104, %v2111
        %v2113 = vmin.f32 %v2106, %v2108
        %v2114 = vmin.f32 %v2110, %v2112
        %v2115 = vmin.f32 %v2113, %v2114
        %v2116 = vrot.slane %v2115, 4
        %v2117 = vmin.f32 %v2115, %v2116
        %v2118 = vrot.slane %v2117, 2
        %v2119 = vmin.f32 %v2117, %v2118
        %v2120 = vrot.slane %v2119, 1
        %v2121 = vmin.f32 %v2119, %v2120
        %v2122 = vmin.f32 %v1988, %v2121
        %2123 = vst.msk [vmem:[#allocation4 + $0x7] sm:$0x1] %vm666, %v2122
        %v2124 = vld [vmem:[#allocation5 + $0x7] sm:$0x1]
        %v2125 = vsel %vm2053, %v279, -inf
        %v2126 = vsel %vm2054, %v280, -inf
        %v2127 = vsel %vm2055, %v281, -inf
        %v2128 = vsel %vm2056, %v282, -inf
        %v2129 = vsel %vm2057, %v283, -inf
        %v2130 = vsel %vm2058, %v284, -inf
        %v2131 = vsel %vm2059, %v285, -inf
        %v2132 = vsel %vm2060, %v286, -inf
        %v2133 = vsel %vm2061, %v287, -inf
        %v2134 = vsel %vm2062, %v288, -inf
        %v2135 = vsel %vm2063, %v289, -inf
        %v2136 = vsel %vm2064, %v290, -inf
        %v2137 = vsel %vm2065, %v291, -inf
        %v2138 = vsel %vm2066, %v292, -inf
        %v2139 = vsel %vm2067, %v293, -inf
        %v2140 = vsel %vm2068, %v294, -inf
        %v2141 = vsel %vm405, %v2125, -inf
        %v2142 = vsel %vm405, %v2126, -inf
        %v2143 = vsel %vm405, %v2127, -inf
        %v2144 = vsel %vm405, %v2128, -inf
        %v2145 = vsel %vm405, %v2129, -inf
        %v2146 = vmax.f32 %v2141, %v2145
        %v2147 = vsel %vm405, %v2130, -inf
        %v2148 = vmax.f32 %v2142, %v2147
        %v2149 = vsel %vm405, %v2131, -inf
        %v2150 = vmax.f32 %v2143, %v2149
        %v2151 = vsel %vm405, %v2132, -inf
        %v2152 = vmax.f32 %v2144, %v2151
        %v2153 = vsel %vm405, %v2133, -inf
        %v2154 = vmax.f32 %v2146, %v2153
        %v2155 = vsel %vm405, %v2134, -inf
        %v2156 = vmax.f32 %v2148, %v2155
        %v2157 = vsel %vm405, %v2135, -inf
        %v2158 = vmax.f32 %v2150, %v2157
        %v2159 = vsel %vm405, %v2136, -inf
        %v2160 = vmax.f32 %v2152, %v2159
        %v2161 = vsel %vm405, %v2137, -inf
        %v2162 = vmax.f32 %v2154, %v2161
        %v2163 = vsel %vm405, %v2138, -inf
        %v2164 = vmax.f32 %v2156, %v2163
        %v2165 = vsel %vm405, %v2139, -inf
        %v2166 = vmax.f32 %v2158, %v2165
        %v2167 = vsel %vm405, %v2140, -inf
        %v2168 = vmax.f32 %v2160, %v2167
        %v2169 = vmax.f32 %v2162, %v2164
        %v2170 = vmax.f32 %v2166, %v2168
        %v2171 = vmax.f32 %v2169, %v2170
        %v2172 = vrot.slane %v2171, 4
        %v2173 = vmax.f32 %v2171, %v2172
        %v2174 = vrot.slane %v2173, 2
        %v2175 = vmax.f32 %v2173, %v2174
        %v2176 = vrot.slane %v2175, 1
        %v2177 = vmax.f32 %v2175, %v2176
        %v2178 = vmax.f32 %v2124, %v2177
        %2179 = vst.msk [vmem:[#allocation5 + $0x7] sm:$0x1] %vm666, %v2178
        %vm2180 = vcmp.eq.s32.totalorder %v296, 8
        %vm2181 = vcmp.eq.s32.totalorder %v297, 8
        %vm2182 = vcmp.eq.s32.totalorder %v298, 8
        %vm2183 = vcmp.eq.s32.totalorder %v299, 8
        %vm2184 = vcmp.eq.s32.totalorder %v300, 8
        %vm2185 = vcmp.eq.s32.totalorder %v301, 8
        %vm2186 = vcmp.eq.s32.totalorder %v302, 8
        %vm2187 = vcmp.eq.s32.totalorder %v303, 8
        %vm2188 = vcmp.eq.s32.totalorder %v304, 8
        %vm2189 = vcmp.eq.s32.totalorder %v305, 8
        %vm2190 = vcmp.eq.s32.totalorder %v306, 8
        %vm2191 = vcmp.eq.s32.totalorder %v307, 8
        %vm2192 = vcmp.eq.s32.totalorder %v308, 8
        %vm2193 = vcmp.eq.s32.totalorder %v309, 8
        %vm2194 = vcmp.eq.s32.totalorder %v310, 8
        %vm2195 = vcmp.eq.s32.totalorder %v311, 8
        %v2196 = vld [vmem:[#allocation4 + $0x8] sm:$0x1]
        %v2197 = vsel %vm2180, 1, 0
        %v2198 = vsel %vm2181, 1, 0
        %v2199 = vsel %vm2182, 1, 0
        %v2200 = vsel %vm2183, 1, 0
        %v2201 = vsel %vm2184, 1, 0
        %v2202 = vsel %vm2185, 1, 0
        %v2203 = vsel %vm2186, 1, 0
        %v2204 = vsel %vm2187, 1, 0
        %v2205 = vsel %vm2188, 1, 0
        %v2206 = vsel %vm2189, 1, 0
        %v2207 = vsel %vm2190, 1, 0
        %v2208 = vsel %vm2191, 1, 0
        %v2209 = vsel %vm2192, 1, 0
        %v2210 = vsel %vm2193, 1, 0
        %v2211 = vsel %vm2194, 1, 0
        %v2212 = vsel %vm2195, 1, 0
        %2213 = vset.pattern.permute.xlu0 0
        %2214 = vperm.xlu0 %2213, %v2197
        %v2215 = vpop.permute.xlu0 %2214
        %2216 = vset.pattern.permute.xlu0 0
        %2217 = vperm.xlu0 %2216, %v2198
        %v2218 = vpop.permute.xlu0 %2217
        %2219 = vset.pattern.permute.xlu0 0
        %2220 = vperm.xlu0 %2219, %v2199
        %v2221 = vpop.permute.xlu0 %2220
        %2222 = vset.pattern.permute.xlu0 0
        %2223 = vperm.xlu0 %2222, %v2200
        %v2224 = vpop.permute.xlu0 %2223
        %2225 = vset.pattern.permute.xlu0 0
        %2226 = vperm.xlu0 %2225, %v2201
        %v2227 = vpop.permute.xlu0 %2226
        %2228 = vset.pattern.permute.xlu0 0
        %2229 = vperm.xlu0 %2228, %v2202
        %v2230 = vpop.permute.xlu0 %2229
        %2231 = vset.pattern.permute.xlu0 0
        %2232 = vperm.xlu0 %2231, %v2203
        %v2233 = vpop.permute.xlu0 %2232
        %2234 = vset.pattern.permute.xlu0 0
        %2235 = vperm.xlu0 %2234, %v2204
        %v2236 = vpop.permute.xlu0 %2235
        %2237 = vset.pattern.permute.xlu0 0
        %2238 = vperm.xlu0 %2237, %v2205
        %v2239 = vpop.permute.xlu0 %2238
        %2240 = vset.pattern.permute.xlu0 0
        %2241 = vperm.xlu0 %2240, %v2206
        %v2242 = vpop.permute.xlu0 %2241
        %2243 = vset.pattern.permute.xlu0 0
        %2244 = vperm.xlu0 %2243, %v2207
        %v2245 = vpop.permute.xlu0 %2244
        %2246 = vset.pattern.permute.xlu0 0
        %2247 = vperm.xlu0 %2246, %v2208
        %v2248 = vpop.permute.xlu0 %2247
        %2249 = vset.pattern.permute.xlu0 0
        %2250 = vperm.xlu0 %2249, %v2209
        %v2251 = vpop.permute.xlu0 %2250
        %2252 = vset.pattern.permute.xlu0 0
        %2253 = vperm.xlu0 %2252, %v2210
        %v2254 = vpop.permute.xlu0 %2253
        %2255 = vset.pattern.permute.xlu0 0
        %2256 = vperm.xlu0 %2255, %v2211
        %v2257 = vpop.permute.xlu0 %2256
        %2258 = vset.pattern.permute.xlu0 0
        %2259 = vperm.xlu0 %2258, %v2212
        %v2260 = vpop.permute.xlu0 %2259
        %vm2261 = vcmp.eq.s32.totalorder %v2215, 1
        %vm2262 = vcmp.eq.s32.totalorder %v2218, 1
        %vm2263 = vcmp.eq.s32.totalorder %v2221, 1
        %vm2264 = vcmp.eq.s32.totalorder %v2224, 1
        %vm2265 = vcmp.eq.s32.totalorder %v2227, 1
        %vm2266 = vcmp.eq.s32.totalorder %v2230, 1
        %vm2267 = vcmp.eq.s32.totalorder %v2233, 1
        %vm2268 = vcmp.eq.s32.totalorder %v2236, 1
        %vm2269 = vcmp.eq.s32.totalorder %v2239, 1
        %vm2270 = vcmp.eq.s32.totalorder %v2242, 1
        %vm2271 = vcmp.eq.s32.totalorder %v2245, 1
        %vm2272 = vcmp.eq.s32.totalorder %v2248, 1
        %vm2273 = vcmp.eq.s32.totalorder %v2251, 1
        %vm2274 = vcmp.eq.s32.totalorder %v2254, 1
        %vm2275 = vcmp.eq.s32.totalorder %v2257, 1
        %vm2276 = vcmp.eq.s32.totalorder %v2260, 1
        %v2277 = vsel %vm2261, %v279, inf
        %v2278 = vsel %vm2262, %v280, inf
        %v2279 = vsel %vm2263, %v281, inf
        %v2280 = vsel %vm2264, %v282, inf
        %v2281 = vsel %vm2265, %v283, inf
        %v2282 = vsel %vm2266, %v284, inf
        %v2283 = vsel %vm2267, %v285, inf
        %v2284 = vsel %vm2268, %v286, inf
        %v2285 = vsel %vm2269, %v287, inf
        %v2286 = vsel %vm2270, %v288, inf
        %v2287 = vsel %vm2271, %v289, inf
        %v2288 = vsel %vm2272, %v290, inf
        %v2289 = vsel %vm2273, %v291, inf
        %v2290 = vsel %vm2274, %v292, inf
        %v2291 = vsel %vm2275, %v293, inf
        %v2292 = vsel %vm2276, %v294, inf
        %v2293 = vsel %vm405, %v2277, inf
        %v2294 = vsel %vm405, %v2278, inf
        %v2295 = vsel %vm405, %v2279, inf
        %v2296 = vsel %vm405, %v2280, inf
        %v2297 = vsel %vm405, %v2281, inf
        %v2298 = vmin.f32 %v2293, %v2297
        %v2299 = vsel %vm405, %v2282, inf
        %v2300 = vmin.f32 %v2294, %v2299
        %v2301 = vsel %vm405, %v2283, inf
        %v2302 = vmin.f32 %v2295, %v2301
        %v2303 = vsel %vm405, %v2284, inf
        %v2304 = vmin.f32 %v2296, %v2303
        %v2305 = vsel %vm405, %v2285, inf
        %v2306 = vmin.f32 %v2298, %v2305
        %v2307 = vsel %vm405, %v2286, inf
        %v2308 = vmin.f32 %v2300, %v2307
        %v2309 = vsel %vm405, %v2287, inf
        %v2310 = vmin.f32 %v2302, %v2309
        %v2311 = vsel %vm405, %v2288, inf
        %v2312 = vmin.f32 %v2304, %v2311
        %v2313 = vsel %vm405, %v2289, inf
        %v2314 = vmin.f32 %v2306, %v2313
        %v2315 = vsel %vm405, %v2290, inf
        %v2316 = vmin.f32 %v2308, %v2315
        %v2317 = vsel %vm405, %v2291, inf
        %v2318 = vmin.f32 %v2310, %v2317
        %v2319 = vsel %vm405, %v2292, inf
        %v2320 = vmin.f32 %v2312, %v2319
        %v2321 = vmin.f32 %v2314, %v2316
        %v2322 = vmin.f32 %v2318, %v2320
        %v2323 = vmin.f32 %v2321, %v2322
        %v2324 = vrot.slane %v2323, 4
        %v2325 = vmin.f32 %v2323, %v2324
        %v2326 = vrot.slane %v2325, 2
        %v2327 = vmin.f32 %v2325, %v2326
        %v2328 = vrot.slane %v2327, 1
        %v2329 = vmin.f32 %v2327, %v2328
        %v2330 = vmin.f32 %v2196, %v2329
        %2331 = vst.msk [vmem:[#allocation4 + $0x8] sm:$0x1] %vm666, %v2330
        %v2332 = vld [vmem:[#allocation5 + $0x8] sm:$0x1]
        %v2333 = vsel %vm2261, %v279, -inf
        %v2334 = vsel %vm2262, %v280, -inf
        %v2335 = vsel %vm2263, %v281, -inf
        %v2336 = vsel %vm2264, %v282, -inf
        %v2337 = vsel %vm2265, %v283, -inf
        %v2338 = vsel %vm2266, %v284, -inf
        %v2339 = vsel %vm2267, %v285, -inf
        %v2340 = vsel %vm2268, %v286, -inf
        %v2341 = vsel %vm2269, %v287, -inf
        %v2342 = vsel %vm2270, %v288, -inf
        %v2343 = vsel %vm2271, %v289, -inf
        %v2344 = vsel %vm2272, %v290, -inf
        %v2345 = vsel %vm2273, %v291, -inf
        %v2346 = vsel %vm2274, %v292, -inf
        %v2347 = vsel %vm2275, %v293, -inf
        %v2348 = vsel %vm2276, %v294, -inf
        %v2349 = vsel %vm405, %v2333, -inf
        %v2350 = vsel %vm405, %v2334, -inf
        %v2351 = vsel %vm405, %v2335, -inf
        %v2352 = vsel %vm405, %v2336, -inf
        %v2353 = vsel %vm405, %v2337, -inf
        %v2354 = vmax.f32 %v2349, %v2353
        %v2355 = vsel %vm405, %v2338, -inf
        %v2356 = vmax.f32 %v2350, %v2355
        %v2357 = vsel %vm405, %v2339, -inf
        %v2358 = vmax.f32 %v2351, %v2357
        %v2359 = vsel %vm405, %v2340, -inf
        %v2360 = vmax.f32 %v2352, %v2359
        %v2361 = vsel %vm405, %v2341, -inf
        %v2362 = vmax.f32 %v2354, %v2361
        %v2363 = vsel %vm405, %v2342, -inf
        %v2364 = vmax.f32 %v2356, %v2363
        %v2365 = vsel %vm405, %v2343, -inf
        %v2366 = vmax.f32 %v2358, %v2365
        %v2367 = vsel %vm405, %v2344, -inf
        %v2368 = vmax.f32 %v2360, %v2367
        %v2369 = vsel %vm405, %v2345, -inf
        %v2370 = vmax.f32 %v2362, %v2369
        %v2371 = vsel %vm405, %v2346, -inf
        %v2372 = vmax.f32 %v2364, %v2371
        %v2373 = vsel %vm405, %v2347, -inf
        %v2374 = vmax.f32 %v2366, %v2373
        %v2375 = vsel %vm405, %v2348, -inf
        %v2376 = vmax.f32 %v2368, %v2375
        %v2377 = vmax.f32 %v2370, %v2372
        %v2378 = vmax.f32 %v2374, %v2376
        %v2379 = vmax.f32 %v2377, %v2378
        %v2380 = vrot.slane %v2379, 4
        %v2381 = vmax.f32 %v2379, %v2380
        %v2382 = vrot.slane %v2381, 2
        %v2383 = vmax.f32 %v2381, %v2382
        %v2384 = vrot.slane %v2383, 1
        %v2385 = vmax.f32 %v2383, %v2384
        %v2386 = vmax.f32 %v2332, %v2385
        %2387 = vst.msk [vmem:[#allocation5 + $0x8] sm:$0x1] %vm666, %v2386
        %vm2388 = vcmp.eq.s32.totalorder %v296, 9
        %vm2389 = vcmp.eq.s32.totalorder %v297, 9
        %vm2390 = vcmp.eq.s32.totalorder %v298, 9
        %vm2391 = vcmp.eq.s32.totalorder %v299, 9
        %vm2392 = vcmp.eq.s32.totalorder %v300, 9
        %vm2393 = vcmp.eq.s32.totalorder %v301, 9
        %vm2394 = vcmp.eq.s32.totalorder %v302, 9
        %vm2395 = vcmp.eq.s32.totalorder %v303, 9
        %vm2396 = vcmp.eq.s32.totalorder %v304, 9
        %vm2397 = vcmp.eq.s32.totalorder %v305, 9
        %vm2398 = vcmp.eq.s32.totalorder %v306, 9
        %vm2399 = vcmp.eq.s32.totalorder %v307, 9
        %vm2400 = vcmp.eq.s32.totalorder %v308, 9
        %vm2401 = vcmp.eq.s32.totalorder %v309, 9
        %vm2402 = vcmp.eq.s32.totalorder %v310, 9
        %vm2403 = vcmp.eq.s32.totalorder %v311, 9
        %v2404 = vld [vmem:[#allocation4 + $0x9] sm:$0x1]
        %v2405 = vsel %vm2388, 1, 0
        %v2406 = vsel %vm2389, 1, 0
        %v2407 = vsel %vm2390, 1, 0
        %v2408 = vsel %vm2391, 1, 0
        %v2409 = vsel %vm2392, 1, 0
        %v2410 = vsel %vm2393, 1, 0
        %v2411 = vsel %vm2394, 1, 0
        %v2412 = vsel %vm2395, 1, 0
        %v2413 = vsel %vm2396, 1, 0
        %v2414 = vsel %vm2397, 1, 0
        %v2415 = vsel %vm2398, 1, 0
        %v2416 = vsel %vm2399, 1, 0
        %v2417 = vsel %vm2400, 1, 0
        %v2418 = vsel %vm2401, 1, 0
        %v2419 = vsel %vm2402, 1, 0
        %v2420 = vsel %vm2403, 1, 0
        %2421 = vset.pattern.permute.xlu0 0
        %2422 = vperm.xlu0 %2421, %v2405
        %v2423 = vpop.permute.xlu0 %2422
        %2424 = vset.pattern.permute.xlu0 0
        %2425 = vperm.xlu0 %2424, %v2406
        %v2426 = vpop.permute.xlu0 %2425
        %2427 = vset.pattern.permute.xlu0 0
        %2428 = vperm.xlu0 %2427, %v2407
        %v2429 = vpop.permute.xlu0 %2428
        %2430 = vset.pattern.permute.xlu0 0
        %2431 = vperm.xlu0 %2430, %v2408
        %v2432 = vpop.permute.xlu0 %2431
        %2433 = vset.pattern.permute.xlu0 0
        %2434 = vperm.xlu0 %2433, %v2409
        %v2435 = vpop.permute.xlu0 %2434
        %2436 = vset.pattern.permute.xlu0 0
        %2437 = vperm.xlu0 %2436, %v2410
        %v2438 = vpop.permute.xlu0 %2437
        %2439 = vset.pattern.permute.xlu0 0
        %2440 = vperm.xlu0 %2439, %v2411
        %v2441 = vpop.permute.xlu0 %2440
        %2442 = vset.pattern.permute.xlu0 0
        %2443 = vperm.xlu0 %2442, %v2412
        %v2444 = vpop.permute.xlu0 %2443
        %2445 = vset.pattern.permute.xlu0 0
        %2446 = vperm.xlu0 %2445, %v2413
        %v2447 = vpop.permute.xlu0 %2446
        %2448 = vset.pattern.permute.xlu0 0
        %2449 = vperm.xlu0 %2448, %v2414
        %v2450 = vpop.permute.xlu0 %2449
        %2451 = vset.pattern.permute.xlu0 0
        %2452 = vperm.xlu0 %2451, %v2415
        %v2453 = vpop.permute.xlu0 %2452
        %2454 = vset.pattern.permute.xlu0 0
        %2455 = vperm.xlu0 %2454, %v2416
        %v2456 = vpop.permute.xlu0 %2455
        %2457 = vset.pattern.permute.xlu0 0
        %2458 = vperm.xlu0 %2457, %v2417
        %v2459 = vpop.permute.xlu0 %2458
        %2460 = vset.pattern.permute.xlu0 0
        %2461 = vperm.xlu0 %2460, %v2418
        %v2462 = vpop.permute.xlu0 %2461
        %2463 = vset.pattern.permute.xlu0 0
        %2464 = vperm.xlu0 %2463, %v2419
        %v2465 = vpop.permute.xlu0 %2464
        %2466 = vset.pattern.permute.xlu0 0
        %2467 = vperm.xlu0 %2466, %v2420
        %v2468 = vpop.permute.xlu0 %2467
        %vm2469 = vcmp.eq.s32.totalorder %v2423, 1
        %vm2470 = vcmp.eq.s32.totalorder %v2426, 1
        %vm2471 = vcmp.eq.s32.totalorder %v2429, 1
        %vm2472 = vcmp.eq.s32.totalorder %v2432, 1
        %vm2473 = vcmp.eq.s32.totalorder %v2435, 1
        %vm2474 = vcmp.eq.s32.totalorder %v2438, 1
        %vm2475 = vcmp.eq.s32.totalorder %v2441, 1
        %vm2476 = vcmp.eq.s32.totalorder %v2444, 1
        %vm2477 = vcmp.eq.s32.totalorder %v2447, 1
        %vm2478 = vcmp.eq.s32.totalorder %v2450, 1
        %vm2479 = vcmp.eq.s32.totalorder %v2453, 1
        %vm2480 = vcmp.eq.s32.totalorder %v2456, 1
        %vm2481 = vcmp.eq.s32.totalorder %v2459, 1
        %vm2482 = vcmp.eq.s32.totalorder %v2462, 1
        %vm2483 = vcmp.eq.s32.totalorder %v2465, 1
        %vm2484 = vcmp.eq.s32.totalorder %v2468, 1
        %v2485 = vsel %vm2469, %v279, inf
        %v2486 = vsel %vm2470, %v280, inf
        %v2487 = vsel %vm2471, %v281, inf
        %v2488 = vsel %vm2472, %v282, inf
        %v2489 = vsel %vm2473, %v283, inf
        %v2490 = vsel %vm2474, %v284, inf
        %v2491 = vsel %vm2475, %v285, inf
        %v2492 = vsel %vm2476, %v286, inf
        %v2493 = vsel %vm2477, %v287, inf
        %v2494 = vsel %vm2478, %v288, inf
        %v2495 = vsel %vm2479, %v289, inf
        %v2496 = vsel %vm2480, %v290, inf
        %v2497 = vsel %vm2481, %v291, inf
        %v2498 = vsel %vm2482, %v292, inf
        %v2499 = vsel %vm2483, %v293, inf
        %v2500 = vsel %vm2484, %v294, inf
        %v2501 = vsel %vm405, %v2485, inf
        %v2502 = vsel %vm405, %v2486, inf
        %v2503 = vsel %vm405, %v2487, inf
        %v2504 = vsel %vm405, %v2488, inf
        %v2505 = vsel %vm405, %v2489, inf
        %v2506 = vmin.f32 %v2501, %v2505
        %v2507 = vsel %vm405, %v2490, inf
        %v2508 = vmin.f32 %v2502, %v2507
        %v2509 = vsel %vm405, %v2491, inf
        %v2510 = vmin.f32 %v2503, %v2509
        %v2511 = vsel %vm405, %v2492, inf
        %v2512 = vmin.f32 %v2504, %v2511
        %v2513 = vsel %vm405, %v2493, inf
        %v2514 = vmin.f32 %v2506, %v2513
        %v2515 = vsel %vm405, %v2494, inf
        %v2516 = vmin.f32 %v2508, %v2515
        %v2517 = vsel %vm405, %v2495, inf
        %v2518 = vmin.f32 %v2510, %v2517
        %v2519 = vsel %vm405, %v2496, inf
        %v2520 = vmin.f32 %v2512, %v2519
        %v2521 = vsel %vm405, %v2497, inf
        %v2522 = vmin.f32 %v2514, %v2521
        %v2523 = vsel %vm405, %v2498, inf
        %v2524 = vmin.f32 %v2516, %v2523
        %v2525 = vsel %vm405, %v2499, inf
        %v2526 = vmin.f32 %v2518, %v2525
        %v2527 = vsel %vm405, %v2500, inf
        %v2528 = vmin.f32 %v2520, %v2527
        %v2529 = vmin.f32 %v2522, %v2524
        %v2530 = vmin.f32 %v2526, %v2528
        %v2531 = vmin.f32 %v2529, %v2530
        %v2532 = vrot.slane %v2531, 4
        %v2533 = vmin.f32 %v2531, %v2532
        %v2534 = vrot.slane %v2533, 2
        %v2535 = vmin.f32 %v2533, %v2534
        %v2536 = vrot.slane %v2535, 1
        %v2537 = vmin.f32 %v2535, %v2536
        %v2538 = vmin.f32 %v2404, %v2537
        %2539 = vst.msk [vmem:[#allocation4 + $0x9] sm:$0x1] %vm666, %v2538
        %v2540 = vld [vmem:[#allocation5 + $0x9] sm:$0x1]
        %v2541 = vsel %vm2469, %v279, -inf
        %v2542 = vsel %vm2470, %v280, -inf
        %v2543 = vsel %vm2471, %v281, -inf
        %v2544 = vsel %vm2472, %v282, -inf
        %v2545 = vsel %vm2473, %v283, -inf
        %v2546 = vsel %vm2474, %v284, -inf
        %v2547 = vsel %vm2475, %v285, -inf
        %v2548 = vsel %vm2476, %v286, -inf
        %v2549 = vsel %vm2477, %v287, -inf
        %v2550 = vsel %vm2478, %v288, -inf
        %v2551 = vsel %vm2479, %v289, -inf
        %v2552 = vsel %vm2480, %v290, -inf
        %v2553 = vsel %vm2481, %v291, -inf
        %v2554 = vsel %vm2482, %v292, -inf
        %v2555 = vsel %vm2483, %v293, -inf
        %v2556 = vsel %vm2484, %v294, -inf
        %v2557 = vsel %vm405, %v2541, -inf
        %v2558 = vsel %vm405, %v2542, -inf
        %v2559 = vsel %vm405, %v2543, -inf
        %v2560 = vsel %vm405, %v2544, -inf
        %v2561 = vsel %vm405, %v2545, -inf
        %v2562 = vmax.f32 %v2557, %v2561
        %v2563 = vsel %vm405, %v2546, -inf
        %v2564 = vmax.f32 %v2558, %v2563
        %v2565 = vsel %vm405, %v2547, -inf
        %v2566 = vmax.f32 %v2559, %v2565
        %v2567 = vsel %vm405, %v2548, -inf
        %v2568 = vmax.f32 %v2560, %v2567
        %v2569 = vsel %vm405, %v2549, -inf
        %v2570 = vmax.f32 %v2562, %v2569
        %v2571 = vsel %vm405, %v2550, -inf
        %v2572 = vmax.f32 %v2564, %v2571
        %v2573 = vsel %vm405, %v2551, -inf
        %v2574 = vmax.f32 %v2566, %v2573
        %v2575 = vsel %vm405, %v2552, -inf
        %v2576 = vmax.f32 %v2568, %v2575
        %v2577 = vsel %vm405, %v2553, -inf
        %v2578 = vmax.f32 %v2570, %v2577
        %v2579 = vsel %vm405, %v2554, -inf
        %v2580 = vmax.f32 %v2572, %v2579
        %v2581 = vsel %vm405, %v2555, -inf
        %v2582 = vmax.f32 %v2574, %v2581
        %v2583 = vsel %vm405, %v2556, -inf
        %v2584 = vmax.f32 %v2576, %v2583
        %v2585 = vmax.f32 %v2578, %v2580
        %v2586 = vmax.f32 %v2582, %v2584
        %v2587 = vmax.f32 %v2585, %v2586
        %v2588 = vrot.slane %v2587, 4
        %v2589 = vmax.f32 %v2587, %v2588
        %v2590 = vrot.slane %v2589, 2
        %v2591 = vmax.f32 %v2589, %v2590
        %v2592 = vrot.slane %v2591, 1
        %v2593 = vmax.f32 %v2591, %v2592
        %v2594 = vmax.f32 %v2540, %v2593
        %2595 = vst.msk [vmem:[#allocation5 + $0x9] sm:$0x1] %vm666, %v2594
        %vm2596 = vcmp.eq.s32.totalorder %v296, 10
        %vm2597 = vcmp.eq.s32.totalorder %v297, 10
        %vm2598 = vcmp.eq.s32.totalorder %v298, 10
        %vm2599 = vcmp.eq.s32.totalorder %v299, 10
        %vm2600 = vcmp.eq.s32.totalorder %v300, 10
        %vm2601 = vcmp.eq.s32.totalorder %v301, 10
        %vm2602 = vcmp.eq.s32.totalorder %v302, 10
        %vm2603 = vcmp.eq.s32.totalorder %v303, 10
        %vm2604 = vcmp.eq.s32.totalorder %v304, 10
        %vm2605 = vcmp.eq.s32.totalorder %v305, 10
        %vm2606 = vcmp.eq.s32.totalorder %v306, 10
        %vm2607 = vcmp.eq.s32.totalorder %v307, 10
        %vm2608 = vcmp.eq.s32.totalorder %v308, 10
        %vm2609 = vcmp.eq.s32.totalorder %v309, 10
        %vm2610 = vcmp.eq.s32.totalorder %v310, 10
        %vm2611 = vcmp.eq.s32.totalorder %v311, 10
        %v2612 = vld [vmem:[#allocation4 + $0xa] sm:$0x1]
        %v2613 = vsel %vm2596, 1, 0
        %v2614 = vsel %vm2597, 1, 0
        %v2615 = vsel %vm2598, 1, 0
        %v2616 = vsel %vm2599, 1, 0
        %v2617 = vsel %vm2600, 1, 0
        %v2618 = vsel %vm2601, 1, 0
        %v2619 = vsel %vm2602, 1, 0
        %v2620 = vsel %vm2603, 1, 0
        %v2621 = vsel %vm2604, 1, 0
        %v2622 = vsel %vm2605, 1, 0
        %v2623 = vsel %vm2606, 1, 0
        %v2624 = vsel %vm2607, 1, 0
        %v2625 = vsel %vm2608, 1, 0
        %v2626 = vsel %vm2609, 1, 0
        %v2627 = vsel %vm2610, 1, 0
        %v2628 = vsel %vm2611, 1, 0
        %2629 = vset.pattern.permute.xlu0 0
        %2630 = vperm.xlu0 %2629, %v2613
        %v2631 = vpop.permute.xlu0 %2630
        %2632 = vset.pattern.permute.xlu0 0
        %2633 = vperm.xlu0 %2632, %v2614
        %v2634 = vpop.permute.xlu0 %2633
        %2635 = vset.pattern.permute.xlu0 0
        %2636 = vperm.xlu0 %2635, %v2615
        %v2637 = vpop.permute.xlu0 %2636
        %2638 = vset.pattern.permute.xlu0 0
        %2639 = vperm.xlu0 %2638, %v2616
        %v2640 = vpop.permute.xlu0 %2639
        %2641 = vset.pattern.permute.xlu0 0
        %2642 = vperm.xlu0 %2641, %v2617
        %v2643 = vpop.permute.xlu0 %2642
        %2644 = vset.pattern.permute.xlu0 0
        %2645 = vperm.xlu0 %2644, %v2618
        %v2646 = vpop.permute.xlu0 %2645
        %2647 = vset.pattern.permute.xlu0 0
        %2648 = vperm.xlu0 %2647, %v2619
        %v2649 = vpop.permute.xlu0 %2648
        %2650 = vset.pattern.permute.xlu0 0
        %2651 = vperm.xlu0 %2650, %v2620
        %v2652 = vpop.permute.xlu0 %2651
        %2653 = vset.pattern.permute.xlu0 0
        %2654 = vperm.xlu0 %2653, %v2621
        %v2655 = vpop.permute.xlu0 %2654
        %2656 = vset.pattern.permute.xlu0 0
        %2657 = vperm.xlu0 %2656, %v2622
        %v2658 = vpop.permute.xlu0 %2657
        %2659 = vset.pattern.permute.xlu0 0
        %2660 = vperm.xlu0 %2659, %v2623
        %v2661 = vpop.permute.xlu0 %2660
        %2662 = vset.pattern.permute.xlu0 0
        %2663 = vperm.xlu0 %2662, %v2624
        %v2664 = vpop.permute.xlu0 %2663
        %2665 = vset.pattern.permute.xlu0 0
        %2666 = vperm.xlu0 %2665, %v2625
        %v2667 = vpop.permute.xlu0 %2666
        %2668 = vset.pattern.permute.xlu0 0
        %2669 = vperm.xlu0 %2668, %v2626
        %v2670 = vpop.permute.xlu0 %2669
        %2671 = vset.pattern.permute.xlu0 0
        %2672 = vperm.xlu0 %2671, %v2627
        %v2673 = vpop.permute.xlu0 %2672
        %2674 = vset.pattern.permute.xlu0 0
        %2675 = vperm.xlu0 %2674, %v2628
        %v2676 = vpop.permute.xlu0 %2675
        %vm2677 = vcmp.eq.s32.totalorder %v2631, 1
        %vm2678 = vcmp.eq.s32.totalorder %v2634, 1
        %vm2679 = vcmp.eq.s32.totalorder %v2637, 1
        %vm2680 = vcmp.eq.s32.totalorder %v2640, 1
        %vm2681 = vcmp.eq.s32.totalorder %v2643, 1
        %vm2682 = vcmp.eq.s32.totalorder %v2646, 1
        %vm2683 = vcmp.eq.s32.totalorder %v2649, 1
        %vm2684 = vcmp.eq.s32.totalorder %v2652, 1
        %vm2685 = vcmp.eq.s32.totalorder %v2655, 1
        %vm2686 = vcmp.eq.s32.totalorder %v2658, 1
        %vm2687 = vcmp.eq.s32.totalorder %v2661, 1
        %vm2688 = vcmp.eq.s32.totalorder %v2664, 1
        %vm2689 = vcmp.eq.s32.totalorder %v2667, 1
        %vm2690 = vcmp.eq.s32.totalorder %v2670, 1
        %vm2691 = vcmp.eq.s32.totalorder %v2673, 1
        %vm2692 = vcmp.eq.s32.totalorder %v2676, 1
        %v2693 = vsel %vm2677, %v279, inf
        %v2694 = vsel %vm2678, %v280, inf
        %v2695 = vsel %vm2679, %v281, inf
        %v2696 = vsel %vm2680, %v282, inf
        %v2697 = vsel %vm2681, %v283, inf
        %v2698 = vsel %vm2682, %v284, inf
        %v2699 = vsel %vm2683, %v285, inf
        %v2700 = vsel %vm2684, %v286, inf
        %v2701 = vsel %vm2685, %v287, inf
        %v2702 = vsel %vm2686, %v288, inf
        %v2703 = vsel %vm2687, %v289, inf
        %v2704 = vsel %vm2688, %v290, inf
        %v2705 = vsel %vm2689, %v291, inf
        %v2706 = vsel %vm2690, %v292, inf
        %v2707 = vsel %vm2691, %v293, inf
        %v2708 = vsel %vm2692, %v294, inf
        %v2709 = vsel %vm405, %v2693, inf
        %v2710 = vsel %vm405, %v2694, inf
        %v2711 = vsel %vm405, %v2695, inf
        %v2712 = vsel %vm405, %v2696, inf
        %v2713 = vsel %vm405, %v2697, inf
        %v2714 = vmin.f32 %v2709, %v2713
        %v2715 = vsel %vm405, %v2698, inf
        %v2716 = vmin.f32 %v2710, %v2715
        %v2717 = vsel %vm405, %v2699, inf
        %v2718 = vmin.f32 %v2711, %v2717
        %v2719 = vsel %vm405, %v2700, inf
        %v2720 = vmin.f32 %v2712, %v2719
        %v2721 = vsel %vm405, %v2701, inf
        %v2722 = vmin.f32 %v2714, %v2721
        %v2723 = vsel %vm405, %v2702, inf
        %v2724 = vmin.f32 %v2716, %v2723
        %v2725 = vsel %vm405, %v2703, inf
        %v2726 = vmin.f32 %v2718, %v2725
        %v2727 = vsel %vm405, %v2704, inf
        %v2728 = vmin.f32 %v2720, %v2727
        %v2729 = vsel %vm405, %v2705, inf
        %v2730 = vmin.f32 %v2722, %v2729
        %v2731 = vsel %vm405, %v2706, inf
        %v2732 = vmin.f32 %v2724, %v2731
        %v2733 = vsel %vm405, %v2707, inf
        %v2734 = vmin.f32 %v2726, %v2733
        %v2735 = vsel %vm405, %v2708, inf
        %v2736 = vmin.f32 %v2728, %v2735
        %v2737 = vmin.f32 %v2730, %v2732
        %v2738 = vmin.f32 %v2734, %v2736
        %v2739 = vmin.f32 %v2737, %v2738
        %v2740 = vrot.slane %v2739, 4
        %v2741 = vmin.f32 %v2739, %v2740
        %v2742 = vrot.slane %v2741, 2
        %v2743 = vmin.f32 %v2741, %v2742
        %v2744 = vrot.slane %v2743, 1
        %v2745 = vmin.f32 %v2743, %v2744
        %v2746 = vmin.f32 %v2612, %v2745
        %2747 = vst.msk [vmem:[#allocation4 + $0xa] sm:$0x1] %vm666, %v2746
        %v2748 = vld [vmem:[#allocation5 + $0xa] sm:$0x1]
        %v2749 = vsel %vm2677, %v279, -inf
        %v2750 = vsel %vm2678, %v280, -inf
        %v2751 = vsel %vm2679, %v281, -inf
        %v2752 = vsel %vm2680, %v282, -inf
        %v2753 = vsel %vm2681, %v283, -inf
        %v2754 = vsel %vm2682, %v284, -inf
        %v2755 = vsel %vm2683, %v285, -inf
        %v2756 = vsel %vm2684, %v286, -inf
        %v2757 = vsel %vm2685, %v287, -inf
        %v2758 = vsel %vm2686, %v288, -inf
        %v2759 = vsel %vm2687, %v289, -inf
        %v2760 = vsel %vm2688, %v290, -inf
        %v2761 = vsel %vm2689, %v291, -inf
        %v2762 = vsel %vm2690, %v292, -inf
        %v2763 = vsel %vm2691, %v293, -inf
        %v2764 = vsel %vm2692, %v294, -inf
        %v2765 = vsel %vm405, %v2749, -inf
        %v2766 = vsel %vm405, %v2750, -inf
        %v2767 = vsel %vm405, %v2751, -inf
        %v2768 = vsel %vm405, %v2752, -inf
        %v2769 = vsel %vm405, %v2753, -inf
        %v2770 = vmax.f32 %v2765, %v2769
        %v2771 = vsel %vm405, %v2754, -inf
        %v2772 = vmax.f32 %v2766, %v2771
        %v2773 = vsel %vm405, %v2755, -inf
        %v2774 = vmax.f32 %v2767, %v2773
        %v2775 = vsel %vm405, %v2756, -inf
        %v2776 = vmax.f32 %v2768, %v2775
        %v2777 = vsel %vm405, %v2757, -inf
        %v2778 = vmax.f32 %v2770, %v2777
        %v2779 = vsel %vm405, %v2758, -inf
        %v2780 = vmax.f32 %v2772, %v2779
        %v2781 = vsel %vm405, %v2759, -inf
        %v2782 = vmax.f32 %v2774, %v2781
        %v2783 = vsel %vm405, %v2760, -inf
        %v2784 = vmax.f32 %v2776, %v2783
        %v2785 = vsel %vm405, %v2761, -inf
        %v2786 = vmax.f32 %v2778, %v2785
        %v2787 = vsel %vm405, %v2762, -inf
        %v2788 = vmax.f32 %v2780, %v2787
        %v2789 = vsel %vm405, %v2763, -inf
        %v2790 = vmax.f32 %v2782, %v2789
        %v2791 = vsel %vm405, %v2764, -inf
        %v2792 = vmax.f32 %v2784, %v2791
        %v2793 = vmax.f32 %v2786, %v2788
        %v2794 = vmax.f32 %v2790, %v2792
        %v2795 = vmax.f32 %v2793, %v2794
        %v2796 = vrot.slane %v2795, 4
        %v2797 = vmax.f32 %v2795, %v2796
        %v2798 = vrot.slane %v2797, 2
        %v2799 = vmax.f32 %v2797, %v2798
        %v2800 = vrot.slane %v2799, 1
        %v2801 = vmax.f32 %v2799, %v2800
        %v2802 = vmax.f32 %v2748, %v2801
        %2803 = vst.msk [vmem:[#allocation5 + $0xa] sm:$0x1] %vm666, %v2802
        %vm2804 = vcmp.eq.s32.totalorder %v296, 11
        %vm2805 = vcmp.eq.s32.totalorder %v297, 11
        %vm2806 = vcmp.eq.s32.totalorder %v298, 11
        %vm2807 = vcmp.eq.s32.totalorder %v299, 11
        %vm2808 = vcmp.eq.s32.totalorder %v300, 11
        %vm2809 = vcmp.eq.s32.totalorder %v301, 11
        %vm2810 = vcmp.eq.s32.totalorder %v302, 11
        %vm2811 = vcmp.eq.s32.totalorder %v303, 11
        %vm2812 = vcmp.eq.s32.totalorder %v304, 11
        %vm2813 = vcmp.eq.s32.totalorder %v305, 11
        %vm2814 = vcmp.eq.s32.totalorder %v306, 11
        %vm2815 = vcmp.eq.s32.totalorder %v307, 11
        %vm2816 = vcmp.eq.s32.totalorder %v308, 11
        %vm2817 = vcmp.eq.s32.totalorder %v309, 11
        %vm2818 = vcmp.eq.s32.totalorder %v310, 11
        %vm2819 = vcmp.eq.s32.totalorder %v311, 11
        %v2820 = vld [vmem:[#allocation4 + $0xb] sm:$0x1]
        %v2821 = vsel %vm2804, 1, 0
        %v2822 = vsel %vm2805, 1, 0
        %v2823 = vsel %vm2806, 1, 0
        %v2824 = vsel %vm2807, 1, 0
        %v2825 = vsel %vm2808, 1, 0
        %v2826 = vsel %vm2809, 1, 0
        %v2827 = vsel %vm2810, 1, 0
        %v2828 = vsel %vm2811, 1, 0
        %v2829 = vsel %vm2812, 1, 0
        %v2830 = vsel %vm2813, 1, 0
        %v2831 = vsel %vm2814, 1, 0
        %v2832 = vsel %vm2815, 1, 0
        %v2833 = vsel %vm2816, 1, 0
        %v2834 = vsel %vm2817, 1, 0
        %v2835 = vsel %vm2818, 1, 0
        %v2836 = vsel %vm2819, 1, 0
        %2837 = vset.pattern.permute.xlu0 0
        %2838 = vperm.xlu0 %2837, %v2821
        %v2839 = vpop.permute.xlu0 %2838
        %2840 = vset.pattern.permute.xlu0 0
        %2841 = vperm.xlu0 %2840, %v2822
        %v2842 = vpop.permute.xlu0 %2841
        %2843 = vset.pattern.permute.xlu0 0
        %2844 = vperm.xlu0 %2843, %v2823
        %v2845 = vpop.permute.xlu0 %2844
        %2846 = vset.pattern.permute.xlu0 0
        %2847 = vperm.xlu0 %2846, %v2824
        %v2848 = vpop.permute.xlu0 %2847
        %2849 = vset.pattern.permute.xlu0 0
        %2850 = vperm.xlu0 %2849, %v2825
        %v2851 = vpop.permute.xlu0 %2850
        %2852 = vset.pattern.permute.xlu0 0
        %2853 = vperm.xlu0 %2852, %v2826
        %v2854 = vpop.permute.xlu0 %2853
        %2855 = vset.pattern.permute.xlu0 0
        %2856 = vperm.xlu0 %2855, %v2827
        %v2857 = vpop.permute.xlu0 %2856
        %2858 = vset.pattern.permute.xlu0 0
        %2859 = vperm.xlu0 %2858, %v2828
        %v2860 = vpop.permute.xlu0 %2859
        %2861 = vset.pattern.permute.xlu0 0
        %2862 = vperm.xlu0 %2861, %v2829
        %v2863 = vpop.permute.xlu0 %2862
        %2864 = vset.pattern.permute.xlu0 0
        %2865 = vperm.xlu0 %2864, %v2830
        %v2866 = vpop.permute.xlu0 %2865
        %2867 = vset.pattern.permute.xlu0 0
        %2868 = vperm.xlu0 %2867, %v2831
        %v2869 = vpop.permute.xlu0 %2868
        %2870 = vset.pattern.permute.xlu0 0
        %2871 = vperm.xlu0 %2870, %v2832
        %v2872 = vpop.permute.xlu0 %2871
        %2873 = vset.pattern.permute.xlu0 0
        %2874 = vperm.xlu0 %2873, %v2833
        %v2875 = vpop.permute.xlu0 %2874
        %2876 = vset.pattern.permute.xlu0 0
        %2877 = vperm.xlu0 %2876, %v2834
        %v2878 = vpop.permute.xlu0 %2877
        %2879 = vset.pattern.permute.xlu0 0
        %2880 = vperm.xlu0 %2879, %v2835
        %v2881 = vpop.permute.xlu0 %2880
        %2882 = vset.pattern.permute.xlu0 0
        %2883 = vperm.xlu0 %2882, %v2836
        %v2884 = vpop.permute.xlu0 %2883
        %vm2885 = vcmp.eq.s32.totalorder %v2839, 1
        %vm2886 = vcmp.eq.s32.totalorder %v2842, 1
        %vm2887 = vcmp.eq.s32.totalorder %v2845, 1
        %vm2888 = vcmp.eq.s32.totalorder %v2848, 1
        %vm2889 = vcmp.eq.s32.totalorder %v2851, 1
        %vm2890 = vcmp.eq.s32.totalorder %v2854, 1
        %vm2891 = vcmp.eq.s32.totalorder %v2857, 1
        %vm2892 = vcmp.eq.s32.totalorder %v2860, 1
        %vm2893 = vcmp.eq.s32.totalorder %v2863, 1
        %vm2894 = vcmp.eq.s32.totalorder %v2866, 1
        %vm2895 = vcmp.eq.s32.totalorder %v2869, 1
        %vm2896 = vcmp.eq.s32.totalorder %v2872, 1
        %vm2897 = vcmp.eq.s32.totalorder %v2875, 1
        %vm2898 = vcmp.eq.s32.totalorder %v2878, 1
        %vm2899 = vcmp.eq.s32.totalorder %v2881, 1
        %vm2900 = vcmp.eq.s32.totalorder %v2884, 1
        %v2901 = vsel %vm2885, %v279, inf
        %v2902 = vsel %vm2886, %v280, inf
        %v2903 = vsel %vm2887, %v281, inf
        %v2904 = vsel %vm2888, %v282, inf
        %v2905 = vsel %vm2889, %v283, inf
        %v2906 = vsel %vm2890, %v284, inf
        %v2907 = vsel %vm2891, %v285, inf
        %v2908 = vsel %vm2892, %v286, inf
        %v2909 = vsel %vm2893, %v287, inf
        %v2910 = vsel %vm2894, %v288, inf
        %v2911 = vsel %vm2895, %v289, inf
        %v2912 = vsel %vm2896, %v290, inf
        %v2913 = vsel %vm2897, %v291, inf
        %v2914 = vsel %vm2898, %v292, inf
        %v2915 = vsel %vm2899, %v293, inf
        %v2916 = vsel %vm2900, %v294, inf
        %v2917 = vsel %vm405, %v2901, inf
        %v2918 = vsel %vm405, %v2902, inf
        %v2919 = vsel %vm405, %v2903, inf
        %v2920 = vsel %vm405, %v2904, inf
        %v2921 = vsel %vm405, %v2905, inf
        %v2922 = vmin.f32 %v2917, %v2921
        %v2923 = vsel %vm405, %v2906, inf
        %v2924 = vmin.f32 %v2918, %v2923
        %v2925 = vsel %vm405, %v2907, inf
        %v2926 = vmin.f32 %v2919, %v2925
        %v2927 = vsel %vm405, %v2908, inf
        %v2928 = vmin.f32 %v2920, %v2927
        %v2929 = vsel %vm405, %v2909, inf
        %v2930 = vmin.f32 %v2922, %v2929
        %v2931 = vsel %vm405, %v2910, inf
        %v2932 = vmin.f32 %v2924, %v2931
        %v2933 = vsel %vm405, %v2911, inf
        %v2934 = vmin.f32 %v2926, %v2933
        %v2935 = vsel %vm405, %v2912, inf
        %v2936 = vmin.f32 %v2928, %v2935
        %v2937 = vsel %vm405, %v2913, inf
        %v2938 = vmin.f32 %v2930, %v2937
        %v2939 = vsel %vm405, %v2914, inf
        %v2940 = vmin.f32 %v2932, %v2939
        %v2941 = vsel %vm405, %v2915, inf
        %v2942 = vmin.f32 %v2934, %v2941
        %v2943 = vsel %vm405, %v2916, inf
        %v2944 = vmin.f32 %v2936, %v2943
        %v2945 = vmin.f32 %v2938, %v2940
        %v2946 = vmin.f32 %v2942, %v2944
        %v2947 = vmin.f32 %v2945, %v2946
        %v2948 = vrot.slane %v2947, 4
        %v2949 = vmin.f32 %v2947, %v2948
        %v2950 = vrot.slane %v2949, 2
        %v2951 = vmin.f32 %v2949, %v2950
        %v2952 = vrot.slane %v2951, 1
        %v2953 = vmin.f32 %v2951, %v2952
        %v2954 = vmin.f32 %v2820, %v2953
        %2955 = vst.msk [vmem:[#allocation4 + $0xb] sm:$0x1] %vm666, %v2954
        %v2956 = vld [vmem:[#allocation5 + $0xb] sm:$0x1]
        %v2957 = vsel %vm2885, %v279, -inf
        %v2958 = vsel %vm2886, %v280, -inf
        %v2959 = vsel %vm2887, %v281, -inf
        %v2960 = vsel %vm2888, %v282, -inf
        %v2961 = vsel %vm2889, %v283, -inf
        %v2962 = vsel %vm2890, %v284, -inf
        %v2963 = vsel %vm2891, %v285, -inf
        %v2964 = vsel %vm2892, %v286, -inf
        %v2965 = vsel %vm2893, %v287, -inf
        %v2966 = vsel %vm2894, %v288, -inf
        %v2967 = vsel %vm2895, %v289, -inf
        %v2968 = vsel %vm2896, %v290, -inf
        %v2969 = vsel %vm2897, %v291, -inf
        %v2970 = vsel %vm2898, %v292, -inf
        %v2971 = vsel %vm2899, %v293, -inf
        %v2972 = vsel %vm2900, %v294, -inf
        %v2973 = vsel %vm405, %v2957, -inf
        %v2974 = vsel %vm405, %v2958, -inf
        %v2975 = vsel %vm405, %v2959, -inf
        %v2976 = vsel %vm405, %v2960, -inf
        %v2977 = vsel %vm405, %v2961, -inf
        %v2978 = vmax.f32 %v2973, %v2977
        %v2979 = vsel %vm405, %v2962, -inf
        %v2980 = vmax.f32 %v2974, %v2979
        %v2981 = vsel %vm405, %v2963, -inf
        %v2982 = vmax.f32 %v2975, %v2981
        %v2983 = vsel %vm405, %v2964, -inf
        %v2984 = vmax.f32 %v2976, %v2983
        %v2985 = vsel %vm405, %v2965, -inf
        %v2986 = vmax.f32 %v2978, %v2985
        %v2987 = vsel %vm405, %v2966, -inf
        %v2988 = vmax.f32 %v2980, %v2987
        %v2989 = vsel %vm405, %v2967, -inf
        %v2990 = vmax.f32 %v2982, %v2989
        %v2991 = vsel %vm405, %v2968, -inf
        %v2992 = vmax.f32 %v2984, %v2991
        %v2993 = vsel %vm405, %v2969, -inf
        %v2994 = vmax.f32 %v2986, %v2993
        %v2995 = vsel %vm405, %v2970, -inf
        %v2996 = vmax.f32 %v2988, %v2995
        %v2997 = vsel %vm405, %v2971, -inf
        %v2998 = vmax.f32 %v2990, %v2997
        %v2999 = vsel %vm405, %v2972, -inf
        %v3000 = vmax.f32 %v2992, %v2999
        %v3001 = vmax.f32 %v2994, %v2996
        %v3002 = vmax.f32 %v2998, %v3000
        %v3003 = vmax.f32 %v3001, %v3002
        %v3004 = vrot.slane %v3003, 4
        %v3005 = vmax.f32 %v3003, %v3004
        %v3006 = vrot.slane %v3005, 2
        %v3007 = vmax.f32 %v3005, %v3006
        %v3008 = vrot.slane %v3007, 1
        %v3009 = vmax.f32 %v3007, %v3008
        %v3010 = vmax.f32 %v2956, %v3009
        %3011 = vst.msk [vmem:[#allocation5 + $0xb] sm:$0x1] %vm666, %v3010
        %vm3012 = vcmp.eq.s32.totalorder %v296, 12
        %vm3013 = vcmp.eq.s32.totalorder %v297, 12
        %vm3014 = vcmp.eq.s32.totalorder %v298, 12
        %vm3015 = vcmp.eq.s32.totalorder %v299, 12
        %vm3016 = vcmp.eq.s32.totalorder %v300, 12
        %vm3017 = vcmp.eq.s32.totalorder %v301, 12
        %vm3018 = vcmp.eq.s32.totalorder %v302, 12
        %vm3019 = vcmp.eq.s32.totalorder %v303, 12
        %vm3020 = vcmp.eq.s32.totalorder %v304, 12
        %vm3021 = vcmp.eq.s32.totalorder %v305, 12
        %vm3022 = vcmp.eq.s32.totalorder %v306, 12
        %vm3023 = vcmp.eq.s32.totalorder %v307, 12
        %vm3024 = vcmp.eq.s32.totalorder %v308, 12
        %vm3025 = vcmp.eq.s32.totalorder %v309, 12
        %vm3026 = vcmp.eq.s32.totalorder %v310, 12
        %vm3027 = vcmp.eq.s32.totalorder %v311, 12
        %v3028 = vld [vmem:[#allocation4 + $0xc] sm:$0x1]
        %v3029 = vsel %vm3012, 1, 0
        %v3030 = vsel %vm3013, 1, 0
        %v3031 = vsel %vm3014, 1, 0
        %v3032 = vsel %vm3015, 1, 0
        %v3033 = vsel %vm3016, 1, 0
        %v3034 = vsel %vm3017, 1, 0
        %v3035 = vsel %vm3018, 1, 0
        %v3036 = vsel %vm3019, 1, 0
        %v3037 = vsel %vm3020, 1, 0
        %v3038 = vsel %vm3021, 1, 0
        %v3039 = vsel %vm3022, 1, 0
        %v3040 = vsel %vm3023, 1, 0
        %v3041 = vsel %vm3024, 1, 0
        %v3042 = vsel %vm3025, 1, 0
        %v3043 = vsel %vm3026, 1, 0
        %v3044 = vsel %vm3027, 1, 0
        %3045 = vset.pattern.permute.xlu0 0
        %3046 = vperm.xlu0 %3045, %v3029
        %v3047 = vpop.permute.xlu0 %3046
        %3048 = vset.pattern.permute.xlu0 0
        %3049 = vperm.xlu0 %3048, %v3030
        %v3050 = vpop.permute.xlu0 %3049
        %3051 = vset.pattern.permute.xlu0 0
        %3052 = vperm.xlu0 %3051, %v3031
        %v3053 = vpop.permute.xlu0 %3052
        %3054 = vset.pattern.permute.xlu0 0
        %3055 = vperm.xlu0 %3054, %v3032
        %v3056 = vpop.permute.xlu0 %3055
        %3057 = vset.pattern.permute.xlu0 0
        %3058 = vperm.xlu0 %3057, %v3033
        %v3059 = vpop.permute.xlu0 %3058
        %3060 = vset.pattern.permute.xlu0 0
        %3061 = vperm.xlu0 %3060, %v3034
        %v3062 = vpop.permute.xlu0 %3061
        %3063 = vset.pattern.permute.xlu0 0
        %3064 = vperm.xlu0 %3063, %v3035
        %v3065 = vpop.permute.xlu0 %3064
        %3066 = vset.pattern.permute.xlu0 0
        %3067 = vperm.xlu0 %3066, %v3036
        %v3068 = vpop.permute.xlu0 %3067
        %3069 = vset.pattern.permute.xlu0 0
        %3070 = vperm.xlu0 %3069, %v3037
        %v3071 = vpop.permute.xlu0 %3070
        %3072 = vset.pattern.permute.xlu0 0
        %3073 = vperm.xlu0 %3072, %v3038
        %v3074 = vpop.permute.xlu0 %3073
        %3075 = vset.pattern.permute.xlu0 0
        %3076 = vperm.xlu0 %3075, %v3039
        %v3077 = vpop.permute.xlu0 %3076
        %3078 = vset.pattern.permute.xlu0 0
        %3079 = vperm.xlu0 %3078, %v3040
        %v3080 = vpop.permute.xlu0 %3079
        %3081 = vset.pattern.permute.xlu0 0
        %3082 = vperm.xlu0 %3081, %v3041
        %v3083 = vpop.permute.xlu0 %3082
        %3084 = vset.pattern.permute.xlu0 0
        %3085 = vperm.xlu0 %3084, %v3042
        %v3086 = vpop.permute.xlu0 %3085
        %3087 = vset.pattern.permute.xlu0 0
        %3088 = vperm.xlu0 %3087, %v3043
        %v3089 = vpop.permute.xlu0 %3088
        %3090 = vset.pattern.permute.xlu0 0
        %3091 = vperm.xlu0 %3090, %v3044
        %v3092 = vpop.permute.xlu0 %3091
        %vm3093 = vcmp.eq.s32.totalorder %v3047, 1
        %vm3094 = vcmp.eq.s32.totalorder %v3050, 1
        %vm3095 = vcmp.eq.s32.totalorder %v3053, 1
        %vm3096 = vcmp.eq.s32.totalorder %v3056, 1
        %vm3097 = vcmp.eq.s32.totalorder %v3059, 1
        %vm3098 = vcmp.eq.s32.totalorder %v3062, 1
        %vm3099 = vcmp.eq.s32.totalorder %v3065, 1
        %vm3100 = vcmp.eq.s32.totalorder %v3068, 1
        %vm3101 = vcmp.eq.s32.totalorder %v3071, 1
        %vm3102 = vcmp.eq.s32.totalorder %v3074, 1
        %vm3103 = vcmp.eq.s32.totalorder %v3077, 1
        %vm3104 = vcmp.eq.s32.totalorder %v3080, 1
        %vm3105 = vcmp.eq.s32.totalorder %v3083, 1
        %vm3106 = vcmp.eq.s32.totalorder %v3086, 1
        %vm3107 = vcmp.eq.s32.totalorder %v3089, 1
        %vm3108 = vcmp.eq.s32.totalorder %v3092, 1
        %v3109 = vsel %vm3093, %v279, inf
        %v3110 = vsel %vm3094, %v280, inf
        %v3111 = vsel %vm3095, %v281, inf
        %v3112 = vsel %vm3096, %v282, inf
        %v3113 = vsel %vm3097, %v283, inf
        %v3114 = vsel %vm3098, %v284, inf
        %v3115 = vsel %vm3099, %v285, inf
        %v3116 = vsel %vm3100, %v286, inf
        %v3117 = vsel %vm3101, %v287, inf
        %v3118 = vsel %vm3102, %v288, inf
        %v3119 = vsel %vm3103, %v289, inf
        %v3120 = vsel %vm3104, %v290, inf
        %v3121 = vsel %vm3105, %v291, inf
        %v3122 = vsel %vm3106, %v292, inf
        %v3123 = vsel %vm3107, %v293, inf
        %v3124 = vsel %vm3108, %v294, inf
        %v3125 = vsel %vm405, %v3109, inf
        %v3126 = vsel %vm405, %v3110, inf
        %v3127 = vsel %vm405, %v3111, inf
        %v3128 = vsel %vm405, %v3112, inf
        %v3129 = vsel %vm405, %v3113, inf
        %v3130 = vmin.f32 %v3125, %v3129
        %v3131 = vsel %vm405, %v3114, inf
        %v3132 = vmin.f32 %v3126, %v3131
        %v3133 = vsel %vm405, %v3115, inf
        %v3134 = vmin.f32 %v3127, %v3133
        %v3135 = vsel %vm405, %v3116, inf
        %v3136 = vmin.f32 %v3128, %v3135
        %v3137 = vsel %vm405, %v3117, inf
        %v3138 = vmin.f32 %v3130, %v3137
        %v3139 = vsel %vm405, %v3118, inf
        %v3140 = vmin.f32 %v3132, %v3139
        %v3141 = vsel %vm405, %v3119, inf
        %v3142 = vmin.f32 %v3134, %v3141
        %v3143 = vsel %vm405, %v3120, inf
        %v3144 = vmin.f32 %v3136, %v3143
        %v3145 = vsel %vm405, %v3121, inf
        %v3146 = vmin.f32 %v3138, %v3145
        %v3147 = vsel %vm405, %v3122, inf
        %v3148 = vmin.f32 %v3140, %v3147
        %v3149 = vsel %vm405, %v3123, inf
        %v3150 = vmin.f32 %v3142, %v3149
        %v3151 = vsel %vm405, %v3124, inf
        %v3152 = vmin.f32 %v3144, %v3151
        %v3153 = vmin.f32 %v3146, %v3148
        %v3154 = vmin.f32 %v3150, %v3152
        %v3155 = vmin.f32 %v3153, %v3154
        %v3156 = vrot.slane %v3155, 4
        %v3157 = vmin.f32 %v3155, %v3156
        %v3158 = vrot.slane %v3157, 2
        %v3159 = vmin.f32 %v3157, %v3158
        %v3160 = vrot.slane %v3159, 1
        %v3161 = vmin.f32 %v3159, %v3160
        %v3162 = vmin.f32 %v3028, %v3161
        %3163 = vst.msk [vmem:[#allocation4 + $0xc] sm:$0x1] %vm666, %v3162
        %v3164 = vld [vmem:[#allocation5 + $0xc] sm:$0x1]
        %v3165 = vsel %vm3093, %v279, -inf
        %v3166 = vsel %vm3094, %v280, -inf
        %v3167 = vsel %vm3095, %v281, -inf
        %v3168 = vsel %vm3096, %v282, -inf
        %v3169 = vsel %vm3097, %v283, -inf
        %v3170 = vsel %vm3098, %v284, -inf
        %v3171 = vsel %vm3099, %v285, -inf
        %v3172 = vsel %vm3100, %v286, -inf
        %v3173 = vsel %vm3101, %v287, -inf
        %v3174 = vsel %vm3102, %v288, -inf
        %v3175 = vsel %vm3103, %v289, -inf
        %v3176 = vsel %vm3104, %v290, -inf
        %v3177 = vsel %vm3105, %v291, -inf
        %v3178 = vsel %vm3106, %v292, -inf
        %v3179 = vsel %vm3107, %v293, -inf
        %v3180 = vsel %vm3108, %v294, -inf
        %v3181 = vsel %vm405, %v3165, -inf
        %v3182 = vsel %vm405, %v3166, -inf
        %v3183 = vsel %vm405, %v3167, -inf
        %v3184 = vsel %vm405, %v3168, -inf
        %v3185 = vsel %vm405, %v3169, -inf
        %v3186 = vmax.f32 %v3181, %v3185
        %v3187 = vsel %vm405, %v3170, -inf
        %v3188 = vmax.f32 %v3182, %v3187
        %v3189 = vsel %vm405, %v3171, -inf
        %v3190 = vmax.f32 %v3183, %v3189
        %v3191 = vsel %vm405, %v3172, -inf
        %v3192 = vmax.f32 %v3184, %v3191
        %v3193 = vsel %vm405, %v3173, -inf
        %v3194 = vmax.f32 %v3186, %v3193
        %v3195 = vsel %vm405, %v3174, -inf
        %v3196 = vmax.f32 %v3188, %v3195
        %v3197 = vsel %vm405, %v3175, -inf
        %v3198 = vmax.f32 %v3190, %v3197
        %v3199 = vsel %vm405, %v3176, -inf
        %v3200 = vmax.f32 %v3192, %v3199
        %v3201 = vsel %vm405, %v3177, -inf
        %v3202 = vmax.f32 %v3194, %v3201
        %v3203 = vsel %vm405, %v3178, -inf
        %v3204 = vmax.f32 %v3196, %v3203
        %v3205 = vsel %vm405, %v3179, -inf
        %v3206 = vmax.f32 %v3198, %v3205
        %v3207 = vsel %vm405, %v3180, -inf
        %v3208 = vmax.f32 %v3200, %v3207
        %v3209 = vmax.f32 %v3202, %v3204
        %v3210 = vmax.f32 %v3206, %v3208
        %v3211 = vmax.f32 %v3209, %v3210
        %v3212 = vrot.slane %v3211, 4
        %v3213 = vmax.f32 %v3211, %v3212
        %v3214 = vrot.slane %v3213, 2
        %v3215 = vmax.f32 %v3213, %v3214
        %v3216 = vrot.slane %v3215, 1
        %v3217 = vmax.f32 %v3215, %v3216
        %v3218 = vmax.f32 %v3164, %v3217
        %3219 = vst.msk [vmem:[#allocation5 + $0xc] sm:$0x1] %vm666, %v3218
        %vm3220 = vcmp.eq.s32.totalorder %v296, 13
        %vm3221 = vcmp.eq.s32.totalorder %v297, 13
        %vm3222 = vcmp.eq.s32.totalorder %v298, 13
        %vm3223 = vcmp.eq.s32.totalorder %v299, 13
        %vm3224 = vcmp.eq.s32.totalorder %v300, 13
        %vm3225 = vcmp.eq.s32.totalorder %v301, 13
        %vm3226 = vcmp.eq.s32.totalorder %v302, 13
        %vm3227 = vcmp.eq.s32.totalorder %v303, 13
        %vm3228 = vcmp.eq.s32.totalorder %v304, 13
        %vm3229 = vcmp.eq.s32.totalorder %v305, 13
        %vm3230 = vcmp.eq.s32.totalorder %v306, 13
        %vm3231 = vcmp.eq.s32.totalorder %v307, 13
        %vm3232 = vcmp.eq.s32.totalorder %v308, 13
        %vm3233 = vcmp.eq.s32.totalorder %v309, 13
        %vm3234 = vcmp.eq.s32.totalorder %v310, 13
        %vm3235 = vcmp.eq.s32.totalorder %v311, 13
        %v3236 = vld [vmem:[#allocation4 + $0xd] sm:$0x1]
        %v3237 = vsel %vm3220, 1, 0
        %v3238 = vsel %vm3221, 1, 0
        %v3239 = vsel %vm3222, 1, 0
        %v3240 = vsel %vm3223, 1, 0
        %v3241 = vsel %vm3224, 1, 0
        %v3242 = vsel %vm3225, 1, 0
        %v3243 = vsel %vm3226, 1, 0
        %v3244 = vsel %vm3227, 1, 0
        %v3245 = vsel %vm3228, 1, 0
        %v3246 = vsel %vm3229, 1, 0
        %v3247 = vsel %vm3230, 1, 0
        %v3248 = vsel %vm3231, 1, 0
        %v3249 = vsel %vm3232, 1, 0
        %v3250 = vsel %vm3233, 1, 0
        %v3251 = vsel %vm3234, 1, 0
        %v3252 = vsel %vm3235, 1, 0
        %3253 = vset.pattern.permute.xlu0 0
        %3254 = vperm.xlu0 %3253, %v3237
        %v3255 = vpop.permute.xlu0 %3254
        %3256 = vset.pattern.permute.xlu0 0
        %3257 = vperm.xlu0 %3256, %v3238
        %v3258 = vpop.permute.xlu0 %3257
        %3259 = vset.pattern.permute.xlu0 0
        %3260 = vperm.xlu0 %3259, %v3239
        %v3261 = vpop.permute.xlu0 %3260
        %3262 = vset.pattern.permute.xlu0 0
        %3263 = vperm.xlu0 %3262, %v3240
        %v3264 = vpop.permute.xlu0 %3263
        %3265 = vset.pattern.permute.xlu0 0
        %3266 = vperm.xlu0 %3265, %v3241
        %v3267 = vpop.permute.xlu0 %3266
        %3268 = vset.pattern.permute.xlu0 0
        %3269 = vperm.xlu0 %3268, %v3242
        %v3270 = vpop.permute.xlu0 %3269
        %3271 = vset.pattern.permute.xlu0 0
        %3272 = vperm.xlu0 %3271, %v3243
        %v3273 = vpop.permute.xlu0 %3272
        %3274 = vset.pattern.permute.xlu0 0
        %3275 = vperm.xlu0 %3274, %v3244
        %v3276 = vpop.permute.xlu0 %3275
        %3277 = vset.pattern.permute.xlu0 0
        %3278 = vperm.xlu0 %3277, %v3245
        %v3279 = vpop.permute.xlu0 %3278
        %3280 = vset.pattern.permute.xlu0 0
        %3281 = vperm.xlu0 %3280, %v3246
        %v3282 = vpop.permute.xlu0 %3281
        %3283 = vset.pattern.permute.xlu0 0
        %3284 = vperm.xlu0 %3283, %v3247
        %v3285 = vpop.permute.xlu0 %3284
        %3286 = vset.pattern.permute.xlu0 0
        %3287 = vperm.xlu0 %3286, %v3248
        %v3288 = vpop.permute.xlu0 %3287
        %3289 = vset.pattern.permute.xlu0 0
        %3290 = vperm.xlu0 %3289, %v3249
        %v3291 = vpop.permute.xlu0 %3290
        %3292 = vset.pattern.permute.xlu0 0
        %3293 = vperm.xlu0 %3292, %v3250
        %v3294 = vpop.permute.xlu0 %3293
        %3295 = vset.pattern.permute.xlu0 0
        %3296 = vperm.xlu0 %3295, %v3251
        %v3297 = vpop.permute.xlu0 %3296
        %3298 = vset.pattern.permute.xlu0 0
        %3299 = vperm.xlu0 %3298, %v3252
        %v3300 = vpop.permute.xlu0 %3299
        %vm3301 = vcmp.eq.s32.totalorder %v3255, 1
        %vm3302 = vcmp.eq.s32.totalorder %v3258, 1
        %vm3303 = vcmp.eq.s32.totalorder %v3261, 1
        %vm3304 = vcmp.eq.s32.totalorder %v3264, 1
        %vm3305 = vcmp.eq.s32.totalorder %v3267, 1
        %vm3306 = vcmp.eq.s32.totalorder %v3270, 1
        %vm3307 = vcmp.eq.s32.totalorder %v3273, 1
        %vm3308 = vcmp.eq.s32.totalorder %v3276, 1
        %vm3309 = vcmp.eq.s32.totalorder %v3279, 1
        %vm3310 = vcmp.eq.s32.totalorder %v3282, 1
        %vm3311 = vcmp.eq.s32.totalorder %v3285, 1
        %vm3312 = vcmp.eq.s32.totalorder %v3288, 1
        %vm3313 = vcmp.eq.s32.totalorder %v3291, 1
        %vm3314 = vcmp.eq.s32.totalorder %v3294, 1
        %vm3315 = vcmp.eq.s32.totalorder %v3297, 1
        %vm3316 = vcmp.eq.s32.totalorder %v3300, 1
        %v3317 = vsel %vm3301, %v279, inf
        %v3318 = vsel %vm3302, %v280, inf
        %v3319 = vsel %vm3303, %v281, inf
        %v3320 = vsel %vm3304, %v282, inf
        %v3321 = vsel %vm3305, %v283, inf
        %v3322 = vsel %vm3306, %v284, inf
        %v3323 = vsel %vm3307, %v285, inf
        %v3324 = vsel %vm3308, %v286, inf
        %v3325 = vsel %vm3309, %v287, inf
        %v3326 = vsel %vm3310, %v288, inf
        %v3327 = vsel %vm3311, %v289, inf
        %v3328 = vsel %vm3312, %v290, inf
        %v3329 = vsel %vm3313, %v291, inf
        %v3330 = vsel %vm3314, %v292, inf
        %v3331 = vsel %vm3315, %v293, inf
        %v3332 = vsel %vm3316, %v294, inf
        %v3333 = vsel %vm405, %v3317, inf
        %v3334 = vsel %vm405, %v3318, inf
        %v3335 = vsel %vm405, %v3319, inf
        %v3336 = vsel %vm405, %v3320, inf
        %v3337 = vsel %vm405, %v3321, inf
        %v3338 = vmin.f32 %v3333, %v3337
        %v3339 = vsel %vm405, %v3322, inf
        %v3340 = vmin.f32 %v3334, %v3339
        %v3341 = vsel %vm405, %v3323, inf
        %v3342 = vmin.f32 %v3335, %v3341
        %v3343 = vsel %vm405, %v3324, inf
        %v3344 = vmin.f32 %v3336, %v3343
        %v3345 = vsel %vm405, %v3325, inf
        %v3346 = vmin.f32 %v3338, %v3345
        %v3347 = vsel %vm405, %v3326, inf
        %v3348 = vmin.f32 %v3340, %v3347
        %v3349 = vsel %vm405, %v3327, inf
        %v3350 = vmin.f32 %v3342, %v3349
        %v3351 = vsel %vm405, %v3328, inf
        %v3352 = vmin.f32 %v3344, %v3351
        %v3353 = vsel %vm405, %v3329, inf
        %v3354 = vmin.f32 %v3346, %v3353
        %v3355 = vsel %vm405, %v3330, inf
        %v3356 = vmin.f32 %v3348, %v3355
        %v3357 = vsel %vm405, %v3331, inf
        %v3358 = vmin.f32 %v3350, %v3357
        %v3359 = vsel %vm405, %v3332, inf
        %v3360 = vmin.f32 %v3352, %v3359
        %v3361 = vmin.f32 %v3354, %v3356
        %v3362 = vmin.f32 %v3358, %v3360
        %v3363 = vmin.f32 %v3361, %v3362
        %v3364 = vrot.slane %v3363, 4
        %v3365 = vmin.f32 %v3363, %v3364
        %v3366 = vrot.slane %v3365, 2
        %v3367 = vmin.f32 %v3365, %v3366
        %v3368 = vrot.slane %v3367, 1
        %v3369 = vmin.f32 %v3367, %v3368
        %v3370 = vmin.f32 %v3236, %v3369
        %3371 = vst.msk [vmem:[#allocation4 + $0xd] sm:$0x1] %vm666, %v3370
        %v3372 = vld [vmem:[#allocation5 + $0xd] sm:$0x1]
        %v3373 = vsel %vm3301, %v279, -inf
        %v3374 = vsel %vm3302, %v280, -inf
        %v3375 = vsel %vm3303, %v281, -inf
        %v3376 = vsel %vm3304, %v282, -inf
        %v3377 = vsel %vm3305, %v283, -inf
        %v3378 = vsel %vm3306, %v284, -inf
        %v3379 = vsel %vm3307, %v285, -inf
        %v3380 = vsel %vm3308, %v286, -inf
        %v3381 = vsel %vm3309, %v287, -inf
        %v3382 = vsel %vm3310, %v288, -inf
        %v3383 = vsel %vm3311, %v289, -inf
        %v3384 = vsel %vm3312, %v290, -inf
        %v3385 = vsel %vm3313, %v291, -inf
        %v3386 = vsel %vm3314, %v292, -inf
        %v3387 = vsel %vm3315, %v293, -inf
        %v3388 = vsel %vm3316, %v294, -inf
        %v3389 = vsel %vm405, %v3373, -inf
        %v3390 = vsel %vm405, %v3374, -inf
        %v3391 = vsel %vm405, %v3375, -inf
        %v3392 = vsel %vm405, %v3376, -inf
        %v3393 = vsel %vm405, %v3377, -inf
        %v3394 = vmax.f32 %v3389, %v3393
        %v3395 = vsel %vm405, %v3378, -inf
        %v3396 = vmax.f32 %v3390, %v3395
        %v3397 = vsel %vm405, %v3379, -inf
        %v3398 = vmax.f32 %v3391, %v3397
        %v3399 = vsel %vm405, %v3380, -inf
        %v3400 = vmax.f32 %v3392, %v3399
        %v3401 = vsel %vm405, %v3381, -inf
        %v3402 = vmax.f32 %v3394, %v3401
        %v3403 = vsel %vm405, %v3382, -inf
        %v3404 = vmax.f32 %v3396, %v3403
        %v3405 = vsel %vm405, %v3383, -inf
        %v3406 = vmax.f32 %v3398, %v3405
        %v3407 = vsel %vm405, %v3384, -inf
        %v3408 = vmax.f32 %v3400, %v3407
        %v3409 = vsel %vm405, %v3385, -inf
        %v3410 = vmax.f32 %v3402, %v3409
        %v3411 = vsel %vm405, %v3386, -inf
        %v3412 = vmax.f32 %v3404, %v3411
        %v3413 = vsel %vm405, %v3387, -inf
        %v3414 = vmax.f32 %v3406, %v3413
        %v3415 = vsel %vm405, %v3388, -inf
        %v3416 = vmax.f32 %v3408, %v3415
        %v3417 = vmax.f32 %v3410, %v3412
        %v3418 = vmax.f32 %v3414, %v3416
        %v3419 = vmax.f32 %v3417, %v3418
        %v3420 = vrot.slane %v3419, 4
        %v3421 = vmax.f32 %v3419, %v3420
        %v3422 = vrot.slane %v3421, 2
        %v3423 = vmax.f32 %v3421, %v3422
        %v3424 = vrot.slane %v3423, 1
        %v3425 = vmax.f32 %v3423, %v3424
        %v3426 = vmax.f32 %v3372, %v3425
        %3427 = vst.msk [vmem:[#allocation5 + $0xd] sm:$0x1] %vm666, %v3426
        %vm3428 = vcmp.eq.s32.totalorder %v296, 14
        %vm3429 = vcmp.eq.s32.totalorder %v297, 14
        %vm3430 = vcmp.eq.s32.totalorder %v298, 14
        %vm3431 = vcmp.eq.s32.totalorder %v299, 14
        %vm3432 = vcmp.eq.s32.totalorder %v300, 14
        %vm3433 = vcmp.eq.s32.totalorder %v301, 14
        %vm3434 = vcmp.eq.s32.totalorder %v302, 14
        %vm3435 = vcmp.eq.s32.totalorder %v303, 14
        %vm3436 = vcmp.eq.s32.totalorder %v304, 14
        %vm3437 = vcmp.eq.s32.totalorder %v305, 14
        %vm3438 = vcmp.eq.s32.totalorder %v306, 14
        %vm3439 = vcmp.eq.s32.totalorder %v307, 14
        %vm3440 = vcmp.eq.s32.totalorder %v308, 14
        %vm3441 = vcmp.eq.s32.totalorder %v309, 14
        %vm3442 = vcmp.eq.s32.totalorder %v310, 14
        %vm3443 = vcmp.eq.s32.totalorder %v311, 14
        %v3444 = vld [vmem:[#allocation4 + $0xe] sm:$0x1]
        %v3445 = vsel %vm3428, 1, 0
        %v3446 = vsel %vm3429, 1, 0
        %v3447 = vsel %vm3430, 1, 0
        %v3448 = vsel %vm3431, 1, 0
        %v3449 = vsel %vm3432, 1, 0
        %v3450 = vsel %vm3433, 1, 0
        %v3451 = vsel %vm3434, 1, 0
        %v3452 = vsel %vm3435, 1, 0
        %v3453 = vsel %vm3436, 1, 0
        %v3454 = vsel %vm3437, 1, 0
        %v3455 = vsel %vm3438, 1, 0
        %v3456 = vsel %vm3439, 1, 0
        %v3457 = vsel %vm3440, 1, 0
        %v3458 = vsel %vm3441, 1, 0
        %v3459 = vsel %vm3442, 1, 0
        %v3460 = vsel %vm3443, 1, 0
        %3461 = vset.pattern.permute.xlu0 0
        %3462 = vperm.xlu0 %3461, %v3445
        %v3463 = vpop.permute.xlu0 %3462
        %3464 = vset.pattern.permute.xlu0 0
        %3465 = vperm.xlu0 %3464, %v3446
        %v3466 = vpop.permute.xlu0 %3465
        %3467 = vset.pattern.permute.xlu0 0
        %3468 = vperm.xlu0 %3467, %v3447
        %v3469 = vpop.permute.xlu0 %3468
        %3470 = vset.pattern.permute.xlu0 0
        %3471 = vperm.xlu0 %3470, %v3448
        %v3472 = vpop.permute.xlu0 %3471
        %3473 = vset.pattern.permute.xlu0 0
        %3474 = vperm.xlu0 %3473, %v3449
        %v3475 = vpop.permute.xlu0 %3474
        %3476 = vset.pattern.permute.xlu0 0
        %3477 = vperm.xlu0 %3476, %v3450
        %v3478 = vpop.permute.xlu0 %3477
        %3479 = vset.pattern.permute.xlu0 0
        %3480 = vperm.xlu0 %3479, %v3451
        %v3481 = vpop.permute.xlu0 %3480
        %3482 = vset.pattern.permute.xlu0 0
        %3483 = vperm.xlu0 %3482, %v3452
        %v3484 = vpop.permute.xlu0 %3483
        %3485 = vset.pattern.permute.xlu0 0
        %3486 = vperm.xlu0 %3485, %v3453
        %v3487 = vpop.permute.xlu0 %3486
        %3488 = vset.pattern.permute.xlu0 0
        %3489 = vperm.xlu0 %3488, %v3454
        %v3490 = vpop.permute.xlu0 %3489
        %3491 = vset.pattern.permute.xlu0 0
        %3492 = vperm.xlu0 %3491, %v3455
        %v3493 = vpop.permute.xlu0 %3492
        %3494 = vset.pattern.permute.xlu0 0
        %3495 = vperm.xlu0 %3494, %v3456
        %v3496 = vpop.permute.xlu0 %3495
        %3497 = vset.pattern.permute.xlu0 0
        %3498 = vperm.xlu0 %3497, %v3457
        %v3499 = vpop.permute.xlu0 %3498
        %3500 = vset.pattern.permute.xlu0 0
        %3501 = vperm.xlu0 %3500, %v3458
        %v3502 = vpop.permute.xlu0 %3501
        %3503 = vset.pattern.permute.xlu0 0
        %3504 = vperm.xlu0 %3503, %v3459
        %v3505 = vpop.permute.xlu0 %3504
        %3506 = vset.pattern.permute.xlu0 0
        %3507 = vperm.xlu0 %3506, %v3460
        %v3508 = vpop.permute.xlu0 %3507
        %vm3509 = vcmp.eq.s32.totalorder %v3463, 1
        %vm3510 = vcmp.eq.s32.totalorder %v3466, 1
        %vm3511 = vcmp.eq.s32.totalorder %v3469, 1
        %vm3512 = vcmp.eq.s32.totalorder %v3472, 1
        %vm3513 = vcmp.eq.s32.totalorder %v3475, 1
        %vm3514 = vcmp.eq.s32.totalorder %v3478, 1
        %vm3515 = vcmp.eq.s32.totalorder %v3481, 1
        %vm3516 = vcmp.eq.s32.totalorder %v3484, 1
        %vm3517 = vcmp.eq.s32.totalorder %v3487, 1
        %vm3518 = vcmp.eq.s32.totalorder %v3490, 1
        %vm3519 = vcmp.eq.s32.totalorder %v3493, 1
        %vm3520 = vcmp.eq.s32.totalorder %v3496, 1
        %vm3521 = vcmp.eq.s32.totalorder %v3499, 1
        %vm3522 = vcmp.eq.s32.totalorder %v3502, 1
        %vm3523 = vcmp.eq.s32.totalorder %v3505, 1
        %vm3524 = vcmp.eq.s32.totalorder %v3508, 1
        %v3525 = vsel %vm3509, %v279, inf
        %v3526 = vsel %vm3510, %v280, inf
        %v3527 = vsel %vm3511, %v281, inf
        %v3528 = vsel %vm3512, %v282, inf
        %v3529 = vsel %vm3513, %v283, inf
        %v3530 = vsel %vm3514, %v284, inf
        %v3531 = vsel %vm3515, %v285, inf
        %v3532 = vsel %vm3516, %v286, inf
        %v3533 = vsel %vm3517, %v287, inf
        %v3534 = vsel %vm3518, %v288, inf
        %v3535 = vsel %vm3519, %v289, inf
        %v3536 = vsel %vm3520, %v290, inf
        %v3537 = vsel %vm3521, %v291, inf
        %v3538 = vsel %vm3522, %v292, inf
        %v3539 = vsel %vm3523, %v293, inf
        %v3540 = vsel %vm3524, %v294, inf
        %v3541 = vsel %vm405, %v3525, inf
        %v3542 = vsel %vm405, %v3526, inf
        %v3543 = vsel %vm405, %v3527, inf
        %v3544 = vsel %vm405, %v3528, inf
        %v3545 = vsel %vm405, %v3529, inf
        %v3546 = vmin.f32 %v3541, %v3545
        %v3547 = vsel %vm405, %v3530, inf
        %v3548 = vmin.f32 %v3542, %v3547
        %v3549 = vsel %vm405, %v3531, inf
        %v3550 = vmin.f32 %v3543, %v3549
        %v3551 = vsel %vm405, %v3532, inf
        %v3552 = vmin.f32 %v3544, %v3551
        %v3553 = vsel %vm405, %v3533, inf
        %v3554 = vmin.f32 %v3546, %v3553
        %v3555 = vsel %vm405, %v3534, inf
        %v3556 = vmin.f32 %v3548, %v3555
        %v3557 = vsel %vm405, %v3535, inf
        %v3558 = vmin.f32 %v3550, %v3557
        %v3559 = vsel %vm405, %v3536, inf
        %v3560 = vmin.f32 %v3552, %v3559
        %v3561 = vsel %vm405, %v3537, inf
        %v3562 = vmin.f32 %v3554, %v3561
        %v3563 = vsel %vm405, %v3538, inf
        %v3564 = vmin.f32 %v3556, %v3563
        %v3565 = vsel %vm405, %v3539, inf
        %v3566 = vmin.f32 %v3558, %v3565
        %v3567 = vsel %vm405, %v3540, inf
        %v3568 = vmin.f32 %v3560, %v3567
        %v3569 = vmin.f32 %v3562, %v3564
        %v3570 = vmin.f32 %v3566, %v3568
        %v3571 = vmin.f32 %v3569, %v3570
        %v3572 = vrot.slane %v3571, 4
        %v3573 = vmin.f32 %v3571, %v3572
        %v3574 = vrot.slane %v3573, 2
        %v3575 = vmin.f32 %v3573, %v3574
        %v3576 = vrot.slane %v3575, 1
        %v3577 = vmin.f32 %v3575, %v3576
        %v3578 = vmin.f32 %v3444, %v3577
        %3579 = vst.msk [vmem:[#allocation4 + $0xe] sm:$0x1] %vm666, %v3578
        %v3580 = vld [vmem:[#allocation5 + $0xe] sm:$0x1]
        %v3581 = vsel %vm3509, %v279, -inf
        %v3582 = vsel %vm3510, %v280, -inf
        %v3583 = vsel %vm3511, %v281, -inf
        %v3584 = vsel %vm3512, %v282, -inf
        %v3585 = vsel %vm3513, %v283, -inf
        %v3586 = vsel %vm3514, %v284, -inf
        %v3587 = vsel %vm3515, %v285, -inf
        %v3588 = vsel %vm3516, %v286, -inf
        %v3589 = vsel %vm3517, %v287, -inf
        %v3590 = vsel %vm3518, %v288, -inf
        %v3591 = vsel %vm3519, %v289, -inf
        %v3592 = vsel %vm3520, %v290, -inf
        %v3593 = vsel %vm3521, %v291, -inf
        %v3594 = vsel %vm3522, %v292, -inf
        %v3595 = vsel %vm3523, %v293, -inf
        %v3596 = vsel %vm3524, %v294, -inf
        %v3597 = vsel %vm405, %v3581, -inf
        %v3598 = vsel %vm405, %v3582, -inf
        %v3599 = vsel %vm405, %v3583, -inf
        %v3600 = vsel %vm405, %v3584, -inf
        %v3601 = vsel %vm405, %v3585, -inf
        %v3602 = vmax.f32 %v3597, %v3601
        %v3603 = vsel %vm405, %v3586, -inf
        %v3604 = vmax.f32 %v3598, %v3603
        %v3605 = vsel %vm405, %v3587, -inf
        %v3606 = vmax.f32 %v3599, %v3605
        %v3607 = vsel %vm405, %v3588, -inf
        %v3608 = vmax.f32 %v3600, %v3607
        %v3609 = vsel %vm405, %v3589, -inf
        %v3610 = vmax.f32 %v3602, %v3609
        %v3611 = vsel %vm405, %v3590, -inf
        %v3612 = vmax.f32 %v3604, %v3611
        %v3613 = vsel %vm405, %v3591, -inf
        %v3614 = vmax.f32 %v3606, %v3613
        %v3615 = vsel %vm405, %v3592, -inf
        %v3616 = vmax.f32 %v3608, %v3615
        %v3617 = vsel %vm405, %v3593, -inf
        %v3618 = vmax.f32 %v3610, %v3617
        %v3619 = vsel %vm405, %v3594, -inf
        %v3620 = vmax.f32 %v3612, %v3619
        %v3621 = vsel %vm405, %v3595, -inf
        %v3622 = vmax.f32 %v3614, %v3621
        %v3623 = vsel %vm405, %v3596, -inf
        %v3624 = vmax.f32 %v3616, %v3623
        %v3625 = vmax.f32 %v3618, %v3620
        %v3626 = vmax.f32 %v3622, %v3624
        %v3627 = vmax.f32 %v3625, %v3626
        %v3628 = vrot.slane %v3627, 4
        %v3629 = vmax.f32 %v3627, %v3628
        %v3630 = vrot.slane %v3629, 2
        %v3631 = vmax.f32 %v3629, %v3630
        %v3632 = vrot.slane %v3631, 1
        %v3633 = vmax.f32 %v3631, %v3632
        %v3634 = vmax.f32 %v3580, %v3633
        %3635 = vst.msk [vmem:[#allocation5 + $0xe] sm:$0x1] %vm666, %v3634
        %vm3636 = vcmp.eq.s32.totalorder %v296, 15
        %vm3637 = vcmp.eq.s32.totalorder %v297, 15
        %vm3638 = vcmp.eq.s32.totalorder %v298, 15
        %vm3639 = vcmp.eq.s32.totalorder %v299, 15
        %vm3640 = vcmp.eq.s32.totalorder %v300, 15
        %vm3641 = vcmp.eq.s32.totalorder %v301, 15
        %vm3642 = vcmp.eq.s32.totalorder %v302, 15
        %vm3643 = vcmp.eq.s32.totalorder %v303, 15
        %vm3644 = vcmp.eq.s32.totalorder %v304, 15
        %vm3645 = vcmp.eq.s32.totalorder %v305, 15
        %vm3646 = vcmp.eq.s32.totalorder %v306, 15
        %vm3647 = vcmp.eq.s32.totalorder %v307, 15
        %vm3648 = vcmp.eq.s32.totalorder %v308, 15
        %vm3649 = vcmp.eq.s32.totalorder %v309, 15
        %vm3650 = vcmp.eq.s32.totalorder %v310, 15
        %vm3651 = vcmp.eq.s32.totalorder %v311, 15
        %v3652 = vld [vmem:[#allocation4 + $0xf] sm:$0x1]
        %v3653 = vsel %vm3636, 1, 0
        %v3654 = vsel %vm3637, 1, 0
        %v3655 = vsel %vm3638, 1, 0
        %v3656 = vsel %vm3639, 1, 0
        %v3657 = vsel %vm3640, 1, 0
        %v3658 = vsel %vm3641, 1, 0
        %v3659 = vsel %vm3642, 1, 0
        %v3660 = vsel %vm3643, 1, 0
        %v3661 = vsel %vm3644, 1, 0
        %v3662 = vsel %vm3645, 1, 0
        %v3663 = vsel %vm3646, 1, 0
        %v3664 = vsel %vm3647, 1, 0
        %v3665 = vsel %vm3648, 1, 0
        %v3666 = vsel %vm3649, 1, 0
        %v3667 = vsel %vm3650, 1, 0
        %v3668 = vsel %vm3651, 1, 0
        %3669 = vset.pattern.permute.xlu0 0
        %3670 = vperm.xlu0 %3669, %v3653
        %v3671 = vpop.permute.xlu0 %3670
        %3672 = vset.pattern.permute.xlu0 0
        %3673 = vperm.xlu0 %3672, %v3654
        %v3674 = vpop.permute.xlu0 %3673
        %3675 = vset.pattern.permute.xlu0 0
        %3676 = vperm.xlu0 %3675, %v3655
        %v3677 = vpop.permute.xlu0 %3676
        %3678 = vset.pattern.permute.xlu0 0
        %3679 = vperm.xlu0 %3678, %v3656
        %v3680 = vpop.permute.xlu0 %3679
        %3681 = vset.pattern.permute.xlu0 0
        %3682 = vperm.xlu0 %3681, %v3657
        %v3683 = vpop.permute.xlu0 %3682
        %3684 = vset.pattern.permute.xlu0 0
        %3685 = vperm.xlu0 %3684, %v3658
        %v3686 = vpop.permute.xlu0 %3685
        %3687 = vset.pattern.permute.xlu0 0
        %3688 = vperm.xlu0 %3687, %v3659
        %v3689 = vpop.permute.xlu0 %3688
        %3690 = vset.pattern.permute.xlu0 0
        %3691 = vperm.xlu0 %3690, %v3660
        %v3692 = vpop.permute.xlu0 %3691
        %3693 = vset.pattern.permute.xlu0 0
        %3694 = vperm.xlu0 %3693, %v3661
        %v3695 = vpop.permute.xlu0 %3694
        %3696 = vset.pattern.permute.xlu0 0
        %3697 = vperm.xlu0 %3696, %v3662
        %v3698 = vpop.permute.xlu0 %3697
        %3699 = vset.pattern.permute.xlu0 0
        %3700 = vperm.xlu0 %3699, %v3663
        %v3701 = vpop.permute.xlu0 %3700
        %3702 = vset.pattern.permute.xlu0 0
        %3703 = vperm.xlu0 %3702, %v3664
        %v3704 = vpop.permute.xlu0 %3703
        %3705 = vset.pattern.permute.xlu0 0
        %3706 = vperm.xlu0 %3705, %v3665
        %v3707 = vpop.permute.xlu0 %3706
        %3708 = vset.pattern.permute.xlu0 0
        %3709 = vperm.xlu0 %3708, %v3666
        %v3710 = vpop.permute.xlu0 %3709
        %3711 = vset.pattern.permute.xlu0 0
        %3712 = vperm.xlu0 %3711, %v3667
        %v3713 = vpop.permute.xlu0 %3712
        %3714 = vset.pattern.permute.xlu0 0
        %3715 = vperm.xlu0 %3714, %v3668
        %v3716 = vpop.permute.xlu0 %3715
        %vm3717 = vcmp.eq.s32.totalorder %v3671, 1
        %vm3718 = vcmp.eq.s32.totalorder %v3674, 1
        %vm3719 = vcmp.eq.s32.totalorder %v3677, 1
        %vm3720 = vcmp.eq.s32.totalorder %v3680, 1
        %vm3721 = vcmp.eq.s32.totalorder %v3683, 1
        %vm3722 = vcmp.eq.s32.totalorder %v3686, 1
        %vm3723 = vcmp.eq.s32.totalorder %v3689, 1
        %vm3724 = vcmp.eq.s32.totalorder %v3692, 1
        %vm3725 = vcmp.eq.s32.totalorder %v3695, 1
        %vm3726 = vcmp.eq.s32.totalorder %v3698, 1
        %vm3727 = vcmp.eq.s32.totalorder %v3701, 1
        %vm3728 = vcmp.eq.s32.totalorder %v3704, 1
        %vm3729 = vcmp.eq.s32.totalorder %v3707, 1
        %vm3730 = vcmp.eq.s32.totalorder %v3710, 1
        %vm3731 = vcmp.eq.s32.totalorder %v3713, 1
        %vm3732 = vcmp.eq.s32.totalorder %v3716, 1
        %v3733 = vsel %vm3717, %v279, inf
        %v3734 = vsel %vm3718, %v280, inf
        %v3735 = vsel %vm3719, %v281, inf
        %v3736 = vsel %vm3720, %v282, inf
        %v3737 = vsel %vm3721, %v283, inf
        %v3738 = vsel %vm3722, %v284, inf
        %v3739 = vsel %vm3723, %v285, inf
        %v3740 = vsel %vm3724, %v286, inf
        %v3741 = vsel %vm3725, %v287, inf
        %v3742 = vsel %vm3726, %v288, inf
        %v3743 = vsel %vm3727, %v289, inf
        %v3744 = vsel %vm3728, %v290, inf
        %v3745 = vsel %vm3729, %v291, inf
        %v3746 = vsel %vm3730, %v292, inf
        %v3747 = vsel %vm3731, %v293, inf
        %v3748 = vsel %vm3732, %v294, inf
        %v3749 = vsel %vm405, %v3733, inf
        %v3750 = vsel %vm405, %v3734, inf
        %v3751 = vsel %vm405, %v3735, inf
        %v3752 = vsel %vm405, %v3736, inf
        %v3753 = vsel %vm405, %v3737, inf
        %v3754 = vmin.f32 %v3749, %v3753
        %v3755 = vsel %vm405, %v3738, inf
        %v3756 = vmin.f32 %v3750, %v3755
        %v3757 = vsel %vm405, %v3739, inf
        %v3758 = vmin.f32 %v3751, %v3757
        %v3759 = vsel %vm405, %v3740, inf
        %v3760 = vmin.f32 %v3752, %v3759
        %v3761 = vsel %vm405, %v3741, inf
        %v3762 = vmin.f32 %v3754, %v3761
        %v3763 = vsel %vm405, %v3742, inf
        %v3764 = vmin.f32 %v3756, %v3763
        %v3765 = vsel %vm405, %v3743, inf
        %v3766 = vmin.f32 %v3758, %v3765
        %v3767 = vsel %vm405, %v3744, inf
        %v3768 = vmin.f32 %v3760, %v3767
        %v3769 = vsel %vm405, %v3745, inf
        %v3770 = vmin.f32 %v3762, %v3769
        %v3771 = vsel %vm405, %v3746, inf
        %v3772 = vmin.f32 %v3764, %v3771
        %v3773 = vsel %vm405, %v3747, inf
        %v3774 = vmin.f32 %v3766, %v3773
        %v3775 = vsel %vm405, %v3748, inf
        %v3776 = vmin.f32 %v3768, %v3775
        %v3777 = vmin.f32 %v3770, %v3772
        %v3778 = vmin.f32 %v3774, %v3776
        %v3779 = vmin.f32 %v3777, %v3778
        %v3780 = vrot.slane %v3779, 4
        %v3781 = vmin.f32 %v3779, %v3780
        %v3782 = vrot.slane %v3781, 2
        %v3783 = vmin.f32 %v3781, %v3782
        %v3784 = vrot.slane %v3783, 1
        %v3785 = vmin.f32 %v3783, %v3784
        %v3786 = vmin.f32 %v3652, %v3785
        %3787 = vst.msk [vmem:[#allocation4 + $0xf] sm:$0x1] %vm666, %v3786
        %v3788 = vld [vmem:[#allocation5 + $0xf] sm:$0x1]
        %v3789 = vsel %vm3717, %v279, -inf
        %v3790 = vsel %vm3718, %v280, -inf
        %v3791 = vsel %vm3719, %v281, -inf
        %v3792 = vsel %vm3720, %v282, -inf
        %v3793 = vsel %vm3721, %v283, -inf
        %v3794 = vsel %vm3722, %v284, -inf
        %v3795 = vsel %vm3723, %v285, -inf
        %v3796 = vsel %vm3724, %v286, -inf
        %v3797 = vsel %vm3725, %v287, -inf
        %v3798 = vsel %vm3726, %v288, -inf
        %v3799 = vsel %vm3727, %v289, -inf
        %v3800 = vsel %vm3728, %v290, -inf
        %v3801 = vsel %vm3729, %v291, -inf
        %v3802 = vsel %vm3730, %v292, -inf
        %v3803 = vsel %vm3731, %v293, -inf
        %v3804 = vsel %vm3732, %v294, -inf
        %v3805 = vsel %vm405, %v3789, -inf
        %v3806 = vsel %vm405, %v3790, -inf
        %v3807 = vsel %vm405, %v3791, -inf
        %v3808 = vsel %vm405, %v3792, -inf
        %v3809 = vsel %vm405, %v3793, -inf
        %v3810 = vmax.f32 %v3805, %v3809
        %v3811 = vsel %vm405, %v3794, -inf
        %v3812 = vmax.f32 %v3806, %v3811
        %v3813 = vsel %vm405, %v3795, -inf
        %v3814 = vmax.f32 %v3807, %v3813
        %v3815 = vsel %vm405, %v3796, -inf
        %v3816 = vmax.f32 %v3808, %v3815
        %v3817 = vsel %vm405, %v3797, -inf
        %v3818 = vmax.f32 %v3810, %v3817
        %v3819 = vsel %vm405, %v3798, -inf
        %v3820 = vmax.f32 %v3812, %v3819
        %v3821 = vsel %vm405, %v3799, -inf
        %v3822 = vmax.f32 %v3814, %v3821
        %v3823 = vsel %vm405, %v3800, -inf
        %v3824 = vmax.f32 %v3816, %v3823
        %v3825 = vsel %vm405, %v3801, -inf
        %v3826 = vmax.f32 %v3818, %v3825
        %v3827 = vsel %vm405, %v3802, -inf
        %v3828 = vmax.f32 %v3820, %v3827
        %v3829 = vsel %vm405, %v3803, -inf
        %v3830 = vmax.f32 %v3822, %v3829
        %v3831 = vsel %vm405, %v3804, -inf
        %v3832 = vmax.f32 %v3824, %v3831
        %v3833 = vmax.f32 %v3826, %v3828
        %v3834 = vmax.f32 %v3830, %v3832
        %v3835 = vmax.f32 %v3833, %v3834
        %v3836 = vrot.slane %v3835, 4
        %v3837 = vmax.f32 %v3835, %v3836
        %v3838 = vrot.slane %v3837, 2
        %v3839 = vmax.f32 %v3837, %v3838
        %v3840 = vrot.slane %v3839, 1
        %v3841 = vmax.f32 %v3839, %v3840
        %v3842 = vmax.f32 %v3788, %v3841
        %3843 = vst.msk [vmem:[#allocation5 + $0xf] sm:$0x1] %vm666, %v3842
        %p3844 = scmp.eq.s32.totalorder %s18, 1
        // Predicated region
        $region49: #{tpu_custom_call.1} parent=39 // pred_check
          %p3845 = pneg %p3844
        $region50: #{tpu_custom_call.1} parent=39 // pred_check_branch
          %3847 = sbr.rel (%p3845) target = $region52
        $region51: #{tpu_custom_call.1} parent=39 // pred_region
          %v3848 = vld [vmem:[#allocation6] sm:$0xff]
          %v3849 = vld [vmem:[#allocation6 + $0x8] sm:$0xff]
          %v3850 = vld [vmem:[#allocation2] sm:$0xff]
          %v3851 = vld [vmem:[#allocation2 + $0x8] sm:$0xff]
          %v3852 = vld [vmem:[#allocation3] sm:$0xff]
          %v3853 = vld [vmem:[#allocation3 + $0x8] sm:$0xff]
          %v3854 = vmax.f32 %v3852, 1.0
          %v3855 = vmax.f32 %v3853, 1.0
          %v3856 = vrcp.pop %v3854
          %v3857 = vrcp.pop %v3855
          %3859 = vset.pattern.permute.xlu0 0
          %3860 = vperm.xlu0 %3859, %v3856
          %v3861 = vpop.permute.xlu0 %3860
          %3864 = vset.pattern.permute.xlu0 0
          %3865 = vperm.xlu0 %3864, %v3857
          %v3866 = vpop.permute.xlu0 %3865
          %v3868 = vmul.f32 %v3850, %v3861
          %v3869 = vmul.f32 %v3851, %v3866
          %v3870 = vmul.f32 %v3868, %v3868
          %v3871 = vmul.f32 %v3869, %v3869
          %3874 = vrot.lane.b32.xlu0 %v3870, 32
          %v3875 = vpop.permute.xlu0 %3874
          %3876 = vrot.lane.b32.xlu0 %v3871, 32
          %v3877 = vpop.permute.xlu0 %3876
          %v3880 = vsub.f32 %v3868, %v3875
          %v3881 = vsub.f32 %v3869, %v3877
          %v3882 = vld [vmem:[#allocation4] sm:$0xff]
          %v3883 = vld [vmem:[#allocation4 + $0x8] sm:$0xff]
          %v3884 = vld [vmem:[#allocation5] sm:$0xff]
          %v3885 = vld [vmem:[#allocation5 + $0x8] sm:$0xff]
          %3888 = vrot.lane.b32.xlu0 %v3850, 32
          %v3889 = vpop.permute.xlu0 %3888
          %3890 = vrot.lane.b32.xlu0 %v3851, 32
          %v3891 = vpop.permute.xlu0 %3890
          %3896 = vrot.lane.b32.xlu0 %v3882, 64
          %v3897 = vpop.permute.xlu0 %3896
          %3898 = vrot.lane.b32.xlu0 %v3883, 64
          %v3899 = vpop.permute.xlu0 %3898
          %3904 = vrot.lane.b32.xlu0 %v3884, 96
          %v3905 = vpop.permute.xlu0 %3904
          %3906 = vrot.lane.b32.xlu0 %v3885, 96
          %v3907 = vpop.permute.xlu0 %3906
          %3912 = vrot.lane.b32.xlu0 %v3880, 96
          %v3913 = vpop.permute.xlu0 %3912
          %3914 = vrot.lane.b32.xlu0 %v3881, 96
          %v3915 = vpop.permute.xlu0 %3914
          %v3916 = vsel %vm405, %v3848, %v3889
          %v3917 = vsel %vm405, %v3849, %v3891
          %v3918 = vsel %vm501, %v3916, %v3897
          %v3919 = vsel %vm501, %v3917, %v3899
          %vm3920 = vcmask 785408
          %v3921 = vsel %vm3920, %v3918, %v3905
          %v3922 = vsel %vm3920, %v3919, %v3907
          %v3923 = vld [vmem:[%s4 + $0x220] sm:$0xff]
          %v3924 = vld [vmem:[%s4] sm:$0xff]
          %v3925 = vld [vmem:[%s4 + $0x8] sm:$0xff]
          %v3926 = vld [vmem:[%s4 + $0x10] sm:$0xff]
          %v3927 = vld [vmem:[%s4 + $0x18] sm:$0xff]
          %v3928 = vld [vmem:[%s4 + $0x20] sm:$0xff]
          %v3929 = vld [vmem:[%s4 + $0x28] sm:$0xff]
          %v3930 = vld [vmem:[%s4 + $0x30] sm:$0xff]
          %v3931 = vld [vmem:[%s4 + $0x38] sm:$0xff]
          %v3932 = vld [vmem:[%s4 + $0x40] sm:$0xff]
          %v3933 = vld [vmem:[%s4 + $0x48] sm:$0xff]
          %v3934 = vld [vmem:[%s4 + $0x50] sm:$0xff]
          %v3935 = vld [vmem:[%s4 + $0x58] sm:$0xff]
          %v3936 = vld [vmem:[%s4 + $0x60] sm:$0xff]
          %v3937 = vld [vmem:[%s4 + $0x68] sm:$0xff]
          %v3938 = vld [vmem:[%s4 + $0x70] sm:$0xff]
          %v3939 = vld [vmem:[%s4 + $0x78] sm:$0xff]
          %v3940 = vld [vmem:[%s4 + $0x80] sm:$0xff]
          %v3941 = vld [vmem:[%s4 + $0x88] sm:$0xff]
          %v3942 = vld [vmem:[%s4 + $0x90] sm:$0xff]
          %v3943 = vld [vmem:[%s4 + $0x98] sm:$0xff]
          %v3944 = vlaneseq
          %v3945 = vshrl.u32 %v3944, 7
          %v3946 = vsub.s32 0, %v3945
          %v3947 = vrot.slane %v3923, %v3946
          %v3948 = vsel %vm405, %v3913, 0
          %v3950 = vsel %vm405, %v3915, 0
          %3952 = vmatprep.subr.mxu0 0.0
          %3953 = vmatpush1.msra.mxu0 %v3924
          %3954 = vmatprep.subr.mxu0 0.0
          %3955 = vmatpush1.msra.mxu0 %v3925
          %3956 = vmatprep.subr.mxu0 0.0
          %3957 = vmatpush1.msra.mxu0 %v3926
          %3958 = vmatprep.subr.mxu0 0.0
          %3959 = vmatpush1.msra.mxu0 %v3927
          %3960 = vmatprep.subr.mxu0 0.0
          %3961 = vmatpush1.msra.mxu0 %v3928
          %3962 = vmatprep.subr.mxu0 0.0
          %3963 = vmatpush1.msra.mxu0 %v3929
          %3964 = vmatprep.subr.mxu0 0.0
          %3965 = vmatpush1.msra.mxu0 %v3930
          %3966 = vmatprep.subr.mxu0 0.0
          %3967 = vmatpush1.msra.mxu0 %v3931
          %3968 = vmatprep.subr.mxu0 0.0
          %3969 = vmatpush1.msra.mxu0 %v3932
          %3970 = vmatprep.subr.mxu0 0.0
          %3971 = vmatpush1.msra.mxu0 %v3933
          %3972 = vmatprep.subr.mxu0 0.0
          %3973 = vmatpush1.msra.mxu0 %v3934
          %3974 = vmatprep.subr.mxu0 0.0
          %3975 = vmatpush1.msra.mxu0 %v3935
          %3976 = vmatprep.subr.mxu0 0.0
          %3977 = vmatpush1.msra.mxu0 %v3936
          %3978 = vmatprep.subr.mxu0 0.0
          %3979 = vmatpush1.msra.mxu0 %v3937
          %3980 = vmatprep.subr.mxu0 0.0
          %3981 = vmatpush1.msra.mxu0 %v3938
          %3982 = vmatprep.subr.mxu0 0.0
          %3983 = vmatpush1.msra.mxu0 %v3939
          %3984 = vmatprep.subr.mxu0 0.0
          %3985 = vmatpush1.msra.mxu0 %v3940
          %3986 = vmatprep.subr.mxu0 0.0
          %3987 = vmatpush1.msra.mxu0 %v3941
          %3988 = vmatprep.subr.mxu0 0.0
          %3989 = vmatpush1.msra.mxu0 %v3942
          %3990 = vmatprep.subr.mxu0 0.0
          %3991 = vmatpush1.msra.mxu0 %v3943
          %3992 = vmatprep.subr.mxu0 0.0
          %3993 = vmatpush1.msra.mxu0 0.0
          %3994 = vmatprep.subr.mxu0 0.0
          %3995 = vmatpush1.msra.mxu0 0.0
          %3996 = vmatprep.subr.mxu0 0.0
          %3997 = vmatpush1.msra.mxu0 0.0
          %3998 = vmatprep.subr.mxu0 0.0
          %3999 = vmatpush1.msra.mxu0 0.0
          %4000 = vmatprep.subr.mxu0 0.0
          %4001 = vmatpush1.msra.mxu0 0.0
          %4002 = vmatprep.subr.mxu0 0.0
          %4003 = vmatpush1.msra.mxu0 0.0
          %4004 = vmatprep.subr.mxu0 0.0
          %4005 = vmatpush1.msra.mxu0 0.0
          %4006 = vmatprep.subr.mxu0 0.0
          %4007 = vmatpush1.msra.mxu0 0.0
          %4008 = vmatprep.subr.mxu0 0.0
          %4009 = vmatpush1.msra.mxu0 0.0
          %4010 = vmatprep.subr.mxu0 0.0
          %4011 = vmatpush1.msra.mxu0 0.0
          %4012 = vmatprep.subr.mxu0 0.0
          %4013 = vmatpush1.msra.mxu0 0.0
          %4014 = vmatprep.subr.mxu0 0.0
          %4015 = vmatpush1.msra.mxu0 0.0
          %4016 = vmatprep.mubr.f32.mxu0 %v3948
          %4017 = vmatmul.mubr.f32.gmra.mrb[0].mxu0 %v3921
          %v4018 = vpop.f32.mrb[0].mxu0
          %v4019 = vadd.f32 %v3947, %v4018
          %v4020 = vpop.f32.mrb[0].mxu0
          %4021 = vmatprep.mubr.f32.mxu0 %v3950
          %4022 = vmatmul.mubr.f32.gmra.mrb[0].mxu0 %v3922
          %v4023 = vpop.f32.mrb[0].mxu0
          %v4024 = vadd.f32 %v3947, %v4023
          %v4025 = vpop.f32.mrb[0].mxu0
          %4026 = vdwg.mxu0
          %v4027 = vmax.f32 %v4019, 0.0
          %v4028 = vmax.f32 %v4024, 0.0
          %v4029 = vld [vmem:[%s4 + $0xa0] sm:$0xff]
          %v4030 = vld [vmem:[%s4 + $0xa8] sm:$0xff]
          %v4031 = vld [vmem:[%s4 + $0xb0] sm:$0xff]
          %v4032 = vld [vmem:[%s4 + $0xb8] sm:$0xff]
          %v4033 = vld [vmem:[%s4 + $0xc0] sm:$0xff]
          %v4034 = vld [vmem:[%s4 + $0xc8] sm:$0xff]
          %v4035 = vld [vmem:[%s4 + $0xd0] sm:$0xff]
          %v4036 = vld [vmem:[%s4 + $0xd8] sm:$0xff]
          %v4037 = vld [vmem:[%s4 + $0xe0] sm:$0xff]
          %v4038 = vld [vmem:[%s4 + $0xe8] sm:$0xff]
          %v4039 = vld [vmem:[%s4 + $0xf0] sm:$0xff]
          %v4040 = vld [vmem:[%s4 + $0xf8] sm:$0xff]
          %v4041 = vld [vmem:[%s4 + $0x100] sm:$0xff]
          %v4042 = vld [vmem:[%s4 + $0x108] sm:$0xff]
          %v4043 = vld [vmem:[%s4 + $0x110] sm:$0xff]
          %v4044 = vld [vmem:[%s4 + $0x118] sm:$0xff]
          %v4045 = vlaneseq
          %v4046 = vshrl.u32 %v4045, 7
          %v4047 = vsub.s32 1, %v4046
          %v4048 = vrot.slane %v3923, %v4047
          %4049 = vmatprep.subr.mxu0 0.0
          %4050 = vmatpush1.msra.mxu0 %v4029
          %4051 = vmatprep.subr.mxu0 0.0
          %4052 = vmatpush1.msra.mxu0 %v4030
          %4053 = vmatprep.subr.mxu0 0.0
          %4054 = vmatpush1.msra.mxu0 %v4031
          %4055 = vmatprep.subr.mxu0 0.0
          %4056 = vmatpush1.msra.mxu0 %v4032
          %4057 = vmatprep.subr.mxu0 0.0
          %4058 = vmatpush1.msra.mxu0 %v4033
          %4059 = vmatprep.subr.mxu0 0.0
          %4060 = vmatpush1.msra.mxu0 %v4034
          %4061 = vmatprep.subr.mxu0 0.0
          %4062 = vmatpush1.msra.mxu0 %v4035
          %4063 = vmatprep.subr.mxu0 0.0
          %4064 = vmatpush1.msra.mxu0 %v4036
          %4065 = vmatprep.subr.mxu0 0.0
          %4066 = vmatpush1.msra.mxu0 %v4037
          %4067 = vmatprep.subr.mxu0 0.0
          %4068 = vmatpush1.msra.mxu0 %v4038
          %4069 = vmatprep.subr.mxu0 0.0
          %4070 = vmatpush1.msra.mxu0 %v4039
          %4071 = vmatprep.subr.mxu0 0.0
          %4072 = vmatpush1.msra.mxu0 %v4040
          %4073 = vmatprep.subr.mxu0 0.0
          %4074 = vmatpush1.msra.mxu0 %v4041
          %4075 = vmatprep.subr.mxu0 0.0
          %4076 = vmatpush1.msra.mxu0 %v4042
          %4077 = vmatprep.subr.mxu0 0.0
          %4078 = vmatpush1.msra.mxu0 %v4043
          %4079 = vmatprep.subr.mxu0 0.0
          %4080 = vmatpush1.msra.mxu0 %v4044
          %4081 = vmatprep.subr.mxu0 0.0
          %4082 = vmatpush1.msra.mxu0 0.0
          %4083 = vmatprep.subr.mxu0 0.0
          %4084 = vmatpush1.msra.mxu0 0.0
          %4085 = vmatprep.subr.mxu0 0.0
          %4086 = vmatpush1.msra.mxu0 0.0
          %4087 = vmatprep.subr.mxu0 0.0
          %4088 = vmatpush1.msra.mxu0 0.0
          %4089 = vmatprep.subr.mxu0 0.0
          %4090 = vmatpush1.msra.mxu0 0.0
          %4091 = vmatprep.subr.mxu0 0.0
          %4092 = vmatpush1.msra.mxu0 0.0
          %4093 = vmatprep.subr.mxu0 0.0
          %4094 = vmatpush1.msra.mxu0 0.0
          %4095 = vmatprep.subr.mxu0 0.0
          %4096 = vmatpush1.msra.mxu0 0.0
          %4097 = vmatprep.subr.mxu0 0.0
          %4098 = vmatpush1.msra.mxu0 0.0
          %4099 = vmatprep.subr.mxu0 0.0
          %4100 = vmatpush1.msra.mxu0 0.0
          %4101 = vmatprep.subr.mxu0 0.0
          %4102 = vmatpush1.msra.mxu0 0.0
          %4103 = vmatprep.subr.mxu0 0.0
          %4104 = vmatpush1.msra.mxu0 0.0
          %4105 = vmatprep.subr.mxu0 0.0
          %4106 = vmatpush1.msra.mxu0 0.0
          %4107 = vmatprep.subr.mxu0 0.0
          %4108 = vmatpush1.msra.mxu0 0.0
          %4109 = vmatprep.subr.mxu0 0.0
          %4110 = vmatpush1.msra.mxu0 0.0
          %4111 = vmatprep.subr.mxu0 0.0
          %4112 = vmatpush1.msra.mxu0 0.0
          %4113 = vmatprep.mubr.f32.mxu0 0.0
          %4114 = vmatmul.mubr.f32.gmra.mrb[0].mxu0 %v4027
          %v4115 = vpop.f32.mrb[0].mxu0
          %v4116 = vadd.f32 %v4048, %v4115
          %v4117 = vpop.f32.mrb[0].mxu0
          %4118 = vmatprep.mubr.f32.mxu0 0.0
          %4119 = vmatmul.mubr.f32.gmra.mrb[0].mxu0 %v4028
          %v4120 = vpop.f32.mrb[0].mxu0
          %v4121 = vadd.f32 %v4048, %v4120
          %v4122 = vpop.f32.mrb[0].mxu0
          %4123 = vdwg.mxu0
          %v4124 = vmax.f32 %v4116, 0.0
          %v4125 = vmax.f32 %v4121, 0.0
          %v4126 = vld [vmem:[%s4 + $0x120] sm:$0xff]
          %v4127 = vld [vmem:[%s4 + $0x128] sm:$0xff]
          %v4128 = vld [vmem:[%s4 + $0x130] sm:$0xff]
          %v4129 = vld [vmem:[%s4 + $0x138] sm:$0xff]
          %v4130 = vld [vmem:[%s4 + $0x140] sm:$0xff]
          %v4131 = vld [vmem:[%s4 + $0x148] sm:$0xff]
          %v4132 = vld [vmem:[%s4 + $0x150] sm:$0xff]
          %v4133 = vld [vmem:[%s4 + $0x158] sm:$0xff]
          %v4134 = vld [vmem:[%s4 + $0x160] sm:$0xff]
          %v4135 = vld [vmem:[%s4 + $0x168] sm:$0xff]
          %v4136 = vld [vmem:[%s4 + $0x170] sm:$0xff]
          %v4137 = vld [vmem:[%s4 + $0x178] sm:$0xff]
          %v4138 = vld [vmem:[%s4 + $0x180] sm:$0xff]
          %v4139 = vld [vmem:[%s4 + $0x188] sm:$0xff]
          %v4140 = vld [vmem:[%s4 + $0x190] sm:$0xff]
          %v4141 = vld [vmem:[%s4 + $0x198] sm:$0xff]
          %v4142 = vlaneseq
          %v4143 = vshrl.u32 %v4142, 7
          %v4144 = vsub.s32 2, %v4143
          %v4145 = vrot.slane %v3923, %v4144
          %4146 = vmatprep.subr.mxu0 0.0
          %4147 = vmatpush1.msra.mxu0 %v4126
          %4148 = vmatprep.subr.mxu0 0.0
          %4149 = vmatpush1.msra.mxu0 %v4127
          %4150 = vmatprep.subr.mxu0 0.0
          %4151 = vmatpush1.msra.mxu0 %v4128
          %4152 = vmatprep.subr.mxu0 0.0
          %4153 = vmatpush1.msra.mxu0 %v4129
          %4154 = vmatprep.subr.mxu0 0.0
          %4155 = vmatpush1.msra.mxu0 %v4130
          %4156 = vmatprep.subr.mxu0 0.0
          %4157 = vmatpush1.msra.mxu0 %v4131
          %4158 = vmatprep.subr.mxu0 0.0
          %4159 = vmatpush1.msra.mxu0 %v4132
          %4160 = vmatprep.subr.mxu0 0.0
          %4161 = vmatpush1.msra.mxu0 %v4133
          %4162 = vmatprep.subr.mxu0 0.0
          %4163 = vmatpush1.msra.mxu0 %v4134
          %4164 = vmatprep.subr.mxu0 0.0
          %4165 = vmatpush1.msra.mxu0 %v4135
          %4166 = vmatprep.subr.mxu0 0.0
          %4167 = vmatpush1.msra.mxu0 %v4136
          %4168 = vmatprep.subr.mxu0 0.0
          %4169 = vmatpush1.msra.mxu0 %v4137
          %4170 = vmatprep.subr.mxu0 0.0
          %4171 = vmatpush1.msra.mxu0 %v4138
          %4172 = vmatprep.subr.mxu0 0.0
          %4173 = vmatpush1.msra.mxu0 %v4139
          %4174 = vmatprep.subr.mxu0 0.0
          %4175 = vmatpush1.msra.mxu0 %v4140
          %4176 = vmatprep.subr.mxu0 0.0
          %4177 = vmatpush1.msra.mxu0 %v4141
          %4178 = vmatprep.subr.mxu0 0.0
          %4179 = vmatpush1.msra.mxu0 0.0
          %4180 = vmatprep.subr.mxu0 0.0
          %4181 = vmatpush1.msra.mxu0 0.0
          %4182 = vmatprep.subr.mxu0 0.0
          %4183 = vmatpush1.msra.mxu0 0.0
          %4184 = vmatprep.subr.mxu0 0.0
          %4185 = vmatpush1.msra.mxu0 0.0
          %4186 = vmatprep.subr.mxu0 0.0
          %4187 = vmatpush1.msra.mxu0 0.0
          %4188 = vmatprep.subr.mxu0 0.0
          %4189 = vmatpush1.msra.mxu0 0.0
          %4190 = vmatprep.subr.mxu0 0.0
          %4191 = vmatpush1.msra.mxu0 0.0
          %4192 = vmatprep.subr.mxu0 0.0
          %4193 = vmatpush1.msra.mxu0 0.0
          %4194 = vmatprep.subr.mxu0 0.0
          %4195 = vmatpush1.msra.mxu0 0.0
          %4196 = vmatprep.subr.mxu0 0.0
          %4197 = vmatpush1.msra.mxu0 0.0
          %4198 = vmatprep.subr.mxu0 0.0
          %4199 = vmatpush1.msra.mxu0 0.0
          %4200 = vmatprep.subr.mxu0 0.0
          %4201 = vmatpush1.msra.mxu0 0.0
          %4202 = vmatprep.subr.mxu0 0.0
          %4203 = vmatpush1.msra.mxu0 0.0
          %4204 = vmatprep.subr.mxu0 0.0
          %4205 = vmatpush1.msra.mxu0 0.0
          %4206 = vmatprep.subr.mxu0 0.0
          %4207 = vmatpush1.msra.mxu0 0.0
          %4208 = vmatprep.subr.mxu0 0.0
          %4209 = vmatpush1.msra.mxu0 0.0
          %4210 = vmatprep.mubr.f32.mxu0 0.0
          %4211 = vmatmul.mubr.f32.gmra.mrb[0].mxu0 %v4124
          %v4212 = vpop.f32.mrb[0].mxu0
          %v4213 = vadd.f32 %v4145, %v4212
          %v4214 = vpop.f32.mrb[0].mxu0
          %4215 = vmatprep.mubr.f32.mxu0 0.0
          %4216 = vmatmul.mubr.f32.gmra.mrb[0].mxu0 %v4125
          %v4217 = vpop.f32.mrb[0].mxu0
          %v4218 = vadd.f32 %v4145, %v4217
          %v4219 = vpop.f32.mrb[0].mxu0
          %4220 = vdwg.mxu0
          %v4221 = vmax.f32 %v4213, 0.0
          %v4222 = vmax.f32 %v4218, 0.0
          %v4223 = vlaneseq
          %v4224 = vand.u32 %v4223, 127
          %4225 = vadd.xlane.f32.xlu0 %v4221
          %v4226 = vpop.xlane.xlu0 %4225
          %4227 = vadd.xlane.f32.xlu0 %v4222
          %v4228 = vpop.xlane.xlu0 %4227
          %v4229 = vmul.f32 %v4226, 0.015625
          %v4230 = vmul.f32 %v4228, 0.015625
          %v4231 = vsub.f32 %v4221, %v4229
          %v4232 = vsub.f32 %v4222, %v4230
          %vm4233 = vcmp.lt.s32.totalorder %v4224, 64
          %v4234 = vmul.f32 %v4231, %v4231
          %v4235 = vmul.f32 %v4232, %v4232
          %v4236 = vsel %vm4233, 1, 0
          %vm4237 = vcmp.eq.s32.totalorder %v4236, 1
          %v4238 = vsel %vm4237, %v4234, 0.0
          %v4239 = vsel %vm4237, %v4235, 0.0
          %4240 = vadd.xlane.f32.xlu0 %v4238
          %v4241 = vpop.xlane.xlu0 %4240
          %4242 = vadd.xlane.f32.xlu0 %v4239
          %v4243 = vpop.xlane.xlu0 %4242
          %v4244 = vmul.f32 %v4241, 0.015625
          %v4245 = vmul.f32 %v4243, 0.015625
          %v4246 = vadd.f32 %v4244, 1e-05
          %v4247 = vadd.f32 %v4245, 1e-05
          %v4248 = vrsqrt.pop %v4246
          %v4249 = vrsqrt.pop %v4247
          %v4250 = vmul.f32 %v4231, %v4248
          %v4251 = vmul.f32 %v4232, %v4249
          %v4252 = vlaneseq
          %v4253 = vshrl.u32 %v4252, 7
          %v4254 = vsub.s32 3, %v4253
          %v4255 = vrot.slane %v3923, %v4254
          %v4256 = vmul.f32 %v4250, %v4255
          %v4257 = vmul.f32 %v4251, %v4255
          %v4258 = vlaneseq
          %v4259 = vshrl.u32 %v4258, 7
          %v4260 = vsub.s32 4, %v4259
          %v4261 = vrot.slane %v3923, %v4260
          %v4262 = vadd.f32 %v4256, %v4261
          %v4263 = vadd.f32 %v4257, %v4261
          %v4264 = vld [vmem:[%s4 + $0x1a0] sm:$0xff]
          %v4265 = vld [vmem:[%s4 + $0x1a8] sm:$0xff]
          %v4266 = vld [vmem:[%s4 + $0x1b0] sm:$0xff]
          %v4267 = vld [vmem:[%s4 + $0x1b8] sm:$0xff]
          %v4268 = vld [vmem:[%s4 + $0x1c0] sm:$0xff]
          %v4269 = vld [vmem:[%s4 + $0x1c8] sm:$0xff]
          %v4270 = vld [vmem:[%s4 + $0x1d0] sm:$0xff]
          %v4271 = vld [vmem:[%s4 + $0x1d8] sm:$0xff]
          %v4272 = vld [vmem:[%s4 + $0x1e0] sm:$0xff]
          %v4273 = vld [vmem:[%s4 + $0x1e8] sm:$0xff]
          %v4274 = vld [vmem:[%s4 + $0x1f0] sm:$0xff]
          %v4275 = vld [vmem:[%s4 + $0x1f8] sm:$0xff]
          %v4276 = vld [vmem:[%s4 + $0x200] sm:$0xff]
          %v4277 = vld [vmem:[%s4 + $0x208] sm:$0xff]
          %v4278 = vld [vmem:[%s4 + $0x210] sm:$0xff]
          %v4279 = vld [vmem:[%s4 + $0x218] sm:$0xff]
          %v4280 = vlaneseq
          %v4281 = vshrl.u32 %v4280, 7
          %v4282 = vsub.s32 5, %v4281
          %v4283 = vrot.slane %v3923, %v4282
          %4284 = vmatprep.subr.mxu0 0.0
          %4285 = vmatpush1.msra.mxu0 %v4264
          %4286 = vmatprep.subr.mxu0 0.0
          %4287 = vmatpush1.msra.mxu0 %v4265
          %4288 = vmatprep.subr.mxu0 0.0
          %4289 = vmatpush1.msra.mxu0 %v4266
          %4290 = vmatprep.subr.mxu0 0.0
          %4291 = vmatpush1.msra.mxu0 %v4267
          %4292 = vmatprep.subr.mxu0 0.0
          %4293 = vmatpush1.msra.mxu0 %v4268
          %4294 = vmatprep.subr.mxu0 0.0
          %4295 = vmatpush1.msra.mxu0 %v4269
          %4296 = vmatprep.subr.mxu0 0.0
          %4297 = vmatpush1.msra.mxu0 %v4270
          %4298 = vmatprep.subr.mxu0 0.0
          %4299 = vmatpush1.msra.mxu0 %v4271
          %4300 = vmatprep.subr.mxu0 0.0
          %4301 = vmatpush1.msra.mxu0 %v4272
          %4302 = vmatprep.subr.mxu0 0.0
          %4303 = vmatpush1.msra.mxu0 %v4273
          %4304 = vmatprep.subr.mxu0 0.0
          %4305 = vmatpush1.msra.mxu0 %v4274
          %4306 = vmatprep.subr.mxu0 0.0
          %4307 = vmatpush1.msra.mxu0 %v4275
          %4308 = vmatprep.subr.mxu0 0.0
          %4309 = vmatpush1.msra.mxu0 %v4276
          %4310 = vmatprep.subr.mxu0 0.0
          %4311 = vmatpush1.msra.mxu0 %v4277
          %4312 = vmatprep.subr.mxu0 0.0
          %4313 = vmatpush1.msra.mxu0 %v4278
          %4314 = vmatprep.subr.mxu0 0.0
          %4315 = vmatpush1.msra.mxu0 %v4279
          %4316 = vmatprep.subr.mxu0 0.0
          %4317 = vmatpush1.msra.mxu0 0.0
          %4318 = vmatprep.subr.mxu0 0.0
          %4319 = vmatpush1.msra.mxu0 0.0
          %4320 = vmatprep.subr.mxu0 0.0
          %4321 = vmatpush1.msra.mxu0 0.0
          %4322 = vmatprep.subr.mxu0 0.0
          %4323 = vmatpush1.msra.mxu0 0.0
          %4324 = vmatprep.subr.mxu0 0.0
          %4325 = vmatpush1.msra.mxu0 0.0
          %4326 = vmatprep.subr.mxu0 0.0
          %4327 = vmatpush1.msra.mxu0 0.0
          %4328 = vmatprep.subr.mxu0 0.0
          %4329 = vmatpush1.msra.mxu0 0.0
          %4330 = vmatprep.subr.mxu0 0.0
          %4331 = vmatpush1.msra.mxu0 0.0
          %4332 = vmatprep.subr.mxu0 0.0
          %4333 = vmatpush1.msra.mxu0 0.0
          %4334 = vmatprep.subr.mxu0 0.0
          %4335 = vmatpush1.msra.mxu0 0.0
          %4336 = vmatprep.subr.mxu0 0.0
          %4337 = vmatpush1.msra.mxu0 0.0
          %4338 = vmatprep.subr.mxu0 0.0
          %4339 = vmatpush1.msra.mxu0 0.0
          %4340 = vmatprep.subr.mxu0 0.0
          %4341 = vmatpush1.msra.mxu0 0.0
          %4342 = vmatprep.subr.mxu0 0.0
          %4343 = vmatpush1.msra.mxu0 0.0
          %4344 = vmatprep.subr.mxu0 0.0
          %4345 = vmatpush1.msra.mxu0 0.0
          %4346 = vmatprep.subr.mxu0 0.0
          %4347 = vmatpush1.msra.mxu0 0.0
          %4348 = vmatprep.mubr.f32.mxu0 0.0
          %4349 = vmatmul.mubr.f32.gmra.mrb[0].mxu0 %v4262
          %v4350 = vpop.f32.mrb[0].mxu0
          %v4351 = vadd.f32 %v4283, %v4350
          %v4352 = vpop.f32.mrb[0].mxu0
          %4353 = vmatprep.mubr.f32.mxu0 0.0
          %4354 = vmatmul.mubr.f32.gmra.mrb[0].mxu0 %v4263
          %v4355 = vpop.f32.mrb[0].mxu0
          %v4356 = vadd.f32 %v4283, %v4355
          %v4357 = vpop.f32.mrb[0].mxu0
          %4358 = vdwg.mxu0
          %v4359 = vadd.f32 %v3848, %v4351
          %v4360 = vadd.f32 %v3849, %v4356
          %4361 = vst.msk [vmem:[#allocation9] sm:$0xff] %vm405, %v4359
          %4362 = vst.msk [vmem:[#allocation9 + $0x8] sm:$0xff] %vm405, %v4360
        $region52: #{tpu_custom_call.1} parent=39 // pred_fallthru
          _
        // Predicated region
        $region53: #{tpu_custom_call.1} parent=39 // pred_check
          %p4363 = pneg %p151
        $region54: #{tpu_custom_call.1} parent=39 // pred_check_branch
          %4365 = sbr.rel (%p4363) target = $region56
        $region55: #{tpu_custom_call.1} parent=39 // pred_region
          %s4367 = ssub.s32 256, 256
          %4368 = vsyncadd [#allocation8], %s4367
          %s4369 = sshll.u32 [#allocation9], 4
          %s4370 = int_to_ptr.vmem [resolvable:$true] %s4369
          %4375 = dma.vmem_to_hbm [thread:$0]  %s4370, 256, %s5, [#allocation8], 128, 128, 8
        $region56: #{tpu_custom_call.1} parent=39 // pred_fallthru
          _
        // Predicated region
        $region57: #{tpu_custom_call.1} parent=39 // pred_check
          %p4376 = pneg %p151
        $region58: #{tpu_custom_call.1} parent=39 // pred_check_branch
          %4378 = sbr.rel (%p4376) target = $region60
        $region59: #{tpu_custom_call.1} parent=39 // pred_region
          %4379 = dma.done [#allocation8], 256
        $region60: #{tpu_custom_call.1} parent=39 // pred_fallthru
          _
      $region40: #{tpu_custom_call.1} parent=5 // pred_fallthru
        _
      %p4380 = scmp.le.s32.totalorder 2, %s13
      // Predicated region
      $region61: #{tpu_custom_call.1} parent=5 // pred_check
        %p4381 = pneg %p4380
      $region62: #{tpu_custom_call.1} parent=5 // pred_check_branch
        %4383 = sbr.rel (%p4381) target = $region64
      $region63: #{tpu_custom_call.1} parent=5 // pred_region
        %s4384 = ssub.s32 %s13, 2
      $region64: #{tpu_custom_call.1} parent=5 // pred_fallthru
        _
    $region6: #{tpu_custom_call.1} parent=1 // loop_footer
      %s17 = sadd.s32 1, %s13
    $region7: #{tpu_custom_call.1} parent=1 // loop_footer_branch
      %12 = sbr.rel target = $region3
    $region8: #{tpu_custom_call.1} parent=1 // loop_exit
      _
    %4385 = vsyncpa [#allocation7], 1
    %s4386 = scalar_lea.sflag [#allocation7], 1
    %4387 = vsyncpa %s4386, 1
    %4388 = vsyncpa [#allocation8], 1
    %s4389 = scalar_lea.sflag [#allocation8], 1
    %4390 = vsyncpa %s4389, 1

</llo_original>
